<compile_context>
chip_gen: v7x
topology: tpu7x:2x2x1
jax: 0.10.0
libtpu: 0.0.40
codegen_flags: <defaults>
</compile_context>

<pallas_src>
import functools
import math

import jax
import jax.numpy as jnp
from jax.experimental import pallas as pl
from jax.experimental.pallas import tpu as pltpu

# ----------------------------- small synthetic config ------------------------
B = 2                     # batch
L = 400                   # raw audio samples
CONV_LAYERS = [(32, 10, 5), (32, 3, 2)]   # (out_channels, kernel, stride)
CONV_DIM = 32
HIDDEN = 32
N_HEADS = 4
HEAD_DIM = HIDDEN // N_HEADS
FFN = 64
N_LAYERS = 2
POS_K = 3                 # positional conv kernel (odd -> no same-pad trim)
POS_GROUPS = 2
VOCAB = 32
LN_EPS = 1e-5


# ----------------------------- in-kernel helpers ------------------------------
def _gelu(x):
    return jax.nn.gelu(x, approximate=True)


def _bdot(a, b):
    """(M,K)@(K,N): bf16 MXU inputs, f32 accumulation."""
    return jnp.dot(a.astype(jnp.bfloat16), b.astype(jnp.bfloat16),
                   preferred_element_type=jnp.float32)


def _bdot_nt(a, b):
    """(M,K)·(N,K) -> (M,N), contracting last dims (q @ k^T without transpose)."""
    return jax.lax.dot_general(
        a.astype(jnp.bfloat16), b.astype(jnp.bfloat16),
        (((1,), (1,)), ((), ())), preferred_element_type=jnp.float32)


def _ln(x, g, b):
    mu = jnp.mean(x, axis=-1, keepdims=True)
    var = jnp.mean(jnp.square(x - mu), axis=-1, keepdims=True)
    return (x - mu) * jax.lax.rsqrt(var + LN_EPS) * g + b


# ----------------------------- Pallas kernels --------------------------------
def _frontend_kernel(p_ref, w_ref, g_ref, b_ref, o_ref):
    """conv0 (as im2col matmul) + GroupNorm(num_groups==C) + GELU, one batch elem."""
    p = p_ref[0].astype(jnp.float32)                      # (T0, k0)
    y = _bdot(p, w_ref[...])                              # (T0, C)
    mu = jnp.mean(y, axis=0, keepdims=True)               # norm over time per channel
    var = jnp.mean(jnp.square(y - mu), axis=0, keepdims=True)
    y = (y - mu) * jax.lax.rsqrt(var + LN_EPS)
    y = y * g_ref[...] + b_ref[...]
    o_ref[0] = _gelu(y).astype(o_ref.dtype)


def _conv1_fp_kernel(p_ref, w1_ref, lng_ref, lnb_ref, fpw_ref, fpb_ref, o_ref):
    """conv1 matmul + GELU + feature-projection LayerNorm + Linear, fused."""
    h = _gelu(_bdot(p_ref[0].astype(jnp.float32), w1_ref[...]))
    h = _ln(h, lng_ref[...], lnb_ref[...])
    h = _bdot(h, fpw_ref[...]) + fpb_ref[...]
    o_ref[0] = h.astype(o_ref.dtype)


def _posconv_ln_kernel(h_ref, p_ref, pw_ref, pb_ref, lng_ref, lnb_ref, o_ref):
    """grouped positional conv (block-diag weight) + GELU + residual + LayerNorm."""
    h = h_ref[0].astype(jnp.float32)
    pos = _gelu(_bdot(p_ref[0].astype(jnp.float32), pw_ref[...]) + pb_ref[...])
    o_ref[0] = _ln(h + pos, lng_ref[...], lnb_ref[...]).astype(o_ref.dtype)


def _encoder_layer_kernel(h_ref, wqkv_ref, bqkv_ref, wo_ref, bo_ref,
                          ln1g_ref, ln1b_ref, ff1w_ref, ff1b_ref,
                          ff2w_ref, ff2b_ref, ln2g_ref, ln2b_ref, o_ref,
                          *, n_heads, head_dim, scale):
    """One full post-LN transformer encoder layer, fully fused, one batch elem."""
    x = h_ref[0].astype(jnp.float32)                      # (T, H)
    hd = head_dim
    hidden = n_heads * hd

    # fused QKV projection: one (T,H) @ (H,3H) matmul
    qkv = _bdot(x, wqkv_ref[...]) + bqkv_ref[...]         # (T, 3H)

    # all heads inside this kernel invocation; Wo applied as per-head accumulate
    attn = jnp.zeros_like(x)
    for hh in range(n_heads):
        q_h = qkv[:, hh * hd:(hh + 1) * hd]
        k_h = qkv[:, hidden + hh * hd:hidden + (hh + 1) * hd]
        v_h = qkv[:, 2 * hidden + hh * hd:2 * hidden + (hh + 1) * hd]
        s = _bdot_nt(q_h, k_h) * scale                    # (T, T)
        m = jnp.max(s, axis=-1, keepdims=True)
        pexp = jnp.exp(s - m)
        denom = jnp.sum(pexp, axis=-1, keepdims=True)
        pexp = pexp * pl.reciprocal(denom, approx=True)   # EUP divide
        o_h = _bdot(pexp, v_h)                            # (T, hd)
        attn = attn + _bdot(o_h, wo_ref[hh * hd:(hh + 1) * hd, :])
    attn = attn + bo_ref[...]

    x = _ln(x + attn, ln1g_ref[...], ln1b_ref[...])
    ff = _gelu(_bdot(x, ff1w_ref[...]) + ff1b_ref[...])
    ff = _bdot(ff, ff2w_ref[...]) + ff2b_ref[...]
    x = _ln(x + ff, ln2g_ref[...], ln2b_ref[...])
    o_ref[0] = x.astype(o_ref.dtype)


def _lm_head_kernel(h_ref, w_ref, b_ref, o_ref):
    y = _bdot(h_ref[0].astype(jnp.float32), w_ref[...]) + b_ref[...]
    o_ref[0] = y.astype(o_ref.dtype)


# ----------------------------- spec helpers -----------------------------------
def _batch_spec(t, c):
    return pl.BlockSpec((1, t, c), lambda b: (b, 0, 0))


def _full_spec(r, c):
    return pl.BlockSpec((r, c), lambda b: (0, 0))


_PARALLEL = pltpu.CompilerParams(dimension_semantics=("parallel",))


# ----------------------------- full forward (ASRModel.forward) ----------------
def wav2vec2_ctc_logits(x, p):
    """x: (B, L) raw waveform -> logits (B, T, VOCAB)."""
    Bx, Lx = x.shape
    (c0, k0, s0), (c1, k1, s1) = CONV_LAYERS
    t0 = (Lx - k0) // s0 + 1
    t1 = (t0 - k1) // s1 + 1

    # --- conv0 im2col (Cin=1, no bias) -> GroupNorm -> GELU (fused kernel) ---
    idx0 = jnp.arange(t0)[:, None] * s0 + jnp.arange(k0)[None, :]
    patches0 = x.astype(jnp.float32)[:, idx0]                         # (B, t0, k0)
    y0 = pl.pallas_call(
        _frontend_kernel,
        out_shape=jax.ShapeDtypeStruct((Bx, t0, c0), jnp.float32),
        grid=(Bx,),
        in_specs=[_batch_spec(t0, k0),
                  _full_spec(k0, c0),
                  _full_spec(1, c0), _full_spec(1, c0)],
        out_specs=_batch_spec(t0, c0),
        compiler_params=_PARALLEL,
    )(patches0, p["conv0_w"].reshape(k0, c0),
      p["gn_g"].reshape(1, c0), p["gn_b"].reshape(1, c0))

    # --- conv1 (no bias) + GELU + feature-projection LN + Linear (fused) ---
    idx1 = jnp.arange(t1)[:, None] * s1 + jnp.arange(k1)[None, :]
    patches1 = y0[:, idx1, :].reshape(Bx, t1, k1 * c0)                # (B, t1, 96)
    h = pl.pallas_call(
        _conv1_fp_kernel,
        out_shape=jax.ShapeDtypeStruct((Bx, t1, HIDDEN), jnp.float32),
        grid=(Bx,),
        in_specs=[_batch_spec(t1, k1 * c0),
                  _full_spec(k1 * c0, c1),
                  _full_spec(1, c1), _full_spec(1, c1),
                  _full_spec(c1, HIDDEN), _full_spec(1, HIDDEN)],
        out_specs=_batch_spec(t1, HIDDEN),
        compiler_params=_PARALLEL,
    )(patches1, p["conv1_w"].reshape(k1 * c0, c1),
      p["fp_ln_g"].reshape(1, c1), p["fp_ln_b"].reshape(1, c1),
      p["fp_w"], p["fp_b"].reshape(1, HIDDEN))

    # --- positional grouped conv (+GELU) + residual + LayerNorm (fused) ---
    cin_g = HIDDEN // POS_GROUPS
    cout_g = HIDDEN // POS_GROUPS
    wbd = jnp.zeros((POS_K, HIDDEN, HIDDEN), jnp.float32)
    for g in range(POS_GROUPS):                                        # block-diag weight
        wbd = wbd.at[:, g * cin_g:(g + 1) * cin_g,
                     g * cout_g:(g + 1) * cout_g].set(
            p["pos_w"][:, :, g * cout_g:(g + 1) * cout_g])
    wbd = wbd.reshape(POS_K * HIDDEN, HIDDEN)

    pad = POS_K // 2
    hp = jnp.pad(h, ((0, 0), (pad, pad), (0, 0)))
    idxp = jnp.arange(t1)[:, None] + jnp.arange(POS_K)[None, :]
    pos_patches = hp[:, idxp, :].reshape(Bx, t1, POS_K * HIDDEN)       # (B, t1, 96)

    h2 = pl.pallas_call(
        _posconv_ln_kernel,
        out_shape=jax.ShapeDtypeStruct((Bx, t1, HIDDEN), jnp.float32),
        grid=(Bx,),
        in_specs=[_batch_spec(t1, HIDDEN),
                  _batch_spec(t1, POS_K * HIDDEN),
                  _full_spec(POS_K * HIDDEN, HIDDEN),
                  _full_spec(1, HIDDEN),
                  _full_spec(1, HIDDEN), _full_spec(1, HIDDEN)],
        out_specs=_batch_spec(t1, HIDDEN),
        compiler_params=_PARALLEL,
    )(h, pos_patches, wbd, p["pos_b"].reshape(1, HIDDEN),
      p["enc_ln_g"].reshape(1, HIDDEN), p["enc_ln_b"].reshape(1, HIDDEN))

    # --- transformer encoder layers: one fused pallas_call per layer ---
    enc_kernel = functools.partial(
        _encoder_layer_kernel, n_heads=N_HEADS, head_dim=HEAD_DIM,
        scale=1.0 / math.sqrt(HEAD_DIM))
    for i in range(N_LAYERS):
        lp = p["layers"][i]
        wqkv = jnp.concatenate([lp["wq"], lp["wk"], lp["wv"]], axis=1)     # (H, 3H)
        bqkv = jnp.concatenate([lp["bq"], lp["bk"], lp["bv"]]).reshape(1, 3 * HIDDEN)
        h2 = pl.pallas_call(
            enc_kernel,
            out_shape=jax.ShapeDtypeStruct((Bx, t1, HIDDEN), jnp.float32),
            grid=(Bx,),
            in_specs=[_batch_spec(t1, HIDDEN),
                      _full_spec(HIDDEN, 3 * HIDDEN), _full_spec(1, 3 * HIDDEN),
                      _full_spec(HIDDEN, HIDDEN), _full_spec(1, HIDDEN),
                      _full_spec(1, HIDDEN), _full_spec(1, HIDDEN),
                      _full_spec(HIDDEN, FFN), _full_spec(1, FFN),
                      _full_spec(FFN, HIDDEN), _full_spec(1, HIDDEN),
                      _full_spec(1, HIDDEN), _full_spec(1, HIDDEN)],
            out_specs=_batch_spec(t1, HIDDEN),
            compiler_params=_PARALLEL,
        )(h2, wqkv, bqkv, lp["wo"], lp["bo"].reshape(1, HIDDEN),
          lp["ln1_g"].reshape(1, HIDDEN), lp["ln1_b"].reshape(1, HIDDEN),
          lp["ff1_w"], lp["ff1_b"].reshape(1, FFN),
          lp["ff2_w"], lp["ff2_b"].reshape(1, HIDDEN),
          lp["ln2_g"].reshape(1, HIDDEN), lp["ln2_b"].reshape(1, HIDDEN))

    # --- CTC lm head ---
    logits = pl.pallas_call(
        _lm_head_kernel,
        out_shape=jax.ShapeDtypeStruct((Bx, t1, VOCAB), jnp.float32),
        grid=(Bx,),
        in_specs=[_batch_spec(t1, HIDDEN),
                  _full_spec(HIDDEN, VOCAB), _full_spec(1, VOCAB)],
        out_specs=_batch_spec(t1, VOCAB),
        compiler_params=_PARALLEL,
    )(h2, p["lm_w"], p["lm_b"].reshape(1, VOCAB))
    return logits


# ----------------------------- deterministic parameter init ------------------
def init_params(key):
    keys = iter(jax.random.split(key, 64))

    def w(shape, scale=0.02):
        return scale * jax.random.normal(next(keys), shape, jnp.float32)

    zeros = lambda s: jnp.zeros(s, jnp.float32)
    ones = lambda s: jnp.ones(s, jnp.float32)

    p = {
        "conv0_w": w((CONV_LAYERS[0][1], 1, CONV_DIM)),
        "gn_g": ones((CONV_DIM,)), "gn_b": zeros((CONV_DIM,)),
        "conv1_w": w((CONV_LAYERS[1][1], CONV_DIM, CONV_DIM)),
        "fp_ln_g": ones((CONV_DIM,)), "fp_ln_b": zeros((CONV_DIM,)),
        "fp_w": w((CONV_DIM, HIDDEN)), "fp_b": zeros((HIDDEN,)),
        "pos_w": w((POS_K, HIDDEN // POS_GROUPS, HIDDEN)),
        "pos_b": zeros((HIDDEN,)),
        "enc_ln_g": ones((HIDDEN,)), "enc_ln_b": zeros((HIDDEN,)),
        "lm_w": w((HIDDEN, VOCAB)), "lm_b": zeros((VOCAB,)),
        "layers": [],
    }
    for _ in range(N_LAYERS):
        p["layers"].append({
            "wq": w((HIDDEN, HIDDEN)), "bq": zeros((HIDDEN,)),
            "wk": w((HIDDEN, HIDDEN)), "bk": zeros((HIDDEN,)),
            "wv": w((HIDDEN, HIDDEN)), "bv": zeros((HIDDEN,)),
            "wo": w((HIDDEN, HIDDEN)), "bo": zeros((HIDDEN,)),
            "ln1_g": ones((HIDDEN,)), "ln1_b": zeros((HIDDEN,)),
            "ff1_w": w((HIDDEN, FFN)), "ff1_b": zeros((FFN,)),
            "ff2_w": w((FFN, HIDDEN)), "ff2_b": zeros((HIDDEN,)),
            "ln2_g": ones((HIDDEN,)), "ln2_b": zeros((HIDDEN,)),
        })
    return p


if __name__ == "__main__":
    key = jax.random.PRNGKey(0)
    pkey, xkey = jax.random.split(key)
    params = init_params(pkey)
    x = jax.random.normal(xkey, (B, L), jnp.float32)      # raw waveform batch

    logits = jax.jit(wav2vec2_ctc_logits)(x, params)
    logits = jax.block_until_ready(logits)

    # expected time dim after the conv feature extractor
    t0 = (L - CONV_LAYERS[0][1]) // CONV_LAYERS[0][2] + 1
    t1 = (t0 - CONV_LAYERS[1][1]) // CONV_LAYERS[1][2] + 1
    assert logits.shape == (B, t1, VOCAB), logits.shape
    assert bool(jnp.all(jnp.isfinite(logits)))
    print("KERNEL_OK")
</pallas_src>

<mosaic_0001>
module attributes {stable_mosaic.version = 11 : i64} {
  func.func @_frontend_kernel(%arg0: i32, %arg1: memref<1x79x10xf32, #tpu.memory_space<vmem>>, %arg2: memref<10x32xf32, #tpu.memory_space<vmem>>, %arg3: memref<1x32xf32, #tpu.memory_space<vmem>>, %arg4: memref<1x32xf32, #tpu.memory_space<vmem>>, %arg5: memref<1x79x32xf32, #tpu.memory_space<vmem>>) attributes {dimension_semantics = [#tpu.dimension_semantics<parallel>], iteration_bounds = array<i64: 2>, scalar_prefetch = 0 : i64, scratch_operands = 0 : i64, tpu.core_type = #tpu.core_type<tc>, window_params = [{transform_indices = @transform_0, window_bounds = array<i64: 1, 79, 10>}, {pipeline_mode = #tpu.pipeline_mode<synchronous>, transform_indices = @transform_1, window_bounds = array<i64: 10, 32>}, {pipeline_mode = #tpu.pipeline_mode<synchronous>, transform_indices = @transform_2, window_bounds = array<i64: 1, 32>}, {pipeline_mode = #tpu.pipeline_mode<synchronous>, transform_indices = @transform_3, window_bounds = array<i64: 1, 32>}, {transform_indices = @transform_4, window_bounds = array<i64: 1, 79, 32>}]} {
    %c0 = arith.constant 0 : index
    %c0_0 = arith.constant 0 : index
    %c0_1 = arith.constant 0 : index
    %0 = vector.load %arg1[%c0, %c0_0, %c0_1] : memref<1x79x10xf32, #tpu.memory_space<vmem>>, vector<1x79x10xf32>
    %1 = vector.shape_cast %0 : vector<1x79x10xf32> to vector<79x10xf32>
    %c0_2 = arith.constant 0 : index
    %c0_3 = arith.constant 0 : index
    %2 = vector.load %arg2[%c0_2, %c0_3] : memref<10x32xf32, #tpu.memory_space<vmem>>, vector<10x32xf32>
    %3 = arith.truncf %1 : vector<79x10xf32> to vector<79x10xbf16>
    %4 = arith.truncf %2 : vector<10x32xf32> to vector<10x32xbf16>
    %cst = arith.constant dense<0.000000e+00> : vector<79x32xf32>
    %5 = tpu.matmul %3, %4, %cst {dimension_numbers = #tpu.dot_dimension_numbers<[1], [0], [0], [1], [0, 0, 1, 1], [], []>} : vector<79x10xbf16>, vector<10x32xbf16>, vector<79x32xf32> -> vector<79x32xf32>
    %cst_4 = arith.constant dense<0.000000e+00> : vector<32xf32>
    %6 = vector.multi_reduction <add>, %5, %cst_4 [0] : vector<79x32xf32> to vector<32xf32>
    %7 = vector.shape_cast %6 : vector<32xf32> to vector<1x32xf32>
    %cst_5 = arith.constant 7.900000e+01 : f32
    %8 = vector.broadcast %cst_5 : f32 to vector<1x32xf32>
    %9 = arith.divf %7, %8 : vector<1x32xf32>
    %10 = vector.broadcast %9 : vector<1x32xf32> to vector<79x32xf32>
    %11 = arith.subf %5, %10 : vector<79x32xf32>
    %12 = arith.mulf %11, %11 : vector<79x32xf32>
    %cst_6 = arith.constant dense<0.000000e+00> : vector<32xf32>
    %13 = vector.multi_reduction <add>, %12, %cst_6 [0] : vector<79x32xf32> to vector<32xf32>
    %14 = vector.shape_cast %13 : vector<32xf32> to vector<1x32xf32>
    %cst_7 = arith.constant 7.900000e+01 : f32
    %15 = vector.broadcast %cst_7 : f32 to vector<1x32xf32>
    %16 = arith.divf %14, %15 : vector<1x32xf32>
    %17 = vector.broadcast %9 : vector<1x32xf32> to vector<79x32xf32>
    %18 = arith.subf %5, %17 : vector<79x32xf32>
    %cst_8 = arith.constant 9.99999974E-6 : f32
    %19 = vector.broadcast %cst_8 : f32 to vector<1x32xf32>
    %20 = arith.addf %16, %19 : vector<1x32xf32>
    %21 = math.rsqrt %20 : vector<1x32xf32>
    %22 = vector.broadcast %21 : vector<1x32xf32> to vector<79x32xf32>
    %23 = arith.mulf %18, %22 : vector<79x32xf32>
    %c0_9 = arith.constant 0 : index
    %c0_10 = arith.constant 0 : index
    %24 = vector.load %arg3[%c0_9, %c0_10] : memref<1x32xf32, #tpu.memory_space<vmem>>, vector<1x32xf32>
    %25 = vector.broadcast %24 : vector<1x32xf32> to vector<79x32xf32>
    %26 = arith.mulf %23, %25 : vector<79x32xf32>
    %c0_11 = arith.constant 0 : index
    %c0_12 = arith.constant 0 : index
    %27 = vector.load %arg4[%c0_11, %c0_12] : memref<1x32xf32, #tpu.memory_space<vmem>>, vector<1x32xf32>
    %28 = vector.broadcast %27 : vector<1x32xf32> to vector<79x32xf32>
    %29 = arith.addf %26, %28 : vector<79x32xf32>
    %30 = arith.mulf %29, %29 : vector<79x32xf32>
    %31 = arith.mulf %29, %30 : vector<79x32xf32>
    %cst_13 = arith.constant 4.471500e-02 : f32
    %32 = vector.broadcast %cst_13 : f32 to vector<79x32xf32>
    %33 = arith.mulf %32, %31 : vector<79x32xf32>
    %34 = arith.addf %29, %33 : vector<79x32xf32>
    %cst_14 = arith.constant 0.797884583 : f32
    %35 = vector.broadcast %cst_14 : f32 to vector<79x32xf32>
    %36 = arith.mulf %35, %34 : vector<79x32xf32>
    %37 = math.tanh %36 : vector<79x32xf32>
    %cst_15 = arith.constant 1.000000e+00 : f32
    %38 = vector.broadcast %cst_15 : f32 to vector<79x32xf32>
    %39 = arith.addf %38, %37 : vector<79x32xf32>
    %cst_16 = arith.constant 5.000000e-01 : f32
    %40 = vector.broadcast %cst_16 : f32 to vector<79x32xf32>
    %41 = arith.mulf %40, %39 : vector<79x32xf32>
    %42 = arith.mulf %29, %41 : vector<79x32xf32>
    %c0_17 = arith.constant 0 : index
    %c0_18 = arith.constant 0 : index
    %c0_19 = arith.constant 0 : index
    %43 = vector.load %arg5[%c0_17, %c0_18, %c0_19] : memref<1x79x32xf32, #tpu.memory_space<vmem>>, vector<1x79x32xf32>
    %44 = vector.shape_cast %43 : vector<1x79x32xf32> to vector<79x32xf32>
    %45 = vector.shape_cast %42 : vector<79x32xf32> to vector<1x79x32xf32>
    tpu.vector_store %arg5[%c0_17, %c0_18, %c0_19], %45 {strides = array<i32>} : memref<1x79x32xf32, #tpu.memory_space<vmem>>, vector<1x79x32xf32>,
    return
  }
  func.func @transform_0(%arg0: i32) -> (i32, i32, i32) {
    %c0_i32 = arith.constant 0 : i32
    %c0_i32_0 = arith.constant 0 : i32
    %c0_i32_1 = arith.constant 0 : i32
    return %arg0, %c0_i32, %c0_i32_0 : i32, i32, i32
  }
  func.func @transform_1(%arg0: i32) -> (i32, i32) {
    %c0_i32 = arith.constant 0 : i32
    %c0_i32_0 = arith.constant 0 : i32
    %c0_i32_1 = arith.constant 0 : i32
    return %c0_i32, %c0_i32_0 : i32, i32
  }
  func.func @transform_2(%arg0: i32) -> (i32, i32) {
    %c0_i32 = arith.constant 0 : i32
    %c0_i32_0 = arith.constant 0 : i32
    %c0_i32_1 = arith.constant 0 : i32
    return %c0_i32, %c0_i32_0 : i32, i32
  }
  func.func @transform_3(%arg0: i32) -> (i32, i32) {
    %c0_i32 = arith.constant 0 : i32
    %c0_i32_0 = arith.constant 0 : i32
    %c0_i32_1 = arith.constant 0 : i32
    return %c0_i32, %c0_i32_0 : i32, i32
  }
  func.func @transform_4(%arg0: i32) -> (i32, i32, i32) {
    %c0_i32 = arith.constant 0 : i32
    %c0_i32_0 = arith.constant 0 : i32
    %c0_i32_1 = arith.constant 0 : i32
    return %arg0, %c0_i32, %c0_i32_0 : i32, i32, i32
  }
}

module attributes {stable_mosaic.version = 11 : i64} {
  func.func @_conv1_fp_kernel(%arg0: i32, %arg1: memref<1x39x96xf32, #tpu.memory_space<vmem>>, %arg2: memref<96x32xf32, #tpu.memory_space<vmem>>, %arg3: memref<1x32xf32, #tpu.memory_space<vmem>>, %arg4: memref<1x32xf32, #tpu.memory_space<vmem>>, %arg5: memref<32x32xf32, #tpu.memory_space<vmem>>, %arg6: memref<1x32xf32, #tpu.memory_space<vmem>>, %arg7: memref<1x39x32xf32, #tpu.memory_space<vmem>>) attributes {dimension_semantics = [#tpu.dimension_semantics<parallel>], iteration_bounds = array<i64: 2>, scalar_prefetch = 0 : i64, scratch_operands = 0 : i64, tpu.core_type = #tpu.core_type<tc>, window_params = [{transform_indices = @transform_0, window_bounds = array<i64: 1, 39, 96>}, {pipeline_mode = #tpu.pipeline_mode<synchronous>, transform_indices = @transform_1, window_bounds = array<i64: 96, 32>}, {pipeline_mode = #tpu.pipeline_mode<synchronous>, transform_indices = @transform_2, window_bounds = array<i64: 1, 32>}, {pipeline_mode = #tpu.pipeline_mode<synchronous>, transform_indices = @transform_3, window_bounds = array<i64: 1, 32>}, {pipeline_mode = #tpu.pipeline_mode<synchronous>, transform_indices = @transform_4, window_bounds = array<i64: 32, 32>}, {pipeline_mode = #tpu.pipeline_mode<synchronous>, transform_indices = @transform_5, window_bounds = array<i64: 1, 32>}, {transform_indices = @transform_6, window_bounds = array<i64: 1, 39, 32>}]} {
    %c0 = arith.constant 0 : index
    %c0_0 = arith.constant 0 : index
    %c0_1 = arith.constant 0 : index
    %0 = vector.load %arg1[%c0, %c0_0, %c0_1] : memref<1x39x96xf32, #tpu.memory_space<vmem>>, vector<1x39x96xf32>
    %1 = vector.shape_cast %0 : vector<1x39x96xf32> to vector<39x96xf32>
    %c0_2 = arith.constant 0 : index
    %c0_3 = arith.constant 0 : index
    %2 = vector.load %arg2[%c0_2, %c0_3] : memref<96x32xf32, #tpu.memory_space<vmem>>, vector<96x32xf32>
    %3 = arith.truncf %1 : vector<39x96xf32> to vector<39x96xbf16>
    %4 = arith.truncf %2 : vector<96x32xf32> to vector<96x32xbf16>
    %cst = arith.constant dense<0.000000e+00> : vector<39x32xf32>
    %5 = tpu.matmul %3, %4, %cst {dimension_numbers = #tpu.dot_dimension_numbers<[1], [0], [0], [1], [0, 0, 1, 1], [], []>} : vector<39x96xbf16>, vector<96x32xbf16>, vector<39x32xf32> -> vector<39x32xf32>
    %6 = arith.mulf %5, %5 : vector<39x32xf32>
    %7 = arith.mulf %5, %6 : vector<39x32xf32>
    %cst_4 = arith.constant 4.471500e-02 : f32
    %8 = vector.broadcast %cst_4 : f32 to vector<39x32xf32>
    %9 = arith.mulf %8, %7 : vector<39x32xf32>
    %10 = arith.addf %5, %9 : vector<39x32xf32>
    %cst_5 = arith.constant 0.797884583 : f32
    %11 = vector.broadcast %cst_5 : f32 to vector<39x32xf32>
    %12 = arith.mulf %11, %10 : vector<39x32xf32>
    %13 = math.tanh %12 : vector<39x32xf32>
    %cst_6 = arith.constant 1.000000e+00 : f32
    %14 = vector.broadcast %cst_6 : f32 to vector<39x32xf32>
    %15 = arith.addf %14, %13 : vector<39x32xf32>
    %cst_7 = arith.constant 5.000000e-01 : f32
    %16 = vector.broadcast %cst_7 : f32 to vector<39x32xf32>
    %17 = arith.mulf %16, %15 : vector<39x32xf32>
    %18 = arith.mulf %5, %17 : vector<39x32xf32>
    %c0_8 = arith.constant 0 : index
    %c0_9 = arith.constant 0 : index
    %19 = vector.load %arg3[%c0_8, %c0_9] : memref<1x32xf32, #tpu.memory_space<vmem>>, vector<1x32xf32>
    %c0_10 = arith.constant 0 : index
    %c0_11 = arith.constant 0 : index
    %20 = vector.load %arg4[%c0_10, %c0_11] : memref<1x32xf32, #tpu.memory_space<vmem>>, vector<1x32xf32>
    %cst_12 = arith.constant dense<0.000000e+00> : vector<39xf32>
    %21 = vector.multi_reduction <add>, %18, %cst_12 [1] : vector<39x32xf32> to vector<39xf32>
    %22 = vector.shape_cast %21 : vector<39xf32> to vector<39x1xf32>
    %cst_13 = arith.constant 3.200000e+01 : f32
    %23 = vector.broadcast %cst_13 : f32 to vector<39x1xf32>
    %24 = arith.divf %22, %23 : vector<39x1xf32>
    %25 = vector.broadcast %24 : vector<39x1xf32> to vector<39x32xf32>
    %26 = arith.subf %18, %25 : vector<39x32xf32>
    %27 = arith.mulf %26, %26 : vector<39x32xf32>
    %cst_14 = arith.constant dense<0.000000e+00> : vector<39xf32>
    %28 = vector.multi_reduction <add>, %27, %cst_14 [1] : vector<39x32xf32> to vector<39xf32>
    %29 = vector.shape_cast %28 : vector<39xf32> to vector<39x1xf32>
    %cst_15 = arith.constant 3.200000e+01 : f32
    %30 = vector.broadcast %cst_15 : f32 to vector<39x1xf32>
    %31 = arith.divf %29, %30 : vector<39x1xf32>
    %32 = vector.broadcast %24 : vector<39x1xf32> to vector<39x32xf32>
    %33 = arith.subf %18, %32 : vector<39x32xf32>
    %cst_16 = arith.constant 9.99999974E-6 : f32
    %34 = vector.broadcast %cst_16 : f32 to vector<39x1xf32>
    %35 = arith.addf %31, %34 : vector<39x1xf32>
    %36 = math.rsqrt %35 : vector<39x1xf32>
    %37 = vector.broadcast %36 : vector<39x1xf32> to vector<39x32xf32>
    %38 = arith.mulf %33, %37 : vector<39x32xf32>
    %39 = vector.broadcast %19 : vector<1x32xf32> to vector<39x32xf32>
    %40 = arith.mulf %38, %39 : vector<39x32xf32>
    %41 = vector.broadcast %20 : vector<1x32xf32> to vector<39x32xf32>
    %42 = arith.addf %40, %41 : vector<39x32xf32>
    %c0_17 = arith.constant 0 : index
    %c0_18 = arith.constant 0 : index
    %43 = vector.load %arg5[%c0_17, %c0_18] : memref<32x32xf32, #tpu.memory_space<vmem>>, vector<32x32xf32>
    %44 = arith.truncf %42 : vector<39x32xf32> to vector<39x32xbf16>
    %45 = arith.truncf %43 : vector<32x32xf32> to vector<32x32xbf16>
    %cst_19 = arith.constant dense<0.000000e+00> : vector<39x32xf32>
    %46 = tpu.matmul %44, %45, %cst_19 {dimension_numbers = #tpu.dot_dimension_numbers<[1], [0], [0], [1], [0, 0, 1, 1], [], []>} : vector<39x32xbf16>, vector<32x32xbf16>, vector<39x32xf32> -> vector<39x32xf32>
    %c0_20 = arith.constant 0 : index
    %c0_21 = arith.constant 0 : index
    %47 = vector.load %arg6[%c0_20, %c0_21] : memref<1x32xf32, #tpu.memory_space<vmem>>, vector<1x32xf32>
    %48 = vector.broadcast %47 : vector<1x32xf32> to vector<39x32xf32>
    %49 = arith.addf %46, %48 : vector<39x32xf32>
    %c0_22 = arith.constant 0 : index
    %c0_23 = arith.constant 0 : index
    %c0_24 = arith.constant 0 : index
    %50 = vector.load %arg7[%c0_22, %c0_23, %c0_24] : memref<1x39x32xf32, #tpu.memory_space<vmem>>, vector<1x39x32xf32>
    %51 = vector.shape_cast %50 : vector<1x39x32xf32> to vector<39x32xf32>
    %52 = vector.shape_cast %49 : vector<39x32xf32> to vector<1x39x32xf32>
    tpu.vector_store %arg7[%c0_22, %c0_23, %c0_24], %52 {strides = array<i32>} : memref<1x39x32xf32, #tpu.memory_space<vmem>>, vector<1x39x32xf32>,
    return
  }
  func.func @transform_0(%arg0: i32) -> (i32, i32, i32) {
    %c0_i32 = arith.constant 0 : i32
    %c0_i32_0 = arith.constant 0 : i32
    %c0_i32_1 = arith.constant 0 : i32
    return %arg0, %c0_i32, %c0_i32_0 : i32, i32, i32
  }
  func.func @transform_1(%arg0: i32) -> (i32, i32) {
    %c0_i32 = arith.constant 0 : i32
    %c0_i32_0 = arith.constant 0 : i32
    %c0_i32_1 = arith.constant 0 : i32
    return %c0_i32, %c0_i32_0 : i32, i32
  }
  func.func @transform_2(%arg0: i32) -> (i32, i32) {
    %c0_i32 = arith.constant 0 : i32
    %c0_i32_0 = arith.constant 0 : i32
    %c0_i32_1 = arith.constant 0 : i32
    return %c0_i32, %c0_i32_0 : i32, i32
  }
  func.func @transform_3(%arg0: i32) -> (i32, i32) {
    %c0_i32 = arith.constant 0 : i32
    %c0_i32_0 = arith.constant 0 : i32
    %c0_i32_1 = arith.constant 0 : i32
    return %c0_i32, %c0_i32_0 : i32, i32
  }
  func.func @transform_4(%arg0: i32) -> (i32, i32) {
    %c0_i32 = arith.constant 0 : i32
    %c0_i32_0 = arith.constant 0 : i32
    %c0_i32_1 = arith.constant 0 : i32
    return %c0_i32, %c0_i32_0 : i32, i32
  }
  func.func @transform_5(%arg0: i32) -> (i32, i32) {
    %c0_i32 = arith.constant 0 : i32
    %c0_i32_0 = arith.constant 0 : i32
    %c0_i32_1 = arith.constant 0 : i32
    return %c0_i32, %c0_i32_0 : i32, i32
  }
  func.func @transform_6(%arg0: i32) -> (i32, i32, i32) {
    %c0_i32 = arith.constant 0 : i32
    %c0_i32_0 = arith.constant 0 : i32
    %c0_i32_1 = arith.constant 0 : i32
    return %arg0, %c0_i32, %c0_i32_0 : i32, i32, i32
  }
}

module attributes {stable_mosaic.version = 11 : i64} {
  func.func @_posconv_ln_kernel(%arg0: i32, %arg1: memref<1x39x32xf32, #tpu.memory_space<vmem>>, %arg2: memref<1x39x96xf32, #tpu.memory_space<vmem>>, %arg3: memref<96x32xf32, #tpu.memory_space<vmem>>, %arg4: memref<1x32xf32, #tpu.memory_space<vmem>>, %arg5: memref<1x32xf32, #tpu.memory_space<vmem>>, %arg6: memref<1x32xf32, #tpu.memory_space<vmem>>, %arg7: memref<1x39x32xf32, #tpu.memory_space<vmem>>) attributes {dimension_semantics = [#tpu.dimension_semantics<parallel>], iteration_bounds = array<i64: 2>, scalar_prefetch = 0 : i64, scratch_operands = 0 : i64, tpu.core_type = #tpu.core_type<tc>, window_params = [{transform_indices = @transform_0, window_bounds = array<i64: 1, 39, 32>}, {transform_indices = @transform_1, window_bounds = array<i64: 1, 39, 96>}, {pipeline_mode = #tpu.pipeline_mode<synchronous>, transform_indices = @transform_2, window_bounds = array<i64: 96, 32>}, {pipeline_mode = #tpu.pipeline_mode<synchronous>, transform_indices = @transform_3, window_bounds = array<i64: 1, 32>}, {pipeline_mode = #tpu.pipeline_mode<synchronous>, transform_indices = @transform_4, window_bounds = array<i64: 1, 32>}, {pipeline_mode = #tpu.pipeline_mode<synchronous>, transform_indices = @transform_5, window_bounds = array<i64: 1, 32>}, {transform_indices = @transform_6, window_bounds = array<i64: 1, 39, 32>}]} {
    %c0 = arith.constant 0 : index
    %c0_0 = arith.constant 0 : index
    %c0_1 = arith.constant 0 : index
    %0 = vector.load %arg1[%c0, %c0_0, %c0_1] : memref<1x39x32xf32, #tpu.memory_space<vmem>>, vector<1x39x32xf32>
    %1 = vector.shape_cast %0 : vector<1x39x32xf32> to vector<39x32xf32>
    %c0_2 = arith.constant 0 : index
    %c0_3 = arith.constant 0 : index
    %c0_4 = arith.constant 0 : index
    %2 = vector.load %arg2[%c0_2, %c0_3, %c0_4] : memref<1x39x96xf32, #tpu.memory_space<vmem>>, vector<1x39x96xf32>
    %3 = vector.shape_cast %2 : vector<1x39x96xf32> to vector<39x96xf32>
    %c0_5 = arith.constant 0 : index
    %c0_6 = arith.constant 0 : index
    %4 = vector.load %arg3[%c0_5, %c0_6] : memref<96x32xf32, #tpu.memory_space<vmem>>, vector<96x32xf32>
    %5 = arith.truncf %3 : vector<39x96xf32> to vector<39x96xbf16>
    %6 = arith.truncf %4 : vector<96x32xf32> to vector<96x32xbf16>
    %cst = arith.constant dense<0.000000e+00> : vector<39x32xf32>
    %7 = tpu.matmul %5, %6, %cst {dimension_numbers = #tpu.dot_dimension_numbers<[1], [0], [0], [1], [0, 0, 1, 1], [], []>} : vector<39x96xbf16>, vector<96x32xbf16>, vector<39x32xf32> -> vector<39x32xf32>
    %c0_7 = arith.constant 0 : index
    %c0_8 = arith.constant 0 : index
    %8 = vector.load %arg4[%c0_7, %c0_8] : memref<1x32xf32, #tpu.memory_space<vmem>>, vector<1x32xf32>
    %9 = vector.broadcast %8 : vector<1x32xf32> to vector<39x32xf32>
    %10 = arith.addf %7, %9 : vector<39x32xf32>
    %11 = arith.mulf %10, %10 : vector<39x32xf32>
    %12 = arith.mulf %10, %11 : vector<39x32xf32>
    %cst_9 = arith.constant 4.471500e-02 : f32
    %13 = vector.broadcast %cst_9 : f32 to vector<39x32xf32>
    %14 = arith.mulf %13, %12 : vector<39x32xf32>
    %15 = arith.addf %10, %14 : vector<39x32xf32>
    %cst_10 = arith.constant 0.797884583 : f32
    %16 = vector.broadcast %cst_10 : f32 to vector<39x32xf32>
    %17 = arith.mulf %16, %15 : vector<39x32xf32>
    %18 = math.tanh %17 : vector<39x32xf32>
    %cst_11 = arith.constant 1.000000e+00 : f32
    %19 = vector.broadcast %cst_11 : f32 to vector<39x32xf32>
    %20 = arith.addf %19, %18 : vector<39x32xf32>
    %cst_12 = arith.constant 5.000000e-01 : f32
    %21 = vector.broadcast %cst_12 : f32 to vector<39x32xf32>
    %22 = arith.mulf %21, %20 : vector<39x32xf32>
    %23 = arith.mulf %10, %22 : vector<39x32xf32>
    %24 = arith.addf %1, %23 : vector<39x32xf32>
    %c0_13 = arith.constant 0 : index
    %c0_14 = arith.constant 0 : index
    %25 = vector.load %arg5[%c0_13, %c0_14] : memref<1x32xf32, #tpu.memory_space<vmem>>, vector<1x32xf32>
    %c0_15 = arith.constant 0 : index
    %c0_16 = arith.constant 0 : index
    %26 = vector.load %arg6[%c0_15, %c0_16] : memref<1x32xf32, #tpu.memory_space<vmem>>, vector<1x32xf32>
    %cst_17 = arith.constant dense<0.000000e+00> : vector<39xf32>
    %27 = vector.multi_reduction <add>, %24, %cst_17 [1] : vector<39x32xf32> to vector<39xf32>
    %28 = vector.shape_cast %27 : vector<39xf32> to vector<39x1xf32>
    %cst_18 = arith.constant 3.200000e+01 : f32
    %29 = vector.broadcast %cst_18 : f32 to vector<39x1xf32>
    %30 = arith.divf %28, %29 : vector<39x1xf32>
    %31 = vector.broadcast %30 : vector<39x1xf32> to vector<39x32xf32>
    %32 = arith.subf %24, %31 : vector<39x32xf32>
    %33 = arith.mulf %32, %32 : vector<39x32xf32>
    %cst_19 = arith.constant dense<0.000000e+00> : vector<39xf32>
    %34 = vector.multi_reduction <add>, %33, %cst_19 [1] : vector<39x32xf32> to vector<39xf32>
    %35 = vector.shape_cast %34 : vector<39xf32> to vector<39x1xf32>
    %cst_20 = arith.constant 3.200000e+01 : f32
    %36 = vector.broadcast %cst_20 : f32 to vector<39x1xf32>
    %37 = arith.divf %35, %36 : vector<39x1xf32>
    %38 = vector.broadcast %30 : vector<39x1xf32> to vector<39x32xf32>
    %39 = arith.subf %24, %38 : vector<39x32xf32>
    %cst_21 = arith.constant 9.99999974E-6 : f32
    %40 = vector.broadcast %cst_21 : f32 to vector<39x1xf32>
    %41 = arith.addf %37, %40 : vector<39x1xf32>
    %42 = math.rsqrt %41 : vector<39x1xf32>
    %43 = vector.broadcast %42 : vector<39x1xf32> to vector<39x32xf32>
    %44 = arith.mulf %39, %43 : vector<39x32xf32>
    %45 = vector.broadcast %25 : vector<1x32xf32> to vector<39x32xf32>
    %46 = arith.mulf %44, %45 : vector<39x32xf32>
    %47 = vector.broadcast %26 : vector<1x32xf32> to vector<39x32xf32>
    %48 = arith.addf %46, %47 : vector<39x32xf32>
    %c0_22 = arith.constant 0 : index
    %c0_23 = arith.constant 0 : index
    %c0_24 = arith.constant 0 : index
    %49 = vector.load %arg7[%c0_22, %c0_23, %c0_24] : memref<1x39x32xf32, #tpu.memory_space<vmem>>, vector<1x39x32xf32>
    %50 = vector.shape_cast %49 : vector<1x39x32xf32> to vector<39x32xf32>
    %51 = vector.shape_cast %48 : vector<39x32xf32> to vector<1x39x32xf32>
    tpu.vector_store %arg7[%c0_22, %c0_23, %c0_24], %51 {strides = array<i32>} : memref<1x39x32xf32, #tpu.memory_space<vmem>>, vector<1x39x32xf32>,
    return
  }
  func.func @transform_0(%arg0: i32) -> (i32, i32, i32) {
    %c0_i32 = arith.constant 0 : i32
    %c0_i32_0 = arith.constant 0 : i32
    %c0_i32_1 = arith.constant 0 : i32
    return %arg0, %c0_i32, %c0_i32_0 : i32, i32, i32
  }
  func.func @transform_1(%arg0: i32) -> (i32, i32, i32) {
    %c0_i32 = arith.constant 0 : i32
    %c0_i32_0 = arith.constant 0 : i32
    %c0_i32_1 = arith.constant 0 : i32
    return %arg0, %c0_i32, %c0_i32_0 : i32, i32, i32
  }
  func.func @transform_2(%arg0: i32) -> (i32, i32) {
    %c0_i32 = arith.constant 0 : i32
    %c0_i32_0 = arith.constant 0 : i32
    %c0_i32_1 = arith.constant 0 : i32
    return %c0_i32, %c0_i32_0 : i32, i32
  }
  func.func @transform_3(%arg0: i32) -> (i32, i32) {
    %c0_i32 = arith.constant 0 : i32
    %c0_i32_0 = arith.constant 0 : i32
    %c0_i32_1 = arith.constant 0 : i32
    return %c0_i32, %c0_i32_0 : i32, i32
  }
  func.func @transform_4(%arg0: i32) -> (i32, i32) {
    %c0_i32 = arith.constant 0 : i32
    %c0_i32_0 = arith.constant 0 : i32
    %c0_i32_1 = arith.constant 0 : i32
    return %c0_i32, %c0_i32_0 : i32, i32
  }
  func.func @transform_5(%arg0: i32) -> (i32, i32) {
    %c0_i32 = arith.constant 0 : i32
    %c0_i32_0 = arith.constant 0 : i32
    %c0_i32_1 = arith.constant 0 : i32
    return %c0_i32, %c0_i32_0 : i32, i32
  }
  func.func @transform_6(%arg0: i32) -> (i32, i32, i32) {
    %c0_i32 = arith.constant 0 : i32
    %c0_i32_0 = arith.constant 0 : i32
    %c0_i32_1 = arith.constant 0 : i32
    return %arg0, %c0_i32, %c0_i32_0 : i32, i32, i32
  }
}

module attributes {stable_mosaic.version = 11 : i64} {
  func.func @_encoder_layer_kernel(%arg0: i32, %arg1: memref<1x39x32xf32, #tpu.memory_space<vmem>>, %arg2: memref<32x96xf32, #tpu.memory_space<vmem>>, %arg3: memref<1x96xf32, #tpu.memory_space<vmem>>, %arg4: memref<32x32xf32, #tpu.memory_space<vmem>>, %arg5: memref<1x32xf32, #tpu.memory_space<vmem>>, %arg6: memref<1x32xf32, #tpu.memory_space<vmem>>, %arg7: memref<1x32xf32, #tpu.memory_space<vmem>>, %arg8: memref<32x64xf32, #tpu.memory_space<vmem>>, %arg9: memref<1x64xf32, #tpu.memory_space<vmem>>, %arg10: memref<64x32xf32, #tpu.memory_space<vmem>>, %arg11: memref<1x32xf32, #tpu.memory_space<vmem>>, %arg12: memref<1x32xf32, #tpu.memory_space<vmem>>, %arg13: memref<1x32xf32, #tpu.memory_space<vmem>>, %arg14: memref<1x39x32xf32, #tpu.memory_space<vmem>>) attributes {dimension_semantics = [#tpu.dimension_semantics<parallel>], iteration_bounds = array<i64: 2>, scalar_prefetch = 0 : i64, scratch_operands = 0 : i64, tpu.core_type = #tpu.core_type<tc>, window_params = [{transform_indices = @transform_0, window_bounds = array<i64: 1, 39, 32>}, {pipeline_mode = #tpu.pipeline_mode<synchronous>, transform_indices = @transform_1, window_bounds = array<i64: 32, 96>}, {pipeline_mode = #tpu.pipeline_mode<synchronous>, transform_indices = @transform_2, window_bounds = array<i64: 1, 96>}, {pipeline_mode = #tpu.pipeline_mode<synchronous>, transform_indices = @transform_3, window_bounds = array<i64: 32, 32>}, {pipeline_mode = #tpu.pipeline_mode<synchronous>, transform_indices = @transform_4, window_bounds = array<i64: 1, 32>}, {pipeline_mode = #tpu.pipeline_mode<synchronous>, transform_indices = @transform_5, window_bounds = array<i64: 1, 32>}, {pipeline_mode = #tpu.pipeline_mode<synchronous>, transform_indices = @transform_6, window_bounds = array<i64: 1, 32>}, {pipeline_mode = #tpu.pipeline_mode<synchronous>, transform_indices = @transform_7, window_bounds = array<i64: 32, 64>}, {pipeline_mode = #tpu.pipeline_mode<synchronous>, transform_indices = @transform_8, window_bounds = array<i64: 1, 64>}, {pipeline_mode = #tpu.pipeline_mode<synchronous>, transform_indices = @transform_9, window_bounds = array<i64: 64, 32>}, {pipeline_mode = #tpu.pipeline_mode<synchronous>, transform_indices = @transform_10, window_bounds = array<i64: 1, 32>}, {pipeline_mode = #tpu.pipeline_mode<synchronous>, transform_indices = @transform_11, window_bounds = array<i64: 1, 32>}, {pipeline_mode = #tpu.pipeline_mode<synchronous>, transform_indices = @transform_12, window_bounds = array<i64: 1, 32>}, {transform_indices = @transform_13, window_bounds = array<i64: 1, 39, 32>}]} {
    %c0 = arith.constant 0 : index
    %c0_0 = arith.constant 0 : index
    %c0_1 = arith.constant 0 : index
    %0 = vector.load %arg1[%c0, %c0_0, %c0_1] : memref<1x39x32xf32, #tpu.memory_space<vmem>>, vector<1x39x32xf32>
    %1 = vector.shape_cast %0 : vector<1x39x32xf32> to vector<39x32xf32>
    %c0_2 = arith.constant 0 : index
    %c0_3 = arith.constant 0 : index
    %2 = vector.load %arg2[%c0_2, %c0_3] : memref<32x96xf32, #tpu.memory_space<vmem>>, vector<32x96xf32>
    %3 = arith.truncf %1 : vector<39x32xf32> to vector<39x32xbf16>
    %4 = arith.truncf %2 : vector<32x96xf32> to vector<32x96xbf16>
    %cst = arith.constant dense<0.000000e+00> : vector<39x96xf32>
    %5 = tpu.matmul %3, %4, %cst {dimension_numbers = #tpu.dot_dimension_numbers<[1], [0], [0], [1], [0, 0, 1, 1], [], []>} : vector<39x32xbf16>, vector<32x96xbf16>, vector<39x96xf32> -> vector<39x96xf32>
    %c0_4 = arith.constant 0 : index
    %c0_5 = arith.constant 0 : index
    %6 = vector.load %arg3[%c0_4, %c0_5] : memref<1x96xf32, #tpu.memory_space<vmem>>, vector<1x96xf32>
    %7 = vector.broadcast %6 : vector<1x96xf32> to vector<39x96xf32>
    %8 = arith.addf %5, %7 : vector<39x96xf32>
    %cst_6 = arith.constant 0.000000e+00 : f32
    %9 = vector.broadcast %cst_6 : f32 to vector<39x32xf32>
    %10 = vector.extract_strided_slice %8 {offsets = [0, 0], sizes = [39, 8], strides = [1, 1]} : vector<39x96xf32> to vector<39x8xf32>
    %11 = vector.extract_strided_slice %8 {offsets = [0, 32], sizes = [39, 8], strides = [1, 1]} : vector<39x96xf32> to vector<39x8xf32>
    %12 = vector.extract_strided_slice %8 {offsets = [0, 64], sizes = [39, 8], strides = [1, 1]} : vector<39x96xf32> to vector<39x8xf32>
    %13 = arith.truncf %10 : vector<39x8xf32> to vector<39x8xbf16>
    %14 = arith.truncf %11 : vector<39x8xf32> to vector<39x8xbf16>
    %cst_7 = arith.constant dense<0.000000e+00> : vector<39x39xf32>
    %15 = tpu.matmul %13, %14, %cst_7 {dimension_numbers = #tpu.dot_dimension_numbers<[1], [1], [0], [0], [0, 0, 1, 0], [], []>} : vector<39x8xbf16>, vector<39x8xbf16>, vector<39x39xf32> -> vector<39x39xf32>
    %cst_8 = arith.constant 0.353553385 : f32
    %16 = vector.broadcast %cst_8 : f32 to vector<39x39xf32>
    %17 = arith.mulf %15, %16 : vector<39x39xf32>
    %cst_9 = arith.constant dense<0xFF800000> : vector<39xf32>
    %18 = vector.multi_reduction <maximumf>, %17, %cst_9 [1] : vector<39x39xf32> to vector<39xf32>
    %19 = vector.shape_cast %18 : vector<39xf32> to vector<39x1xf32>
    %20 = vector.broadcast %19 : vector<39x1xf32> to vector<39x39xf32>
    %21 = arith.subf %17, %20 : vector<39x39xf32>
    %22 = math.exp %21 : vector<39x39xf32>
    %cst_10 = arith.constant dense<0.000000e+00> : vector<39xf32>
    %23 = vector.multi_reduction <add>, %22, %cst_10 [1] : vector<39x39xf32> to vector<39xf32>
    %24 = vector.shape_cast %23 : vector<39xf32> to vector<39x1xf32>
    %25 = tpu.reciprocal %24 {approx = true} : vector<39x1xf32> -> vector<39x1xf32>
    %26 = vector.broadcast %25 : vector<39x1xf32> to vector<39x39xf32>
    %27 = arith.mulf %22, %26 : vector<39x39xf32>
    %28 = arith.truncf %27 : vector<39x39xf32> to vector<39x39xbf16>
    %29 = arith.truncf %12 : vector<39x8xf32> to vector<39x8xbf16>
    %cst_11 = arith.constant dense<0.000000e+00> : vector<39x8xf32>
    %30 = tpu.matmul %28, %29, %cst_11 {dimension_numbers = #tpu.dot_dimension_numbers<[1], [0], [0], [1], [0, 0, 1, 1], [], []>} : vector<39x39xbf16>, vector<39x8xbf16>, vector<39x8xf32> -> vector<39x8xf32>
    %c0_12 = arith.constant 0 : index
    %c0_13 = arith.constant 0 : index
    %31 = vector.load %arg4[%c0_12, %c0_13] : memref<32x32xf32, #tpu.memory_space<vmem>>, vector<8x32xf32>
    %32 = arith.truncf %30 : vector<39x8xf32> to vector<39x8xbf16>
    %33 = arith.truncf %31 : vector<8x32xf32> to vector<8x32xbf16>
    %cst_14 = arith.constant dense<0.000000e+00> : vector<39x32xf32>
    %34 = tpu.matmul %32, %33, %cst_14 {dimension_numbers = #tpu.dot_dimension_numbers<[1], [0], [0], [1], [0, 0, 1, 1], [], []>} : vector<39x8xbf16>, vector<8x32xbf16>, vector<39x32xf32> -> vector<39x32xf32>
    %35 = arith.addf %9, %34 : vector<39x32xf32>
    %36 = vector.extract_strided_slice %8 {offsets = [0, 8], sizes = [39, 8], strides = [1, 1]} : vector<39x96xf32> to vector<39x8xf32>
    %37 = vector.extract_strided_slice %8 {offsets = [0, 40], sizes = [39, 8], strides = [1, 1]} : vector<39x96xf32> to vector<39x8xf32>
    %38 = vector.extract_strided_slice %8 {offsets = [0, 72], sizes = [39, 8], strides = [1, 1]} : vector<39x96xf32> to vector<39x8xf32>
    %39 = arith.truncf %36 : vector<39x8xf32> to vector<39x8xbf16>
    %40 = arith.truncf %37 : vector<39x8xf32> to vector<39x8xbf16>
    %cst_15 = arith.constant dense<0.000000e+00> : vector<39x39xf32>
    %41 = tpu.matmul %39, %40, %cst_15 {dimension_numbers = #tpu.dot_dimension_numbers<[1], [1], [0], [0], [0, 0, 1, 0], [], []>} : vector<39x8xbf16>, vector<39x8xbf16>, vector<39x39xf32> -> vector<39x39xf32>
    %cst_16 = arith.constant 0.353553385 : f32
    %42 = vector.broadcast %cst_16 : f32 to vector<39x39xf32>
    %43 = arith.mulf %41, %42 : vector<39x39xf32>
    %cst_17 = arith.constant dense<0xFF800000> : vector<39xf32>
    %44 = vector.multi_reduction <maximumf>, %43, %cst_17 [1] : vector<39x39xf32> to vector<39xf32>
    %45 = vector.shape_cast %44 : vector<39xf32> to vector<39x1xf32>
    %46 = vector.broadcast %45 : vector<39x1xf32> to vector<39x39xf32>
    %47 = arith.subf %43, %46 : vector<39x39xf32>
    %48 = math.exp %47 : vector<39x39xf32>
    %cst_18 = arith.constant dense<0.000000e+00> : vector<39xf32>
    %49 = vector.multi_reduction <add>, %48, %cst_18 [1] : vector<39x39xf32> to vector<39xf32>
    %50 = vector.shape_cast %49 : vector<39xf32> to vector<39x1xf32>
    %51 = tpu.reciprocal %50 {approx = true} : vector<39x1xf32> -> vector<39x1xf32>
    %52 = vector.broadcast %51 : vector<39x1xf32> to vector<39x39xf32>
    %53 = arith.mulf %48, %52 : vector<39x39xf32>
    %54 = arith.truncf %53 : vector<39x39xf32> to vector<39x39xbf16>
    %55 = arith.truncf %38 : vector<39x8xf32> to vector<39x8xbf16>
    %cst_19 = arith.constant dense<0.000000e+00> : vector<39x8xf32>
    %56 = tpu.matmul %54, %55, %cst_19 {dimension_numbers = #tpu.dot_dimension_numbers<[1], [0], [0], [1], [0, 0, 1, 1], [], []>} : vector<39x39xbf16>, vector<39x8xbf16>, vector<39x8xf32> -> vector<39x8xf32>
    %c8 = arith.constant 8 : index
    %c0_20 = arith.constant 0 : index
    %57 = vector.load %arg4[%c8, %c0_20] : memref<32x32xf32, #tpu.memory_space<vmem>>, vector<8x32xf32>
    %58 = arith.truncf %56 : vector<39x8xf32> to vector<39x8xbf16>
    %59 = arith.truncf %57 : vector<8x32xf32> to vector<8x32xbf16>
    %cst_21 = arith.constant dense<0.000000e+00> : vector<39x32xf32>
    %60 = tpu.matmul %58, %59, %cst_21 {dimension_numbers = #tpu.dot_dimension_numbers<[1], [0], [0], [1], [0, 0, 1, 1], [], []>} : vector<39x8xbf16>, vector<8x32xbf16>, vector<39x32xf32> -> vector<39x32xf32>
    %61 = arith.addf %35, %60 : vector<39x32xf32>
    %62 = vector.extract_strided_slice %8 {offsets = [0, 16], sizes = [39, 8], strides = [1, 1]} : vector<39x96xf32> to vector<39x8xf32>
    %63 = vector.extract_strided_slice %8 {offsets = [0, 48], sizes = [39, 8], strides = [1, 1]} : vector<39x96xf32> to vector<39x8xf32>
    %64 = vector.extract_strided_slice %8 {offsets = [0, 80], sizes = [39, 8], strides = [1, 1]} : vector<39x96xf32> to vector<39x8xf32>
    %65 = arith.truncf %62 : vector<39x8xf32> to vector<39x8xbf16>
    %66 = arith.truncf %63 : vector<39x8xf32> to vector<39x8xbf16>
    %cst_22 = arith.constant dense<0.000000e+00> : vector<39x39xf32>
    %67 = tpu.matmul %65, %66, %cst_22 {dimension_numbers = #tpu.dot_dimension_numbers<[1], [1], [0], [0], [0, 0, 1, 0], [], []>} : vector<39x8xbf16>, vector<39x8xbf16>, vector<39x39xf32> -> vector<39x39xf32>
    %cst_23 = arith.constant 0.353553385 : f32
    %68 = vector.broadcast %cst_23 : f32 to vector<39x39xf32>
    %69 = arith.mulf %67, %68 : vector<39x39xf32>
    %cst_24 = arith.constant dense<0xFF800000> : vector<39xf32>
    %70 = vector.multi_reduction <maximumf>, %69, %cst_24 [1] : vector<39x39xf32> to vector<39xf32>
    %71 = vector.shape_cast %70 : vector<39xf32> to vector<39x1xf32>
    %72 = vector.broadcast %71 : vector<39x1xf32> to vector<39x39xf32>
    %73 = arith.subf %69, %72 : vector<39x39xf32>
    %74 = math.exp %73 : vector<39x39xf32>
    %cst_25 = arith.constant dense<0.000000e+00> : vector<39xf32>
    %75 = vector.multi_reduction <add>, %74, %cst_25 [1] : vector<39x39xf32> to vector<39xf32>
    %76 = vector.shape_cast %75 : vector<39xf32> to vector<39x1xf32>
    %77 = tpu.reciprocal %76 {approx = true} : vector<39x1xf32> -> vector<39x1xf32>
    %78 = vector.broadcast %77 : vector<39x1xf32> to vector<39x39xf32>
    %79 = arith.mulf %74, %78 : vector<39x39xf32>
    %80 = arith.truncf %79 : vector<39x39xf32> to vector<39x39xbf16>
    %81 = arith.truncf %64 : vector<39x8xf32> to vector<39x8xbf16>
    %cst_26 = arith.constant dense<0.000000e+00> : vector<39x8xf32>
    %82 = tpu.matmul %80, %81, %cst_26 {dimension_numbers = #tpu.dot_dimension_numbers<[1], [0], [0], [1], [0, 0, 1, 1], [], []>} : vector<39x39xbf16>, vector<39x8xbf16>, vector<39x8xf32> -> vector<39x8xf32>
    %c16 = arith.constant 16 : index
    %c0_27 = arith.constant 0 : index
    %83 = vector.load %arg4[%c16, %c0_27] : memref<32x32xf32, #tpu.memory_space<vmem>>, vector<8x32xf32>
    %84 = arith.truncf %82 : vector<39x8xf32> to vector<39x8xbf16>
    %85 = arith.truncf %83 : vector<8x32xf32> to vector<8x32xbf16>
    %cst_28 = arith.constant dense<0.000000e+00> : vector<39x32xf32>
    %86 = tpu.matmul %84, %85, %cst_28 {dimension_numbers = #tpu.dot_dimension_numbers<[1], [0], [0], [1], [0, 0, 1, 1], [], []>} : vector<39x8xbf16>, vector<8x32xbf16>, vector<39x32xf32> -> vector<39x32xf32>
    %87 = arith.addf %61, %86 : vector<39x32xf32>
    %88 = vector.extract_strided_slice %8 {offsets = [0, 24], sizes = [39, 8], strides = [1, 1]} : vector<39x96xf32> to vector<39x8xf32>
    %89 = vector.extract_strided_slice %8 {offsets = [0, 56], sizes = [39, 8], strides = [1, 1]} : vector<39x96xf32> to vector<39x8xf32>
    %90 = vector.extract_strided_slice %8 {offsets = [0, 88], sizes = [39, 8], strides = [1, 1]} : vector<39x96xf32> to vector<39x8xf32>
    %91 = arith.truncf %88 : vector<39x8xf32> to vector<39x8xbf16>
    %92 = arith.truncf %89 : vector<39x8xf32> to vector<39x8xbf16>
    %cst_29 = arith.constant dense<0.000000e+00> : vector<39x39xf32>
    %93 = tpu.matmul %91, %92, %cst_29 {dimension_numbers = #tpu.dot_dimension_numbers<[1], [1], [0], [0], [0, 0, 1, 0], [], []>} : vector<39x8xbf16>, vector<39x8xbf16>, vector<39x39xf32> -> vector<39x39xf32>
    %cst_30 = arith.constant 0.353553385 : f32
    %94 = vector.broadcast %cst_30 : f32 to vector<39x39xf32>
    %95 = arith.mulf %93, %94 : vector<39x39xf32>
    %cst_31 = arith.constant dense<0xFF800000> : vector<39xf32>
    %96 = vector.multi_reduction <maximumf>, %95, %cst_31 [1] : vector<39x39xf32> to vector<39xf32>
    %97 = vector.shape_cast %96 : vector<39xf32> to vector<39x1xf32>
    %98 = vector.broadcast %97 : vector<39x1xf32> to vector<39x39xf32>
    %99 = arith.subf %95, %98 : vector<39x39xf32>
    %100 = math.exp %99 : vector<39x39xf32>
    %cst_32 = arith.constant dense<0.000000e+00> : vector<39xf32>
    %101 = vector.multi_reduction <add>, %100, %cst_32 [1] : vector<39x39xf32> to vector<39xf32>
    %102 = vector.shape_cast %101 : vector<39xf32> to vector<39x1xf32>
    %103 = tpu.reciprocal %102 {approx = true} : vector<39x1xf32> -> vector<39x1xf32>
    %104 = vector.broadcast %103 : vector<39x1xf32> to vector<39x39xf32>
    %105 = arith.mulf %100, %104 : vector<39x39xf32>
    %106 = arith.truncf %105 : vector<39x39xf32> to vector<39x39xbf16>
    %107 = arith.truncf %90 : vector<39x8xf32> to vector<39x8xbf16>
    %cst_33 = arith.constant dense<0.000000e+00> : vector<39x8xf32>
    %108 = tpu.matmul %106, %107, %cst_33 {dimension_numbers = #tpu.dot_dimension_numbers<[1], [0], [0], [1], [0, 0, 1, 1], [], []>} : vector<39x39xbf16>, vector<39x8xbf16>, vector<39x8xf32> -> vector<39x8xf32>
    %c24 = arith.constant 24 : index
    %c0_34 = arith.constant 0 : index
    %109 = vector.load %arg4[%c24, %c0_34] : memref<32x32xf32, #tpu.memory_space<vmem>>, vector<8x32xf32>
    %110 = arith.truncf %108 : vector<39x8xf32> to vector<39x8xbf16>
    %111 = arith.truncf %109 : vector<8x32xf32> to vector<8x32xbf16>
    %cst_35 = arith.constant dense<0.000000e+00> : vector<39x32xf32>
    %112 = tpu.matmul %110, %111, %cst_35 {dimension_numbers = #tpu.dot_dimension_numbers<[1], [0], [0], [1], [0, 0, 1, 1], [], []>} : vector<39x8xbf16>, vector<8x32xbf16>, vector<39x32xf32> -> vector<39x32xf32>
    %113 = arith.addf %87, %112 : vector<39x32xf32>
    %c0_36 = arith.constant 0 : index
    %c0_37 = arith.constant 0 : index
    %114 = vector.load %arg5[%c0_36, %c0_37] : memref<1x32xf32, #tpu.memory_space<vmem>>, vector<1x32xf32>
    %115 = vector.broadcast %114 : vector<1x32xf32> to vector<39x32xf32>
    %116 = arith.addf %113, %115 : vector<39x32xf32>
    %117 = arith.addf %1, %116 : vector<39x32xf32>
    %c0_38 = arith.constant 0 : index
    %c0_39 = arith.constant 0 : index
    %118 = vector.load %arg6[%c0_38, %c0_39] : memref<1x32xf32, #tpu.memory_space<vmem>>, vector<1x32xf32>
    %c0_40 = arith.constant 0 : index
    %c0_41 = arith.constant 0 : index
    %119 = vector.load %arg7[%c0_40, %c0_41] : memref<1x32xf32, #tpu.memory_space<vmem>>, vector<1x32xf32>
    %cst_42 = arith.constant dense<0.000000e+00> : vector<39xf32>
    %120 = vector.multi_reduction <add>, %117, %cst_42 [1] : vector<39x32xf32> to vector<39xf32>
    %121 = vector.shape_cast %120 : vector<39xf32> to vector<39x1xf32>
    %cst_43 = arith.constant 3.200000e+01 : f32
    %122 = vector.broadcast %cst_43 : f32 to vector<39x1xf32>
    %123 = arith.divf %121, %122 : vector<39x1xf32>
    %124 = vector.broadcast %123 : vector<39x1xf32> to vector<39x32xf32>
    %125 = arith.subf %117, %124 : vector<39x32xf32>
    %126 = arith.mulf %125, %125 : vector<39x32xf32>
    %cst_44 = arith.constant dense<0.000000e+00> : vector<39xf32>
    %127 = vector.multi_reduction <add>, %126, %cst_44 [1] : vector<39x32xf32> to vector<39xf32>
    %128 = vector.shape_cast %127 : vector<39xf32> to vector<39x1xf32>
    %cst_45 = arith.constant 3.200000e+01 : f32
    %129 = vector.broadcast %cst_45 : f32 to vector<39x1xf32>
    %130 = arith.divf %128, %129 : vector<39x1xf32>
    %131 = vector.broadcast %123 : vector<39x1xf32> to vector<39x32xf32>
    %132 = arith.subf %117, %131 : vector<39x32xf32>
    %cst_46 = arith.constant 9.99999974E-6 : f32
    %133 = vector.broadcast %cst_46 : f32 to vector<39x1xf32>
    %134 = arith.addf %130, %133 : vector<39x1xf32>
    %135 = math.rsqrt %134 : vector<39x1xf32>
    %136 = vector.broadcast %135 : vector<39x1xf32> to vector<39x32xf32>
    %137 = arith.mulf %132, %136 : vector<39x32xf32>
    %138 = vector.broadcast %118 : vector<1x32xf32> to vector<39x32xf32>
    %139 = arith.mulf %137, %138 : vector<39x32xf32>
    %140 = vector.broadcast %119 : vector<1x32xf32> to vector<39x32xf32>
    %141 = arith.addf %139, %140 : vector<39x32xf32>
    %c0_47 = arith.constant 0 : index
    %c0_48 = arith.constant 0 : index
    %142 = vector.load %arg8[%c0_47, %c0_48] : memref<32x64xf32, #tpu.memory_space<vmem>>, vector<32x64xf32>
    %143 = arith.truncf %141 : vector<39x32xf32> to vector<39x32xbf16>
    %144 = arith.truncf %142 : vector<32x64xf32> to vector<32x64xbf16>
    %cst_49 = arith.constant dense<0.000000e+00> : vector<39x64xf32>
    %145 = tpu.matmul %143, %144, %cst_49 {dimension_numbers = #tpu.dot_dimension_numbers<[1], [0], [0], [1], [0, 0, 1, 1], [], []>} : vector<39x32xbf16>, vector<32x64xbf16>, vector<39x64xf32> -> vector<39x64xf32>
    %c0_50 = arith.constant 0 : index
    %c0_51 = arith.constant 0 : index
    %146 = vector.load %arg9[%c0_50, %c0_51] : memref<1x64xf32, #tpu.memory_space<vmem>>, vector<1x64xf32>
    %147 = vector.broadcast %146 : vector<1x64xf32> to vector<39x64xf32>
    %148 = arith.addf %145, %147 : vector<39x64xf32>
    %149 = arith.mulf %148, %148 : vector<39x64xf32>
    %150 = arith.mulf %148, %149 : vector<39x64xf32>
    %cst_52 = arith.constant 4.471500e-02 : f32
    %151 = vector.broadcast %cst_52 : f32 to vector<39x64xf32>
    %152 = arith.mulf %151, %150 : vector<39x64xf32>
    %153 = arith.addf %148, %152 : vector<39x64xf32>
    %cst_53 = arith.constant 0.797884583 : f32
    %154 = vector.broadcast %cst_53 : f32 to vector<39x64xf32>
    %155 = arith.mulf %154, %153 : vector<39x64xf32>
    %156 = math.tanh %155 : vector<39x64xf32>
    %cst_54 = arith.constant 1.000000e+00 : f32
    %157 = vector.broadcast %cst_54 : f32 to vector<39x64xf32>
    %158 = arith.addf %157, %156 : vector<39x64xf32>
    %cst_55 = arith.constant 5.000000e-01 : f32
    %159 = vector.broadcast %cst_55 : f32 to vector<39x64xf32>
    %160 = arith.mulf %159, %158 : vector<39x64xf32>
    %161 = arith.mulf %148, %160 : vector<39x64xf32>
    %c0_56 = arith.constant 0 : index
    %c0_57 = arith.constant 0 : index
    %162 = vector.load %arg10[%c0_56, %c0_57] : memref<64x32xf32, #tpu.memory_space<vmem>>, vector<64x32xf32>
    %163 = arith.truncf %161 : vector<39x64xf32> to vector<39x64xbf16>
    %164 = arith.truncf %162 : vector<64x32xf32> to vector<64x32xbf16>
    %cst_58 = arith.constant dense<0.000000e+00> : vector<39x32xf32>
    %165 = tpu.matmul %163, %164, %cst_58 {dimension_numbers = #tpu.dot_dimension_numbers<[1], [0], [0], [1], [0, 0, 1, 1], [], []>} : vector<39x64xbf16>, vector<64x32xbf16>, vector<39x32xf32> -> vector<39x32xf32>
    %c0_59 = arith.constant 0 : index
    %c0_60 = arith.constant 0 : index
    %166 = vector.load %arg11[%c0_59, %c0_60] : memref<1x32xf32, #tpu.memory_space<vmem>>, vector<1x32xf32>
    %167 = vector.broadcast %166 : vector<1x32xf32> to vector<39x32xf32>
    %168 = arith.addf %165, %167 : vector<39x32xf32>
    %169 = arith.addf %141, %168 : vector<39x32xf32>
    %c0_61 = arith.constant 0 : index
    %c0_62 = arith.constant 0 : index
    %170 = vector.load %arg12[%c0_61, %c0_62] : memref<1x32xf32, #tpu.memory_space<vmem>>, vector<1x32xf32>
    %c0_63 = arith.constant 0 : index
    %c0_64 = arith.constant 0 : index
    %171 = vector.load %arg13[%c0_63, %c0_64] : memref<1x32xf32, #tpu.memory_space<vmem>>, vector<1x32xf32>
    %cst_65 = arith.constant dense<0.000000e+00> : vector<39xf32>
    %172 = vector.multi_reduction <add>, %169, %cst_65 [1] : vector<39x32xf32> to vector<39xf32>
    %173 = vector.shape_cast %172 : vector<39xf32> to vector<39x1xf32>
    %cst_66 = arith.constant 3.200000e+01 : f32
    %174 = vector.broadcast %cst_66 : f32 to vector<39x1xf32>
    %175 = arith.divf %173, %174 : vector<39x1xf32>
    %176 = vector.broadcast %175 : vector<39x1xf32> to vector<39x32xf32>
    %177 = arith.subf %169, %176 : vector<39x32xf32>
    %178 = arith.mulf %177, %177 : vector<39x32xf32>
    %cst_67 = arith.constant dense<0.000000e+00> : vector<39xf32>
    %179 = vector.multi_reduction <add>, %178, %cst_67 [1] : vector<39x32xf32> to vector<39xf32>
    %180 = vector.shape_cast %179 : vector<39xf32> to vector<39x1xf32>
    %cst_68 = arith.constant 3.200000e+01 : f32
    %181 = vector.broadcast %cst_68 : f32 to vector<39x1xf32>
    %182 = arith.divf %180, %181 : vector<39x1xf32>
    %183 = vector.broadcast %175 : vector<39x1xf32> to vector<39x32xf32>
    %184 = arith.subf %169, %183 : vector<39x32xf32>
    %cst_69 = arith.constant 9.99999974E-6 : f32
    %185 = vector.broadcast %cst_69 : f32 to vector<39x1xf32>
    %186 = arith.addf %182, %185 : vector<39x1xf32>
    %187 = math.rsqrt %186 : vector<39x1xf32>
    %188 = vector.broadcast %187 : vector<39x1xf32> to vector<39x32xf32>
    %189 = arith.mulf %184, %188 : vector<39x32xf32>
    %190 = vector.broadcast %170 : vector<1x32xf32> to vector<39x32xf32>
    %191 = arith.mulf %189, %190 : vector<39x32xf32>
    %192 = vector.broadcast %171 : vector<1x32xf32> to vector<39x32xf32>
    %193 = arith.addf %191, %192 : vector<39x32xf32>
    %c0_70 = arith.constant 0 : index
    %c0_71 = arith.constant 0 : index
    %c0_72 = arith.constant 0 : index
    %194 = vector.load %arg14[%c0_70, %c0_71, %c0_72] : memref<1x39x32xf32, #tpu.memory_space<vmem>>, vector<1x39x32xf32>
    %195 = vector.shape_cast %194 : vector<1x39x32xf32> to vector<39x32xf32>
    %196 = vector.shape_cast %193 : vector<39x32xf32> to vector<1x39x32xf32>
    tpu.vector_store %arg14[%c0_70, %c0_71, %c0_72], %196 {strides = array<i32>} : memref<1x39x32xf32, #tpu.memory_space<vmem>>, vector<1x39x32xf32>,
    return
  }
  func.func @transform_0(%arg0: i32) -> (i32, i32, i32) {
    %c0_i32 = arith.constant 0 : i32
    %c0_i32_0 = arith.constant 0 : i32
    %c0_i32_1 = arith.constant 0 : i32
    return %arg0, %c0_i32, %c0_i32_0 : i32, i32, i32
  }
  func.func @transform_1(%arg0: i32) -> (i32, i32) {
    %c0_i32 = arith.constant 0 : i32
    %c0_i32_0 = arith.constant 0 : i32
    %c0_i32_1 = arith.constant 0 : i32
    return %c0_i32, %c0_i32_0 : i32, i32
  }
  func.func @transform_2(%arg0: i32) -> (i32, i32) {
    %c0_i32 = arith.constant 0 : i32
    %c0_i32_0 = arith.constant 0 : i32
    %c0_i32_1 = arith.constant 0 : i32
    return %c0_i32, %c0_i32_0 : i32, i32
  }
  func.func @transform_3(%arg0: i32) -> (i32, i32) {
    %c0_i32 = arith.constant 0 : i32
    %c0_i32_0 = arith.constant 0 : i32
    %c0_i32_1 = arith.constant 0 : i32
    return %c0_i32, %c0_i32_0 : i32, i32
  }
  func.func @transform_4(%arg0: i32) -> (i32, i32) {
    %c0_i32 = arith.constant 0 : i32
    %c0_i32_0 = arith.constant 0 : i32
    %c0_i32_1 = arith.constant 0 : i32
    return %c0_i32, %c0_i32_0 : i32, i32
  }
  func.func @transform_5(%arg0: i32) -> (i32, i32) {
    %c0_i32 = arith.constant 0 : i32
    %c0_i32_0 = arith.constant 0 : i32
    %c0_i32_1 = arith.constant 0 : i32
    return %c0_i32, %c0_i32_0 : i32, i32
  }
  func.func @transform_6(%arg0: i32) -> (i32, i32) {
    %c0_i32 = arith.constant 0 : i32
    %c0_i32_0 = arith.constant 0 : i32
    %c0_i32_1 = arith.constant 0 : i32
    return %c0_i32, %c0_i32_0 : i32, i32
  }
  func.func @transform_7(%arg0: i32) -> (i32, i32) {
    %c0_i32 = arith.constant 0 : i32
    %c0_i32_0 = arith.constant 0 : i32
    %c0_i32_1 = arith.constant 0 : i32
    return %c0_i32, %c0_i32_0 : i32, i32
  }
  func.func @transform_8(%arg0: i32) -> (i32, i32) {
    %c0_i32 = arith.constant 0 : i32
    %c0_i32_0 = arith.constant 0 : i32
    %c0_i32_1 = arith.constant 0 : i32
    return %c0_i32, %c0_i32_0 : i32, i32
  }
  func.func @transform_9(%arg0: i32) -> (i32, i32) {
    %c0_i32 = arith.constant 0 : i32
    %c0_i32_0 = arith.constant 0 : i32
    %c0_i32_1 = arith.constant 0 : i32
    return %c0_i32, %c0_i32_0 : i32, i32
  }
  func.func @transform_10(%arg0: i32) -> (i32, i32) {
    %c0_i32 = arith.constant 0 : i32
    %c0_i32_0 = arith.constant 0 : i32
    %c0_i32_1 = arith.constant 0 : i32
    return %c0_i32, %c0_i32_0 : i32, i32
  }
  func.func @transform_11(%arg0: i32) -> (i32, i32) {
    %c0_i32 = arith.constant 0 : i32
    %c0_i32_0 = arith.constant 0 : i32
    %c0_i32_1 = arith.constant 0 : i32
    return %c0_i32, %c0_i32_0 : i32, i32
  }
  func.func @transform_12(%arg0: i32) -> (i32, i32) {
    %c0_i32 = arith.constant 0 : i32
    %c0_i32_0 = arith.constant 0 : i32
    %c0_i32_1 = arith.constant 0 : i32
    return %c0_i32, %c0_i32_0 : i32, i32
  }
  func.func @transform_13(%arg0: i32) -> (i32, i32, i32) {
    %c0_i32 = arith.constant 0 : i32
    %c0_i32_0 = arith.constant 0 : i32
    %c0_i32_1 = arith.constant 0 : i32
    return %arg0, %c0_i32, %c0_i32_0 : i32, i32, i32
  }
}

module attributes {stable_mosaic.version = 11 : i64} {
  func.func @_lm_head_kernel(%arg0: i32, %arg1: memref<1x39x32xf32, #tpu.memory_space<vmem>>, %arg2: memref<32x32xf32, #tpu.memory_space<vmem>>, %arg3: memref<1x32xf32, #tpu.memory_space<vmem>>, %arg4: memref<1x39x32xf32, #tpu.memory_space<vmem>>) attributes {dimension_semantics = [#tpu.dimension_semantics<parallel>], iteration_bounds = array<i64: 2>, scalar_prefetch = 0 : i64, scratch_operands = 0 : i64, tpu.core_type = #tpu.core_type<tc>, window_params = [{transform_indices = @transform_0, window_bounds = array<i64: 1, 39, 32>}, {pipeline_mode = #tpu.pipeline_mode<synchronous>, transform_indices = @transform_1, window_bounds = array<i64: 32, 32>}, {pipeline_mode = #tpu.pipeline_mode<synchronous>, transform_indices = @transform_2, window_bounds = array<i64: 1, 32>}, {transform_indices = @transform_3, window_bounds = array<i64: 1, 39, 32>}]} {
    %c0 = arith.constant 0 : index
    %c0_0 = arith.constant 0 : index
    %c0_1 = arith.constant 0 : index
    %0 = vector.load %arg1[%c0, %c0_0, %c0_1] : memref<1x39x32xf32, #tpu.memory_space<vmem>>, vector<1x39x32xf32>
    %1 = vector.shape_cast %0 : vector<1x39x32xf32> to vector<39x32xf32>
    %c0_2 = arith.constant 0 : index
    %c0_3 = arith.constant 0 : index
    %2 = vector.load %arg2[%c0_2, %c0_3] : memref<32x32xf32, #tpu.memory_space<vmem>>, vector<32x32xf32>
    %3 = arith.truncf %1 : vector<39x32xf32> to vector<39x32xbf16>
    %4 = arith.truncf %2 : vector<32x32xf32> to vector<32x32xbf16>
    %cst = arith.constant dense<0.000000e+00> : vector<39x32xf32>
    %5 = tpu.matmul %3, %4, %cst {dimension_numbers = #tpu.dot_dimension_numbers<[1], [0], [0], [1], [0, 0, 1, 1], [], []>} : vector<39x32xbf16>, vector<32x32xbf16>, vector<39x32xf32> -> vector<39x32xf32>
    %c0_4 = arith.constant 0 : index
    %c0_5 = arith.constant 0 : index
    %6 = vector.load %arg3[%c0_4, %c0_5] : memref<1x32xf32, #tpu.memory_space<vmem>>, vector<1x32xf32>
    %7 = vector.broadcast %6 : vector<1x32xf32> to vector<39x32xf32>
    %8 = arith.addf %5, %7 : vector<39x32xf32>
    %c0_6 = arith.constant 0 : index
    %c0_7 = arith.constant 0 : index
    %c0_8 = arith.constant 0 : index
    %9 = vector.load %arg4[%c0_6, %c0_7, %c0_8] : memref<1x39x32xf32, #tpu.memory_space<vmem>>, vector<1x39x32xf32>
    %10 = vector.shape_cast %9 : vector<1x39x32xf32> to vector<39x32xf32>
    %11 = vector.shape_cast %8 : vector<39x32xf32> to vector<1x39x32xf32>
    tpu.vector_store %arg4[%c0_6, %c0_7, %c0_8], %11 {strides = array<i32>} : memref<1x39x32xf32, #tpu.memory_space<vmem>>, vector<1x39x32xf32>,
    return
  }
  func.func @transform_0(%arg0: i32) -> (i32, i32, i32) {
    %c0_i32 = arith.constant 0 : i32
    %c0_i32_0 = arith.constant 0 : i32
    %c0_i32_1 = arith.constant 0 : i32
    return %arg0, %c0_i32, %c0_i32_0 : i32, i32, i32
  }
  func.func @transform_1(%arg0: i32) -> (i32, i32) {
    %c0_i32 = arith.constant 0 : i32
    %c0_i32_0 = arith.constant 0 : i32
    %c0_i32_1 = arith.constant 0 : i32
    return %c0_i32, %c0_i32_0 : i32, i32
  }
  func.func @transform_2(%arg0: i32) -> (i32, i32) {
    %c0_i32 = arith.constant 0 : i32
    %c0_i32_0 = arith.constant 0 : i32
    %c0_i32_1 = arith.constant 0 : i32
    return %c0_i32, %c0_i32_0 : i32, i32
  }
  func.func @transform_3(%arg0: i32) -> (i32, i32, i32) {
    %c0_i32 = arith.constant 0 : i32
    %c0_i32_0 = arith.constant 0 : i32
    %c0_i32_1 = arith.constant 0 : i32
    return %arg0, %c0_i32, %c0_i32_0 : i32, i32, i32
  }
}

</mosaic_0001>

<llo_original>
// kernel: wav2vec2_ctc_logits.6
$region0: #{wav2vec2_ctc_logits.6}
  #allocation0 [shape = 'u32[]', space=smem, size = 0x4, offset = 0x4, fixed_abs, tag = 'smem constant byte address 0x4 - core index']
  #allocation1 [shape = 'u32[144,128]{1,0:T(1,128)}', space=vmem, size = 0x12000, scoped, tag = 'internal scratch']
  %s0 = inlined_call_operand.vmem [shape: f32[2,79,10], index: 0, kind: input, shape index: {}]
  %s1 = inlined_call_operand.vmem [shape: f32[10,32], index: 1, kind: input, shape index: {}]
  %s2 = inlined_call_operand.vmem [shape: f32[1,32], index: 2, kind: input, shape index: {}]
  %s3 = inlined_call_operand.vmem [shape: f32[1,32], index: 3, kind: input, shape index: {}]
  %s4 = inlined_call_operand.vmem [shape: f32[2,79,32], index: 4, kind: output, shape index: {}]
  %s5 = sld [smem:[#allocation0]]
  $region49: #{wav2vec2_ctc_logits.6} parent=0
    _
  %s7 = ssub.s32 1, %s5
  %s8 = scalar_select 0, %s7, %s5
  loop: start=0, step=1, limit=4
  $region2: #{wav2vec2_ctc_logits.6} parent=0 // loop_pre_header
    _
  $region3: #{wav2vec2_ctc_logits.6} parent=0 // loop_header
    %s10 = sphi 0, %s14
    %p11 = scmp.ge.s32.totalorder %s10, 4
    %s20 = sphi 0, %s22
    %s23 = sphi 0, %s20
    %s24 = sphi 0, %s23
    %s40 = sphi 0, %s24
    %s44 = sphi 0, %s44
    %s46 = sphi 0, %s44
    %s47 = sphi 0, %s46
    %s61 = sphi 0, %s47
    %s65 = sphi 0, %s65
    %s67 = sphi 0, %s65
    %s68 = sphi 0, %s67
    %s82 = sphi 0, %s68
    %s86 = sphi 0, %s86
    %s88 = sphi 0, %s86
    %s89 = sphi 0, %s88
    %s103 = sphi 0, %s89
    %s109 = sphi 0, %s111
    %s112 = sphi 0, %s109
    %s113 = sphi 0, %s112
    %s129 = sphi 0, %s113
  $region4: #{wav2vec2_ctc_logits.6} parent=0 // loop_header_branch
    %13 = sbr.rel (%p11) target = $region8
  $region5: #{wav2vec2_ctc_logits.6} parent=0 // loop_body
    %s15 = ssub.s32 %s10, 1
    %s16 = ssub.s32 %s10, 2
    %s17 = sadd.s32 %s10, 1
    %s18 = ssub.s32 %s10, %s17
    %p19 = scmp.eq.s32.totalorder %s18, 0
    %s21 = sadd.s32 %s20, 1
    %s22 = scalar_select %p19, %s20, %s21
    %p25 = pneg %p19
    %p26 = scmp.eq.s32.totalorder %s10, 1
    %p27 = por %p25, %p26
    %p28 = scmp.ne.s32.totalorder %s20, %s23
    %p29 = scmp.eq.s32.totalorder %s10, 0
    %p30 = por %p28, %p29
    %p31 = scmp.ne.s32.totalorder %s20, %s23
    %p32 = scmp.eq.s32.totalorder %s15, 1
    %p33 = por %p31, %p32
    %p34 = scmp.ne.s32.totalorder %s23, %s24
    %p35 = scmp.eq.s32.totalorder %s15, 0
    %p36 = por %p34, %p35
    %p37 = scmp.ne.s32.totalorder %s23, %s24
    %p38 = scmp.eq.s32.totalorder %s16, 1
    %p39 = por %p37, %p38
    %p41 = scmp.ne.s32.totalorder %s24, %s40
    %p42 = scmp.eq.s32.totalorder %s16, 0
    %p43 = por %p41, %p42
    %s45 = sadd.s32 %s44, 1
    %p48 = scmp.eq.s32.totalorder %s10, 1
    %p49 = scmp.ne.s32.totalorder %s44, %s46
    %p50 = scmp.eq.s32.totalorder %s10, 0
    %p51 = por %p49, %p50
    %p52 = scmp.ne.s32.totalorder %s44, %s46
    %p53 = scmp.eq.s32.totalorder %s15, 1
    %p54 = por %p52, %p53
    %p55 = scmp.ne.s32.totalorder %s46, %s47
    %p56 = scmp.eq.s32.totalorder %s15, 0
    %p57 = por %p55, %p56
    %p58 = scmp.ne.s32.totalorder %s46, %s47
    %p59 = scmp.eq.s32.totalorder %s16, 1
    %p60 = por %p58, %p59
    %p62 = scmp.ne.s32.totalorder %s47, %s61
    %p63 = scmp.eq.s32.totalorder %s16, 0
    %p64 = por %p62, %p63
    %s66 = sadd.s32 %s65, 1
    %p69 = scmp.eq.s32.totalorder %s10, 1
    %p70 = scmp.ne.s32.totalorder %s65, %s67
    %p71 = scmp.eq.s32.totalorder %s10, 0
    %p72 = por %p70, %p71
    %p73 = scmp.ne.s32.totalorder %s65, %s67
    %p74 = scmp.eq.s32.totalorder %s15, 1
    %p75 = por %p73, %p74
    %p76 = scmp.ne.s32.totalorder %s67, %s68
    %p77 = scmp.eq.s32.totalorder %s15, 0
    %p78 = por %p76, %p77
    %p79 = scmp.ne.s32.totalorder %s67, %s68
    %p80 = scmp.eq.s32.totalorder %s16, 1
    %p81 = por %p79, %p80
    %p83 = scmp.ne.s32.totalorder %s68, %s82
    %p84 = scmp.eq.s32.totalorder %s16, 0
    %p85 = por %p83, %p84
    %s87 = sadd.s32 %s86, 1
    %p90 = scmp.eq.s32.totalorder %s10, 1
    %p91 = scmp.ne.s32.totalorder %s86, %s88
    %p92 = scmp.eq.s32.totalorder %s10, 0
    %p93 = por %p91, %p92
    %p94 = scmp.ne.s32.totalorder %s86, %s88
    %p95 = scmp.eq.s32.totalorder %s15, 1
    %p96 = por %p94, %p95
    %p97 = scmp.ne.s32.totalorder %s88, %s89
    %p98 = scmp.eq.s32.totalorder %s15, 0
    %p99 = por %p97, %p98
    %p100 = scmp.ne.s32.totalorder %s88, %s89
    %p101 = scmp.eq.s32.totalorder %s16, 1
    %p102 = por %p100, %p101
    %p104 = scmp.ne.s32.totalorder %s89, %s103
    %p105 = scmp.eq.s32.totalorder %s16, 0
    %p106 = por %p104, %p105
    %s107 = ssub.s32 %s10, %s17
    %p108 = scmp.eq.s32.totalorder %s107, 0
    %s110 = sadd.s32 %s109, 1
    %s111 = scalar_select %p108, %s109, %s110
    %p114 = pneg %p108
    %p115 = scmp.eq.s32.totalorder %s10, 1
    %p116 = por %p114, %p115
    %p117 = scmp.ne.s32.totalorder %s109, %s112
    %p118 = scmp.eq.s32.totalorder %s10, 0
    %p119 = por %p117, %p118
    %p120 = scmp.ne.s32.totalorder %s109, %s112
    %p121 = scmp.eq.s32.totalorder %s15, 1
    %p122 = por %p120, %p121
    %p123 = scmp.ne.s32.totalorder %s112, %s113
    %p124 = scmp.eq.s32.totalorder %s15, 0
    %p125 = por %p123, %p124
    %p126 = scmp.ne.s32.totalorder %s112, %s113
    %p127 = scmp.eq.s32.totalorder %s16, 1
    %p128 = por %p126, %p127
    %p130 = scmp.ne.s32.totalorder %s113, %s129
    %p131 = scmp.eq.s32.totalorder %s16, 0
    %p132 = por %p130, %p131
    %p133 = scmp.le.s32.totalorder 1, %s10
    %p134 = scmp.lt.s32.totalorder %s10, 3
    %p135 = pnand %p133, %p134
    %p136 = pneg %p135
    // Predicated region
    $region9: #{wav2vec2_ctc_logits.6} parent=5 // pred_check
      _
    $region10: #{wav2vec2_ctc_logits.6} parent=5 // pred_check_branch
      %138 = sbr.rel (%p135) target = $region12
    $region11: #{wav2vec2_ctc_logits.6} parent=5 // pred_region
      %s139 = ssub.s32 %s10, 1
      // Predicated region
      $region13: #{wav2vec2_ctc_logits.6} parent=11 // pred_check
        %p140 = pneg %p57
      $region14: #{wav2vec2_ctc_logits.6} parent=11 // pred_check_branch
        %142 = sbr.rel (%p140) target = $region16
      $region15: #{wav2vec2_ctc_logits.6} parent=11 // pred_region
        _
      $region16: #{wav2vec2_ctc_logits.6} parent=11 // pred_fallthru
        _
      // Predicated region
      $region17: #{wav2vec2_ctc_logits.6} parent=11 // pred_check
        %p143 = pneg %p78
      $region18: #{wav2vec2_ctc_logits.6} parent=11 // pred_check_branch
        %145 = sbr.rel (%p143) target = $region20
      $region19: #{wav2vec2_ctc_logits.6} parent=11 // pred_region
        _
      $region20: #{wav2vec2_ctc_logits.6} parent=11 // pred_fallthru
        _
      // Predicated region
      $region21: #{wav2vec2_ctc_logits.6} parent=11 // pred_check
        %p146 = pneg %p99
      $region22: #{wav2vec2_ctc_logits.6} parent=11 // pred_check_branch
        %148 = sbr.rel (%p146) target = $region24
      $region23: #{wav2vec2_ctc_logits.6} parent=11 // pred_region
        _
      $region24: #{wav2vec2_ctc_logits.6} parent=11 // pred_fallthru
        _
    $region12: #{wav2vec2_ctc_logits.6} parent=5 // pred_fallthru
      _
    %p149 = scmp.lt.s32.totalorder %s10, 2
    // Predicated region
    $region25: #{wav2vec2_ctc_logits.6} parent=5 // pred_check
      %p150 = pneg %p149
    $region26: #{wav2vec2_ctc_logits.6} parent=5 // pred_check_branch
      %152 = sbr.rel (%p150) target = $region28
    $region27: #{wav2vec2_ctc_logits.6} parent=5 // pred_region
      // Predicated region
      $region29: #{wav2vec2_ctc_logits.6} parent=27 // pred_check
        %p153 = pneg %p30
      $region30: #{wav2vec2_ctc_logits.6} parent=27 // pred_check_branch
        %155 = sbr.rel (%p153) target = $region32
      $region31: #{wav2vec2_ctc_logits.6} parent=27 // pred_region
        %p156 = scmp.lt.s32.totalorder %s10, 1
        %s157 = scalar_select %p156, %s10, 1
        %s158 = smul.addr %s157, 10
        %s159 = smul.addr %s158, 8
        %s160 = scalar_lea.vmem %s0, %s159
      $region32: #{wav2vec2_ctc_logits.6} parent=27 // pred_fallthru
        _
    $region28: #{wav2vec2_ctc_logits.6} parent=5 // pred_fallthru
      _
    %p161 = scmp.le.s32.totalorder 1, %s10
    %p162 = scmp.lt.s32.totalorder %s10, 3
    %p163 = pnand %p161, %p162
    %p164 = pneg %p163
    // Predicated region
    $region33: #{wav2vec2_ctc_logits.6} parent=5 // pred_check
      _
    $region34: #{wav2vec2_ctc_logits.6} parent=5 // pred_check_branch
      %166 = sbr.rel (%p163) target = $region36
    $region35: #{wav2vec2_ctc_logits.6} parent=5 // pred_region
      %s167 = ssub.s32 %s10, 1
      %p168 = scmp.lt.s32.totalorder %s15, 1
      %s169 = scalar_select %p168, %s15, 1
      %s170 = smul.addr %s169, 10
      %s171 = smul.addr %s170, 8
      %s172 = scalar_lea.vmem %s0, %s171
      %p173 = pneg %p36
      %p174 = pneg %p33
      %p175 = pneg %p57
      %p176 = pneg %p54
      %p177 = pneg %p78
      %p178 = pneg %p75
      %p179 = pneg %p99
      %p180 = pneg %p96
      %p181 = pneg %p125
      %p182 = pneg %p122
      %p183 = scmp.lt.s32.totalorder %s15, 1
      %s184 = scalar_select %p183, %s15, 1
      %s185 = smul.addr %s184, 10
      %s186 = smul.addr %s185, 8
      %s187 = scalar_lea.vmem %s4, %s186
      %p188 = scmp.lt.s32.totalorder %s15, 1
      %s189 = scalar_select %p188, %s15, 1
      %s190 = smul.addr %s189, 10
      %s191 = smul.addr %s190, 8
      %s192 = scalar_lea.vmem %s0, %s191
      %p193 = scmp.lt.s32.totalorder %s15, 1
      %s194 = scalar_select %p193, %s15, 1
      %s195 = smul.addr %s194, 10
      %s196 = smul.addr %s195, 8
      %s197 = scalar_lea.vmem %s4, %s196
      %v199 = vld [vmem:[%s192] sm:$0xff]
      %v200 = vld [vmem:[%s192 + $0x8] sm:$0xff]
      %v201 = vld [vmem:[%s192 + $0x10] sm:$0xff]
      %v202 = vld [vmem:[%s192 + $0x18] sm:$0xff]
      %v203 = vld [vmem:[%s192 + $0x20] sm:$0xff]
      %v204 = vld [vmem:[%s192 + $0x28] sm:$0xff]
      %v205 = vld [vmem:[%s192 + $0x30] sm:$0xff]
      %v206 = vld [vmem:[%s192 + $0x38] sm:$0xff]
      %v207 = vld [vmem:[%s192 + $0x40] sm:$0xff]
      %v208 = vld [vmem:[%s192 + $0x48] sm:$0x7f]
      %v209 = vld [vmem:[%s1] sm:$0xff]
      %v210 = vld [vmem:[%s1 + $0x8] sm:$0x3]
      %v211 = vpack.c.bf16 %v200, %v199
      %v212 = vpack.c.bf16 %v202, %v201
      %v213 = vpack.c.bf16 %v204, %v203
      %v214 = vpack.c.bf16 %v206, %v205
      %v215 = vpack.c.bf16 %v208, %v207
      %v216 = vpack.c.bf16 %v210, %v209
      %vm217 = vcmask 80896
      %v219 = vsel %vm217, %v211, 0
      %v222 = vsel %vm217, %v212, 0
      %v225 = vsel %vm217, %v213, 0
      %v228 = vsel %vm217, %v214, 0
      %v231 = vsel %vm217, %v215, 0
      %vm233 = vcmask 1044480
      %v235 = vsel %vm233, %v216, 0
      %237 = vmatprep.subr.bf16.mxu0 0
      %238 = vmatpush1.bf16.msra.mxu0 %v235
      %239 = vmatprep.subr.bf16.mxu0 0
      %240 = vmatpush1.bf16.msra.mxu0 0
      %241 = vmatprep.subr.bf16.mxu0 0
      %242 = vmatpush1.bf16.msra.mxu0 0
      %243 = vmatprep.subr.bf16.mxu0 0
      %244 = vmatpush1.bf16.msra.mxu0 0
      %245 = vmatprep.subr.bf16.mxu0 0
      %246 = vmatpush1.bf16.msra.mxu0 0
      %247 = vmatprep.subr.bf16.mxu0 0
      %248 = vmatpush1.bf16.msra.mxu0 0
      %249 = vmatprep.subr.bf16.mxu0 0
      %250 = vmatpush1.bf16.msra.mxu0 0
      %251 = vmatprep.subr.bf16.mxu0 0
      %252 = vmatpush1.bf16.msra.mxu0 0
      %253 = vmatprep.subr.bf16.mxu0 0
      %254 = vmatpush1.bf16.msra.mxu0 0
      %255 = vmatprep.subr.bf16.mxu0 0
      %256 = vmatpush1.bf16.msra.mxu0 0
      %257 = vmatprep.subr.bf16.mxu0 0
      %258 = vmatpush1.bf16.msra.mxu0 0
      %259 = vmatprep.subr.bf16.mxu0 0
      %260 = vmatpush1.bf16.msra.mxu0 0
      %261 = vmatprep.subr.bf16.mxu0 0
      %262 = vmatpush1.bf16.msra.mxu0 0
      %263 = vmatprep.subr.bf16.mxu0 0
      %264 = vmatpush1.bf16.msra.mxu0 0
      %265 = vmatprep.subr.bf16.mxu0 0
      %266 = vmatpush1.bf16.msra.mxu0 0
      %267 = vmatprep.subr.bf16.mxu0 0
      %268 = vmatpush1.bf16.msra.mxu0 0
      %269 = vmatprep.mubr.bf16.mxu0 0
      %270 = vmatmul.mubr.bf16.gmra.mrb[0].mxu0 %v219
      %v271 = vpop.f32.mrb[0].mxu0
      %v272 = vadd.f32 0.0, %v271
      %v273 = vpop.f32.mrb[0].mxu0
      %v274 = vpop.f32.mrb[0].mxu0
      %v275 = vadd.f32 0.0, %v274
      %v276 = vpop.f32.mrb[0].mxu0
      %277 = vmatprep.mubr.bf16.mxu0 0
      %278 = vmatmul.mubr.bf16.gmra.mrb[0].mxu0 %v222
      %v279 = vpop.f32.mrb[0].mxu0
      %v280 = vadd.f32 0.0, %v279
      %v281 = vpop.f32.mrb[0].mxu0
      %v282 = vpop.f32.mrb[0].mxu0
      %v283 = vadd.f32 0.0, %v282
      %v284 = vpop.f32.mrb[0].mxu0
      %285 = vmatprep.mubr.bf16.mxu0 0
      %286 = vmatmul.mubr.bf16.gmra.mrb[0].mxu0 %v225
      %v287 = vpop.f32.mrb[0].mxu0
      %v288 = vadd.f32 0.0, %v287
      %v289 = vpop.f32.mrb[0].mxu0
      %v290 = vpop.f32.mrb[0].mxu0
      %v291 = vadd.f32 0.0, %v290
      %v292 = vpop.f32.mrb[0].mxu0
      %293 = vmatprep.mubr.bf16.mxu0 0
      %294 = vmatmul.mubr.bf16.gmra.mrb[0].mxu0 %v228
      %v295 = vpop.f32.mrb[0].mxu0
      %v296 = vadd.f32 0.0, %v295
      %v297 = vpop.f32.mrb[0].mxu0
      %v298 = vpop.f32.mrb[0].mxu0
      %v299 = vadd.f32 0.0, %v298
      %v300 = vpop.f32.mrb[0].mxu0
      %301 = vmatprep.mubr.bf16.mxu0 0
      %302 = vmatmul.mubr.bf16.gmra.mrb[0].mxu0 %v231
      %v303 = vpop.f32.mrb[0].mxu0
      %v304 = vadd.f32 0.0, %v303
      %v305 = vpop.f32.mrb[0].mxu0
      %v306 = vpop.f32.mrb[0].mxu0
      %v307 = vadd.f32 0.0, %v306
      %v308 = vpop.f32.mrb[0].mxu0
      %309 = vdwg.mxu0
      %vm310 = vcmask 261120
      %v311 = vsel %vm310, %v272, 0.0
      %v312 = vsel %vm310, %v275, 0.0
      %v313 = vadd.f32 %v311, %v312
      %v314 = vsel %vm310, %v280, 0.0
      %v315 = vadd.f32 %v313, %v314
      %v316 = vsel %vm310, %v283, 0.0
      %v317 = vadd.f32 %v315, %v316
      %v318 = vsel %vm310, %v288, 0.0
      %v319 = vadd.f32 %v317, %v318
      %v320 = vsel %vm310, %v291, 0.0
      %v321 = vadd.f32 %v319, %v320
      %v322 = vsel %vm310, %v296, 0.0
      %v323 = vadd.f32 %v321, %v322
      %v324 = vsel %vm310, %v299, 0.0
      %v325 = vadd.f32 %v323, %v324
      %v326 = vsel %vm310, %v304, 0.0
      %v327 = vadd.f32 %v325, %v326
      %vm328 = vcmask 260096
      %v329 = vsel %vm328, %v307, 0.0
      %v330 = vadd.f32 %v327, %v329
      %v331 = vrot.slane %v330, 4
      %v332 = vadd.f32 %v330, %v331
      %v333 = vrot.slane %v332, 2
      %v334 = vadd.f32 %v332, %v333
      %v335 = vrot.slane %v334, 1
      %v336 = vadd.f32 %v334, %v335
      %v337 = vrcp.pop 79.0
      %v338 = vmul.f32 %v336, %v337
      %v339 = vsub.f32 %v272, %v338
      %v340 = vsub.f32 %v275, %v338
      %v341 = vsub.f32 %v280, %v338
      %v342 = vsub.f32 %v283, %v338
      %v343 = vsub.f32 %v288, %v338
      %v344 = vsub.f32 %v291, %v338
      %v345 = vsub.f32 %v296, %v338
      %v346 = vsub.f32 %v299, %v338
      %v347 = vsub.f32 %v304, %v338
      %v348 = vsub.f32 %v307, %v338
      %v349 = vmul.f32 %v339, %v339
      %v350 = vmul.f32 %v340, %v340
      %v351 = vmul.f32 %v341, %v341
      %v352 = vmul.f32 %v342, %v342
      %v353 = vmul.f32 %v343, %v343
      %v354 = vmul.f32 %v344, %v344
      %v355 = vmul.f32 %v345, %v345
      %v356 = vmul.f32 %v346, %v346
      %v357 = vmul.f32 %v347, %v347
      %v358 = vmul.f32 %v348, %v348
      %v359 = vsel %vm310, %v349, 0.0
      %v360 = vsel %vm310, %v350, 0.0
      %v361 = vadd.f32 %v359, %v360
      %v362 = vsel %vm310, %v351, 0.0
      %v363 = vadd.f32 %v361, %v362
      %v364 = vsel %vm310, %v352, 0.0
      %v365 = vadd.f32 %v363, %v364
      %v366 = vsel %vm310, %v353, 0.0
      %v367 = vadd.f32 %v365, %v366
      %v368 = vsel %vm310, %v354, 0.0
      %v369 = vadd.f32 %v367, %v368
      %v370 = vsel %vm310, %v355, 0.0
      %v371 = vadd.f32 %v369, %v370
      %v372 = vsel %vm310, %v356, 0.0
      %v373 = vadd.f32 %v371, %v372
      %v374 = vsel %vm310, %v357, 0.0
      %v375 = vadd.f32 %v373, %v374
      %v376 = vsel %vm328, %v358, 0.0
      %v377 = vadd.f32 %v375, %v376
      %v378 = vrot.slane %v377, 4
      %v379 = vadd.f32 %v377, %v378
      %v380 = vrot.slane %v379, 2
      %v381 = vadd.f32 %v379, %v380
      %v382 = vrot.slane %v381, 1
      %v383 = vadd.f32 %v381, %v382
      %v384 = vmul.f32 %v383, %v337
      %v385 = vadd.f32 %v384, 1e-05
      %v386 = vrsqrt.pop %v385
      %v387 = vmul.f32 %v339, %v386
      %v388 = vmul.f32 %v340, %v386
      %v389 = vmul.f32 %v341, %v386
      %v390 = vmul.f32 %v342, %v386
      %v391 = vmul.f32 %v343, %v386
      %v392 = vmul.f32 %v344, %v386
      %v393 = vmul.f32 %v345, %v386
      %v394 = vmul.f32 %v346, %v386
      %v395 = vmul.f32 %v347, %v386
      %v396 = vmul.f32 %v348, %v386
      %v397 = vld [vmem:[%s2] sm:$0x1]
      %v399 = vlaneseq
      %v400 = vshrl.u32 %v399, 7
      %v401 = vsub.s32 0, %v400
      %v402 = vrot.slane %v397, %v401
      %v404 = vmul.f32 %v387, %v402
      %v405 = vmul.f32 %v388, %v402
      %v406 = vmul.f32 %v389, %v402
      %v407 = vmul.f32 %v390, %v402
      %v408 = vmul.f32 %v391, %v402
      %v409 = vmul.f32 %v392, %v402
      %v410 = vmul.f32 %v393, %v402
      %v411 = vmul.f32 %v394, %v402
      %v412 = vmul.f32 %v395, %v402
      %v413 = vmul.f32 %v396, %v402
      %v414 = vld [vmem:[%s3] sm:$0x1]
      %v416 = vlaneseq
      %v417 = vshrl.u32 %v416, 7
      %v418 = vsub.s32 0, %v417
      %v419 = vrot.slane %v414, %v418
      %v421 = vadd.f32 %v404, %v419
      %v422 = vadd.f32 %v405, %v419
      %v423 = vadd.f32 %v406, %v419
      %v424 = vadd.f32 %v407, %v419
      %v425 = vadd.f32 %v408, %v419
      %v426 = vadd.f32 %v409, %v419
      %v427 = vadd.f32 %v410, %v419
      %v428 = vadd.f32 %v411, %v419
      %v429 = vadd.f32 %v412, %v419
      %v430 = vadd.f32 %v413, %v419
      %v431 = vmul.f32 %v421, %v421
      %v432 = vmul.f32 %v422, %v422
      %v433 = vmul.f32 %v423, %v423
      %v434 = vmul.f32 %v424, %v424
      %v435 = vmul.f32 %v425, %v425
      %v436 = vmul.f32 %v426, %v426
      %v437 = vmul.f32 %v427, %v427
      %v438 = vmul.f32 %v428, %v428
      %v439 = vmul.f32 %v429, %v429
      %v440 = vmul.f32 %v430, %v430
      %v441 = vmul.f32 %v421, %v431
      %v442 = vmul.f32 %v422, %v432
      %v443 = vmul.f32 %v423, %v433
      %v444 = vmul.f32 %v424, %v434
      %v445 = vmul.f32 %v425, %v435
      %v446 = vmul.f32 %v426, %v436
      %v447 = vmul.f32 %v427, %v437
      %v448 = vmul.f32 %v428, %v438
      %v449 = vmul.f32 %v429, %v439
      %v450 = vmul.f32 %v430, %v440
      %v451 = vmul.f32 %v441, 0.044715
      %v452 = vmul.f32 %v442, 0.044715
      %v453 = vmul.f32 %v443, 0.044715
      %v454 = vmul.f32 %v444, 0.044715
      %v455 = vmul.f32 %v445, 0.044715
      %v456 = vmul.f32 %v446, 0.044715
      %v457 = vmul.f32 %v447, 0.044715
      %v458 = vmul.f32 %v448, 0.044715
      %v459 = vmul.f32 %v449, 0.044715
      %v460 = vmul.f32 %v450, 0.044715
      %v461 = vadd.f32 %v421, %v451
      %v462 = vadd.f32 %v422, %v452
      %v463 = vadd.f32 %v423, %v453
      %v464 = vadd.f32 %v424, %v454
      %v465 = vadd.f32 %v425, %v455
      %v466 = vadd.f32 %v426, %v456
      %v467 = vadd.f32 %v427, %v457
      %v468 = vadd.f32 %v428, %v458
      %v469 = vadd.f32 %v429, %v459
      %v470 = vadd.f32 %v430, %v460
      %v471 = vmul.f32 %v461, 0.7978846
      %v472 = vmul.f32 %v462, 0.7978846
      %v473 = vmul.f32 %v463, 0.7978846
      %v474 = vmul.f32 %v464, 0.7978846
      %v475 = vmul.f32 %v465, 0.7978846
      %v476 = vmul.f32 %v466, 0.7978846
      %v477 = vmul.f32 %v467, 0.7978846
      %v478 = vmul.f32 %v468, 0.7978846
      %v479 = vmul.f32 %v469, 0.7978846
      %v480 = vmul.f32 %v470, 0.7978846
      %v481 = vtanh.pop %v471
      %v482 = vtanh.pop %v472
      %v483 = vtanh.pop %v473
      %v484 = vtanh.pop %v474
      %v485 = vtanh.pop %v475
      %v486 = vtanh.pop %v476
      %v487 = vtanh.pop %v477
      %v488 = vtanh.pop %v478
      %v489 = vtanh.pop %v479
      %v490 = vtanh.pop %v480
      %v491 = vadd.f32 %v481, 1.0
      %v492 = vadd.f32 %v482, 1.0
      %v493 = vadd.f32 %v483, 1.0
      %v494 = vadd.f32 %v484, 1.0
      %v495 = vadd.f32 %v485, 1.0
      %v496 = vadd.f32 %v486, 1.0
      %v497 = vadd.f32 %v487, 1.0
      %v498 = vadd.f32 %v488, 1.0
      %v499 = vadd.f32 %v489, 1.0
      %v500 = vadd.f32 %v490, 1.0
      %v501 = vmul.f32 %v491, 0.5
      %v502 = vmul.f32 %v492, 0.5
      %v503 = vmul.f32 %v493, 0.5
      %v504 = vmul.f32 %v494, 0.5
      %v505 = vmul.f32 %v495, 0.5
      %v506 = vmul.f32 %v496, 0.5
      %v507 = vmul.f32 %v497, 0.5
      %v508 = vmul.f32 %v498, 0.5
      %v509 = vmul.f32 %v499, 0.5
      %v510 = vmul.f32 %v500, 0.5
      %v511 = vmul.f32 %v421, %v501
      %v512 = vmul.f32 %v422, %v502
      %v513 = vmul.f32 %v423, %v503
      %v514 = vmul.f32 %v424, %v504
      %v515 = vmul.f32 %v425, %v505
      %v516 = vmul.f32 %v426, %v506
      %v517 = vmul.f32 %v427, %v507
      %v518 = vmul.f32 %v428, %v508
      %v519 = vmul.f32 %v429, %v509
      %v520 = vmul.f32 %v430, %v510
      %521 = vst.msk [vmem:[%s197] sm:$0xff] %vm310, %v511
      %522 = vst.msk [vmem:[%s197 + $0x8] sm:$0xff] %vm310, %v512
      %523 = vst.msk [vmem:[%s197 + $0x10] sm:$0xff] %vm310, %v513
      %524 = vst.msk [vmem:[%s197 + $0x18] sm:$0xff] %vm310, %v514
      %525 = vst.msk [vmem:[%s197 + $0x20] sm:$0xff] %vm310, %v515
      %526 = vst.msk [vmem:[%s197 + $0x28] sm:$0xff] %vm310, %v516
      %527 = vst.msk [vmem:[%s197 + $0x30] sm:$0xff] %vm310, %v517
      %528 = vst.msk [vmem:[%s197 + $0x38] sm:$0xff] %vm310, %v518
      %529 = vst.msk [vmem:[%s197 + $0x40] sm:$0xff] %vm310, %v519
      %530 = vst.msk [vmem:[%s197 + $0x48] sm:$0x7f] %vm328, %v520
      %p531 = scmp.lt.s32.totalorder %s15, 1
      %s532 = scalar_select %p531, %s15, 1
      %s533 = smul.addr %s532, 10
      %s534 = smul.addr %s533, 8
      %s535 = scalar_lea.vmem %s4, %s534
      // Predicated region
      $region37: #{wav2vec2_ctc_logits.6} parent=35 // pred_check
        %p536 = pneg %p122
      $region38: #{wav2vec2_ctc_logits.6} parent=35 // pred_check_branch
        %538 = sbr.rel (%p536) target = $region40
      $region39: #{wav2vec2_ctc_logits.6} parent=35 // pred_region
        _
      $region40: #{wav2vec2_ctc_logits.6} parent=35 // pred_fallthru
        _
    $region36: #{wav2vec2_ctc_logits.6} parent=5 // pred_fallthru
      _
    %p539 = scmp.le.s32.totalorder 2, %s10
    // Predicated region
    $region41: #{wav2vec2_ctc_logits.6} parent=5 // pred_check
      %p540 = pneg %p539
    $region42: #{wav2vec2_ctc_logits.6} parent=5 // pred_check_branch
      %542 = sbr.rel (%p540) target = $region44
    $region43: #{wav2vec2_ctc_logits.6} parent=5 // pred_region
      %s543 = ssub.s32 %s10, 2
      // Predicated region
      $region45: #{wav2vec2_ctc_logits.6} parent=43 // pred_check
        %p544 = pneg %p128
      $region46: #{wav2vec2_ctc_logits.6} parent=43 // pred_check_branch
        %546 = sbr.rel (%p544) target = $region48
      $region47: #{wav2vec2_ctc_logits.6} parent=43 // pred_region
        %p547 = scmp.lt.s32.totalorder %s16, 1
        %s548 = scalar_select %p547, %s16, 1
        %s549 = smul.addr %s548, 10
        %s550 = smul.addr %s549, 8
        %s551 = scalar_lea.vmem %s4, %s550
      $region48: #{wav2vec2_ctc_logits.6} parent=43 // pred_fallthru
        _
    $region44: #{wav2vec2_ctc_logits.6} parent=5 // pred_fallthru
      _
  $region6: #{wav2vec2_ctc_logits.6} parent=0 // loop_footer
    %s14 = sadd.s32 1, %s10
  $region7: #{wav2vec2_ctc_logits.6} parent=0 // loop_footer_branch
    %9 = sbr.rel target = $region3
  $region8: #{wav2vec2_ctc_logits.6} parent=0 // loop_exit
    _

// kernel: wav2vec2_ctc_logits.7
$region0: #{wav2vec2_ctc_logits.7}
  #allocation0 [shape = 'u32[]', space=smem, size = 0x4, offset = 0x4, fixed_abs, tag = 'smem constant byte address 0x4 - core index']
  #allocation1 [shape = 'u32[144,128]{1,0:T(1,128)}', space=vmem, size = 0x12000, scoped, tag = 'internal scratch']
  %s0 = inlined_call_operand.vmem [shape: f32[2,39,96], index: 0, kind: input, shape index: {}]
  %s1 = inlined_call_operand.vmem [shape: f32[96,32], index: 1, kind: input, shape index: {}]
  %s2 = inlined_call_operand.vmem [shape: f32[1,32], index: 2, kind: input, shape index: {}]
  %s3 = inlined_call_operand.vmem [shape: f32[1,32], index: 3, kind: input, shape index: {}]
  %s4 = inlined_call_operand.vmem [shape: f32[32,32], index: 4, kind: input, shape index: {}]
  %s5 = inlined_call_operand.vmem [shape: f32[1,32], index: 5, kind: input, shape index: {}]
  %s6 = inlined_call_operand.vmem [shape: f32[2,39,32], index: 6, kind: output, shape index: {}]
  %s7 = sld [smem:[#allocation0]]
  $region57: #{wav2vec2_ctc_logits.7} parent=0
    _
  %s9 = ssub.s32 1, %s7
  %s10 = scalar_select 0, %s9, %s7
  loop: start=0, step=1, limit=4
  $region2: #{wav2vec2_ctc_logits.7} parent=0 // loop_pre_header
    _
  $region3: #{wav2vec2_ctc_logits.7} parent=0 // loop_header
    %s12 = sphi 0, %s16
    %p13 = scmp.ge.s32.totalorder %s12, 4
    %s22 = sphi 0, %s24
    %s25 = sphi 0, %s22
    %s26 = sphi 0, %s25
    %s42 = sphi 0, %s26
    %s46 = sphi 0, %s46
    %s48 = sphi 0, %s46
    %s49 = sphi 0, %s48
    %s63 = sphi 0, %s49
    %s67 = sphi 0, %s67
    %s69 = sphi 0, %s67
    %s70 = sphi 0, %s69
    %s84 = sphi 0, %s70
    %s88 = sphi 0, %s88
    %s90 = sphi 0, %s88
    %s91 = sphi 0, %s90
    %s105 = sphi 0, %s91
    %s109 = sphi 0, %s109
    %s111 = sphi 0, %s109
    %s112 = sphi 0, %s111
    %s126 = sphi 0, %s112
    %s130 = sphi 0, %s130
    %s132 = sphi 0, %s130
    %s133 = sphi 0, %s132
    %s147 = sphi 0, %s133
    %s153 = sphi 0, %s155
    %s156 = sphi 0, %s153
    %s157 = sphi 0, %s156
    %s173 = sphi 0, %s157
  $region4: #{wav2vec2_ctc_logits.7} parent=0 // loop_header_branch
    %15 = sbr.rel (%p13) target = $region8
  $region5: #{wav2vec2_ctc_logits.7} parent=0 // loop_body
    %s17 = ssub.s32 %s12, 1
    %s18 = ssub.s32 %s12, 2
    %s19 = sadd.s32 %s12, 1
    %s20 = ssub.s32 %s12, %s19
    %p21 = scmp.eq.s32.totalorder %s20, 0
    %s23 = sadd.s32 %s22, 1
    %s24 = scalar_select %p21, %s22, %s23
    %p27 = pneg %p21
    %p28 = scmp.eq.s32.totalorder %s12, 1
    %p29 = por %p27, %p28
    %p30 = scmp.ne.s32.totalorder %s22, %s25
    %p31 = scmp.eq.s32.totalorder %s12, 0
    %p32 = por %p30, %p31
    %p33 = scmp.ne.s32.totalorder %s22, %s25
    %p34 = scmp.eq.s32.totalorder %s17, 1
    %p35 = por %p33, %p34
    %p36 = scmp.ne.s32.totalorder %s25, %s26
    %p37 = scmp.eq.s32.totalorder %s17, 0
    %p38 = por %p36, %p37
    %p39 = scmp.ne.s32.totalorder %s25, %s26
    %p40 = scmp.eq.s32.totalorder %s18, 1
    %p41 = por %p39, %p40
    %p43 = scmp.ne.s32.totalorder %s26, %s42
    %p44 = scmp.eq.s32.totalorder %s18, 0
    %p45 = por %p43, %p44
    %s47 = sadd.s32 %s46, 1
    %p50 = scmp.eq.s32.totalorder %s12, 1
    %p51 = scmp.ne.s32.totalorder %s46, %s48
    %p52 = scmp.eq.s32.totalorder %s12, 0
    %p53 = por %p51, %p52
    %p54 = scmp.ne.s32.totalorder %s46, %s48
    %p55 = scmp.eq.s32.totalorder %s17, 1
    %p56 = por %p54, %p55
    %p57 = scmp.ne.s32.totalorder %s48, %s49
    %p58 = scmp.eq.s32.totalorder %s17, 0
    %p59 = por %p57, %p58
    %p60 = scmp.ne.s32.totalorder %s48, %s49
    %p61 = scmp.eq.s32.totalorder %s18, 1
    %p62 = por %p60, %p61
    %p64 = scmp.ne.s32.totalorder %s49, %s63
    %p65 = scmp.eq.s32.totalorder %s18, 0
    %p66 = por %p64, %p65
    %s68 = sadd.s32 %s67, 1
    %p71 = scmp.eq.s32.totalorder %s12, 1
    %p72 = scmp.ne.s32.totalorder %s67, %s69
    %p73 = scmp.eq.s32.totalorder %s12, 0
    %p74 = por %p72, %p73
    %p75 = scmp.ne.s32.totalorder %s67, %s69
    %p76 = scmp.eq.s32.totalorder %s17, 1
    %p77 = por %p75, %p76
    %p78 = scmp.ne.s32.totalorder %s69, %s70
    %p79 = scmp.eq.s32.totalorder %s17, 0
    %p80 = por %p78, %p79
    %p81 = scmp.ne.s32.totalorder %s69, %s70
    %p82 = scmp.eq.s32.totalorder %s18, 1
    %p83 = por %p81, %p82
    %p85 = scmp.ne.s32.totalorder %s70, %s84
    %p86 = scmp.eq.s32.totalorder %s18, 0
    %p87 = por %p85, %p86
    %s89 = sadd.s32 %s88, 1
    %p92 = scmp.eq.s32.totalorder %s12, 1
    %p93 = scmp.ne.s32.totalorder %s88, %s90
    %p94 = scmp.eq.s32.totalorder %s12, 0
    %p95 = por %p93, %p94
    %p96 = scmp.ne.s32.totalorder %s88, %s90
    %p97 = scmp.eq.s32.totalorder %s17, 1
    %p98 = por %p96, %p97
    %p99 = scmp.ne.s32.totalorder %s90, %s91
    %p100 = scmp.eq.s32.totalorder %s17, 0
    %p101 = por %p99, %p100
    %p102 = scmp.ne.s32.totalorder %s90, %s91
    %p103 = scmp.eq.s32.totalorder %s18, 1
    %p104 = por %p102, %p103
    %p106 = scmp.ne.s32.totalorder %s91, %s105
    %p107 = scmp.eq.s32.totalorder %s18, 0
    %p108 = por %p106, %p107
    %s110 = sadd.s32 %s109, 1
    %p113 = scmp.eq.s32.totalorder %s12, 1
    %p114 = scmp.ne.s32.totalorder %s109, %s111
    %p115 = scmp.eq.s32.totalorder %s12, 0
    %p116 = por %p114, %p115
    %p117 = scmp.ne.s32.totalorder %s109, %s111
    %p118 = scmp.eq.s32.totalorder %s17, 1
    %p119 = por %p117, %p118
    %p120 = scmp.ne.s32.totalorder %s111, %s112
    %p121 = scmp.eq.s32.totalorder %s17, 0
    %p122 = por %p120, %p121
    %p123 = scmp.ne.s32.totalorder %s111, %s112
    %p124 = scmp.eq.s32.totalorder %s18, 1
    %p125 = por %p123, %p124
    %p127 = scmp.ne.s32.totalorder %s112, %s126
    %p128 = scmp.eq.s32.totalorder %s18, 0
    %p129 = por %p127, %p128
    %s131 = sadd.s32 %s130, 1
    %p134 = scmp.eq.s32.totalorder %s12, 1
    %p135 = scmp.ne.s32.totalorder %s130, %s132
    %p136 = scmp.eq.s32.totalorder %s12, 0
    %p137 = por %p135, %p136
    %p138 = scmp.ne.s32.totalorder %s130, %s132
    %p139 = scmp.eq.s32.totalorder %s17, 1
    %p140 = por %p138, %p139
    %p141 = scmp.ne.s32.totalorder %s132, %s133
    %p142 = scmp.eq.s32.totalorder %s17, 0
    %p143 = por %p141, %p142
    %p144 = scmp.ne.s32.totalorder %s132, %s133
    %p145 = scmp.eq.s32.totalorder %s18, 1
    %p146 = por %p144, %p145
    %p148 = scmp.ne.s32.totalorder %s133, %s147
    %p149 = scmp.eq.s32.totalorder %s18, 0
    %p150 = por %p148, %p149
    %s151 = ssub.s32 %s12, %s19
    %p152 = scmp.eq.s32.totalorder %s151, 0
    %s154 = sadd.s32 %s153, 1
    %s155 = scalar_select %p152, %s153, %s154
    %p158 = pneg %p152
    %p159 = scmp.eq.s32.totalorder %s12, 1
    %p160 = por %p158, %p159
    %p161 = scmp.ne.s32.totalorder %s153, %s156
    %p162 = scmp.eq.s32.totalorder %s12, 0
    %p163 = por %p161, %p162
    %p164 = scmp.ne.s32.totalorder %s153, %s156
    %p165 = scmp.eq.s32.totalorder %s17, 1
    %p166 = por %p164, %p165
    %p167 = scmp.ne.s32.totalorder %s156, %s157
    %p168 = scmp.eq.s32.totalorder %s17, 0
    %p169 = por %p167, %p168
    %p170 = scmp.ne.s32.totalorder %s156, %s157
    %p171 = scmp.eq.s32.totalorder %s18, 1
    %p172 = por %p170, %p171
    %p174 = scmp.ne.s32.totalorder %s157, %s173
    %p175 = scmp.eq.s32.totalorder %s18, 0
    %p176 = por %p174, %p175
    %p177 = scmp.le.s32.totalorder 1, %s12
    %p178 = scmp.lt.s32.totalorder %s12, 3
    %p179 = pnand %p177, %p178
    %p180 = pneg %p179
    // Predicated region
    $region9: #{wav2vec2_ctc_logits.7} parent=5 // pred_check
      _
    $region10: #{wav2vec2_ctc_logits.7} parent=5 // pred_check_branch
      %182 = sbr.rel (%p179) target = $region12
    $region11: #{wav2vec2_ctc_logits.7} parent=5 // pred_region
      %s183 = ssub.s32 %s12, 1
      // Predicated region
      $region13: #{wav2vec2_ctc_logits.7} parent=11 // pred_check
        %p184 = pneg %p59
      $region14: #{wav2vec2_ctc_logits.7} parent=11 // pred_check_branch
        %186 = sbr.rel (%p184) target = $region16
      $region15: #{wav2vec2_ctc_logits.7} parent=11 // pred_region
        _
      $region16: #{wav2vec2_ctc_logits.7} parent=11 // pred_fallthru
        _
      // Predicated region
      $region17: #{wav2vec2_ctc_logits.7} parent=11 // pred_check
        %p187 = pneg %p80
      $region18: #{wav2vec2_ctc_logits.7} parent=11 // pred_check_branch
        %189 = sbr.rel (%p187) target = $region20
      $region19: #{wav2vec2_ctc_logits.7} parent=11 // pred_region
        _
      $region20: #{wav2vec2_ctc_logits.7} parent=11 // pred_fallthru
        _
      // Predicated region
      $region21: #{wav2vec2_ctc_logits.7} parent=11 // pred_check
        %p190 = pneg %p101
      $region22: #{wav2vec2_ctc_logits.7} parent=11 // pred_check_branch
        %192 = sbr.rel (%p190) target = $region24
      $region23: #{wav2vec2_ctc_logits.7} parent=11 // pred_region
        _
      $region24: #{wav2vec2_ctc_logits.7} parent=11 // pred_fallthru
        _
      // Predicated region
      $region25: #{wav2vec2_ctc_logits.7} parent=11 // pred_check
        %p193 = pneg %p122
      $region26: #{wav2vec2_ctc_logits.7} parent=11 // pred_check_branch
        %195 = sbr.rel (%p193) target = $region28
      $region27: #{wav2vec2_ctc_logits.7} parent=11 // pred_region
        _
      $region28: #{wav2vec2_ctc_logits.7} parent=11 // pred_fallthru
        _
      // Predicated region
      $region29: #{wav2vec2_ctc_logits.7} parent=11 // pred_check
        %p196 = pneg %p143
      $region30: #{wav2vec2_ctc_logits.7} parent=11 // pred_check_branch
        %198 = sbr.rel (%p196) target = $region32
      $region31: #{wav2vec2_ctc_logits.7} parent=11 // pred_region
        _
      $region32: #{wav2vec2_ctc_logits.7} parent=11 // pred_fallthru
        _
    $region12: #{wav2vec2_ctc_logits.7} parent=5 // pred_fallthru
      _
    %p199 = scmp.lt.s32.totalorder %s12, 2
    // Predicated region
    $region33: #{wav2vec2_ctc_logits.7} parent=5 // pred_check
      %p200 = pneg %p199
    $region34: #{wav2vec2_ctc_logits.7} parent=5 // pred_check_branch
      %202 = sbr.rel (%p200) target = $region36
    $region35: #{wav2vec2_ctc_logits.7} parent=5 // pred_region
      // Predicated region
      $region37: #{wav2vec2_ctc_logits.7} parent=35 // pred_check
        %p203 = pneg %p32
      $region38: #{wav2vec2_ctc_logits.7} parent=35 // pred_check_branch
        %205 = sbr.rel (%p203) target = $region40
      $region39: #{wav2vec2_ctc_logits.7} parent=35 // pred_region
        %p206 = scmp.lt.s32.totalorder %s12, 1
        %s207 = scalar_select %p206, %s12, 1
        %s208 = smul.addr %s207, 5
        %s209 = smul.addr %s208, 8
        %s210 = scalar_lea.vmem %s0, %s209
      $region40: #{wav2vec2_ctc_logits.7} parent=35 // pred_fallthru
        _
    $region36: #{wav2vec2_ctc_logits.7} parent=5 // pred_fallthru
      _
    %p211 = scmp.le.s32.totalorder 1, %s12
    %p212 = scmp.lt.s32.totalorder %s12, 3
    %p213 = pnand %p211, %p212
    %p214 = pneg %p213
    // Predicated region
    $region41: #{wav2vec2_ctc_logits.7} parent=5 // pred_check
      _
    $region42: #{wav2vec2_ctc_logits.7} parent=5 // pred_check_branch
      %216 = sbr.rel (%p213) target = $region44
    $region43: #{wav2vec2_ctc_logits.7} parent=5 // pred_region
      %s217 = ssub.s32 %s12, 1
      %p218 = scmp.lt.s32.totalorder %s17, 1
      %s219 = scalar_select %p218, %s17, 1
      %s220 = smul.addr %s219, 5
      %s221 = smul.addr %s220, 8
      %s222 = scalar_lea.vmem %s0, %s221
      %p223 = pneg %p38
      %p224 = pneg %p35
      %p225 = pneg %p59
      %p226 = pneg %p56
      %p227 = pneg %p80
      %p228 = pneg %p77
      %p229 = pneg %p101
      %p230 = pneg %p98
      %p231 = pneg %p122
      %p232 = pneg %p119
      %p233 = pneg %p143
      %p234 = pneg %p140
      %p235 = pneg %p169
      %p236 = pneg %p166
      %p237 = scmp.lt.s32.totalorder %s17, 1
      %s238 = scalar_select %p237, %s17, 1
      %s239 = smul.addr %s238, 5
      %s240 = smul.addr %s239, 8
      %s241 = scalar_lea.vmem %s6, %s240
      %p242 = scmp.lt.s32.totalorder %s17, 1
      %s243 = scalar_select %p242, %s17, 1
      %s244 = smul.addr %s243, 5
      %s245 = smul.addr %s244, 8
      %s246 = scalar_lea.vmem %s0, %s245
      %p247 = scmp.lt.s32.totalorder %s17, 1
      %s248 = scalar_select %p247, %s17, 1
      %s249 = smul.addr %s248, 5
      %s250 = smul.addr %s249, 8
      %s251 = scalar_lea.vmem %s6, %s250
      %v253 = vld [vmem:[%s246] sm:$0xff]
      %v254 = vld [vmem:[%s246 + $0x8] sm:$0xff]
      %v255 = vld [vmem:[%s246 + $0x10] sm:$0xff]
      %v256 = vld [vmem:[%s246 + $0x18] sm:$0xff]
      %v257 = vld [vmem:[%s246 + $0x20] sm:$0x7f]
      %v258 = vld [vmem:[%s1] sm:$0xff]
      %v259 = vld [vmem:[%s1 + $0x8] sm:$0xff]
      %v260 = vld [vmem:[%s1 + $0x10] sm:$0xff]
      %v261 = vld [vmem:[%s1 + $0x18] sm:$0xff]
      %v262 = vld [vmem:[%s1 + $0x20] sm:$0xff]
      %v263 = vld [vmem:[%s1 + $0x28] sm:$0xff]
      %v264 = vld [vmem:[%s1 + $0x30] sm:$0xff]
      %v265 = vld [vmem:[%s1 + $0x38] sm:$0xff]
      %v266 = vld [vmem:[%s1 + $0x40] sm:$0xff]
      %v267 = vld [vmem:[%s1 + $0x48] sm:$0xff]
      %v268 = vld [vmem:[%s1 + $0x50] sm:$0xff]
      %v269 = vld [vmem:[%s1 + $0x58] sm:$0xff]
      %v270 = vpack.c.bf16 %v254, %v253
      %v271 = vpack.c.bf16 %v256, %v255
      %v272 = vpack.c.bf16 %v257, %v257
      %v273 = vpack.c.bf16 %v259, %v258
      %v274 = vpack.c.bf16 %v261, %v260
      %v275 = vpack.c.bf16 %v263, %v262
      %v276 = vpack.c.bf16 %v265, %v264
      %v277 = vpack.c.bf16 %v267, %v266
      %v278 = vpack.c.bf16 %v269, %v268
      %vm279 = vcmask 785408
      %v281 = vsel %vm279, %v270, 0
      %v284 = vsel %vm279, %v271, 0
      %v287 = vsel %vm279, %v272, 0
      %289 = vmatprep.subr.bf16.mxu0 0
      %290 = vmatpush1.bf16.msra.mxu0 %v273
      %291 = vmatprep.subr.bf16.mxu0 0
      %292 = vmatpush1.bf16.msra.mxu0 %v274
      %293 = vmatprep.subr.bf16.mxu0 0
      %294 = vmatpush1.bf16.msra.mxu0 %v275
      %295 = vmatprep.subr.bf16.mxu0 0
      %296 = vmatpush1.bf16.msra.mxu0 %v276
      %297 = vmatprep.subr.bf16.mxu0 0
      %298 = vmatpush1.bf16.msra.mxu0 %v277
      %299 = vmatprep.subr.bf16.mxu0 0
      %300 = vmatpush1.bf16.msra.mxu0 %v278
      %301 = vmatprep.subr.bf16.mxu0 0
      %302 = vmatpush1.bf16.msra.mxu0 0
      %303 = vmatprep.subr.bf16.mxu0 0
      %304 = vmatpush1.bf16.msra.mxu0 0
      %305 = vmatprep.subr.bf16.mxu0 0
      %306 = vmatpush1.bf16.msra.mxu0 0
      %307 = vmatprep.subr.bf16.mxu0 0
      %308 = vmatpush1.bf16.msra.mxu0 0
      %309 = vmatprep.subr.bf16.mxu0 0
      %310 = vmatpush1.bf16.msra.mxu0 0
      %311 = vmatprep.subr.bf16.mxu0 0
      %312 = vmatpush1.bf16.msra.mxu0 0
      %313 = vmatprep.subr.bf16.mxu0 0
      %314 = vmatpush1.bf16.msra.mxu0 0
      %315 = vmatprep.subr.bf16.mxu0 0
      %316 = vmatpush1.bf16.msra.mxu0 0
      %317 = vmatprep.subr.bf16.mxu0 0
      %318 = vmatpush1.bf16.msra.mxu0 0
      %319 = vmatprep.subr.bf16.mxu0 0
      %320 = vmatpush1.bf16.msra.mxu0 0
      %321 = vmatprep.mubr.bf16.mxu0 0
      %322 = vmatmul.mubr.bf16.gmra.mrb[0].mxu0 %v281
      %v323 = vpop.f32.mrb[0].mxu0
      %v324 = vadd.f32 0.0, %v323
      %v325 = vpop.f32.mrb[0].mxu0
      %v326 = vpop.f32.mrb[0].mxu0
      %v327 = vadd.f32 0.0, %v326
      %v328 = vpop.f32.mrb[0].mxu0
      %329 = vmatprep.mubr.bf16.mxu0 0
      %330 = vmatmul.mubr.bf16.gmra.mrb[0].mxu0 %v284
      %v331 = vpop.f32.mrb[0].mxu0
      %v332 = vadd.f32 0.0, %v331
      %v333 = vpop.f32.mrb[0].mxu0
      %v334 = vpop.f32.mrb[0].mxu0
      %v335 = vadd.f32 0.0, %v334
      %v336 = vpop.f32.mrb[0].mxu0
      %337 = vmatprep.mubr.bf16.mxu0 0
      %338 = vmatmul.mubr.bf16.gmra.mrb[0].mxu0 %v287
      %v339 = vpop.f32.mrb[0].mxu0
      %v340 = vadd.f32 0.0, %v339
      %v341 = vpop.f32.mrb[0].mxu0
      %v342 = vpop.f32.mrb[0].mxu0
      %v343 = vpop.f32.mrb[0].mxu0
      %344 = vdwg.mxu0
      %v345 = vmul.f32 %v324, %v324
      %v346 = vmul.f32 %v327, %v327
      %v347 = vmul.f32 %v332, %v332
      %v348 = vmul.f32 %v335, %v335
      %v349 = vmul.f32 %v340, %v340
      %v350 = vmul.f32 %v324, %v345
      %v351 = vmul.f32 %v327, %v346
      %v352 = vmul.f32 %v332, %v347
      %v353 = vmul.f32 %v335, %v348
      %v354 = vmul.f32 %v340, %v349
      %v355 = vmul.f32 %v350, 0.044715
      %v356 = vmul.f32 %v351, 0.044715
      %v357 = vmul.f32 %v352, 0.044715
      %v358 = vmul.f32 %v353, 0.044715
      %v359 = vmul.f32 %v354, 0.044715
      %v360 = vadd.f32 %v324, %v355
      %v361 = vadd.f32 %v327, %v356
      %v362 = vadd.f32 %v332, %v357
      %v363 = vadd.f32 %v335, %v358
      %v364 = vadd.f32 %v340, %v359
      %v365 = vmul.f32 %v360, 0.7978846
      %v366 = vmul.f32 %v361, 0.7978846
      %v367 = vmul.f32 %v362, 0.7978846
      %v368 = vmul.f32 %v363, 0.7978846
      %v369 = vmul.f32 %v364, 0.7978846
      %v370 = vtanh.pop %v365
      %v371 = vtanh.pop %v366
      %v372 = vtanh.pop %v367
      %v373 = vtanh.pop %v368
      %v374 = vtanh.pop %v369
      %v375 = vadd.f32 %v370, 1.0
      %v376 = vadd.f32 %v371, 1.0
      %v377 = vadd.f32 %v372, 1.0
      %v378 = vadd.f32 %v373, 1.0
      %v379 = vadd.f32 %v374, 1.0
      %v380 = vmul.f32 %v375, 0.5
      %v381 = vmul.f32 %v376, 0.5
      %v382 = vmul.f32 %v377, 0.5
      %v383 = vmul.f32 %v378, 0.5
      %v384 = vmul.f32 %v379, 0.5
      %v385 = vmul.f32 %v324, %v380
      %v386 = vmul.f32 %v327, %v381
      %v387 = vmul.f32 %v332, %v382
      %v388 = vmul.f32 %v335, %v383
      %v389 = vmul.f32 %v340, %v384
      %v390 = vld [vmem:[%s2] sm:$0x1]
      %v391 = vld [vmem:[%s3] sm:$0x1]
      %vm392 = vcmask 261120
      %v393 = vsel %vm392, %v385, 0.0
      %394 = vadd.xlane.f32.xlu0 %v393
      %v395 = vpop.xlane.xlu0 %394
      %v396 = vsel %vm392, %v386, 0.0
      %397 = vadd.xlane.f32.xlu0 %v396
      %v398 = vpop.xlane.xlu0 %397
      %v399 = vsel %vm392, %v387, 0.0
      %400 = vadd.xlane.f32.xlu0 %v399
      %v401 = vpop.xlane.xlu0 %400
      %v402 = vsel %vm392, %v388, 0.0
      %403 = vadd.xlane.f32.xlu0 %v402
      %v404 = vpop.xlane.xlu0 %403
      %vm405 = vcmask 260096
      %v406 = vsel %vm405, %v389, 0.0
      %407 = vadd.xlane.f32.xlu0 %v406
      %v408 = vpop.xlane.xlu0 %407
      %v409 = vrcp.pop 32.0
      %v410 = vmul.f32 %v395, %v409
      %v411 = vmul.f32 %v398, %v409
      %v412 = vmul.f32 %v401, %v409
      %v413 = vmul.f32 %v404, %v409
      %v414 = vmul.f32 %v408, %v409
      %v415 = vsub.f32 %v385, %v410
      %v416 = vsub.f32 %v386, %v411
      %v417 = vsub.f32 %v387, %v412
      %v418 = vsub.f32 %v388, %v413
      %v419 = vsub.f32 %v389, %v414
      %v420 = vmul.f32 %v415, %v415
      %v421 = vmul.f32 %v416, %v416
      %v422 = vmul.f32 %v417, %v417
      %v423 = vmul.f32 %v418, %v418
      %v424 = vmul.f32 %v419, %v419
      %v425 = vsel %vm392, %v420, 0.0
      %426 = vadd.xlane.f32.xlu0 %v425
      %v427 = vpop.xlane.xlu0 %426
      %v428 = vsel %vm392, %v421, 0.0
      %429 = vadd.xlane.f32.xlu0 %v428
      %v430 = vpop.xlane.xlu0 %429
      %v431 = vsel %vm392, %v422, 0.0
      %432 = vadd.xlane.f32.xlu0 %v431
      %v433 = vpop.xlane.xlu0 %432
      %v434 = vsel %vm392, %v423, 0.0
      %435 = vadd.xlane.f32.xlu0 %v434
      %v436 = vpop.xlane.xlu0 %435
      %v437 = vsel %vm405, %v424, 0.0
      %438 = vadd.xlane.f32.xlu0 %v437
      %v439 = vpop.xlane.xlu0 %438
      %v440 = vmul.f32 %v427, %v409
      %v441 = vmul.f32 %v430, %v409
      %v442 = vmul.f32 %v433, %v409
      %v443 = vmul.f32 %v436, %v409
      %v444 = vmul.f32 %v439, %v409
      %v445 = vadd.f32 %v440, 1e-05
      %v446 = vadd.f32 %v441, 1e-05
      %v447 = vadd.f32 %v442, 1e-05
      %v448 = vadd.f32 %v443, 1e-05
      %v449 = vadd.f32 %v444, 1e-05
      %v450 = vrsqrt.pop %v445
      %v451 = vrsqrt.pop %v446
      %v452 = vrsqrt.pop %v447
      %v453 = vrsqrt.pop %v448
      %v454 = vrsqrt.pop %v449
      %v455 = vmul.f32 %v415, %v450
      %v456 = vmul.f32 %v416, %v451
      %v457 = vmul.f32 %v417, %v452
      %v458 = vmul.f32 %v418, %v453
      %v459 = vmul.f32 %v419, %v454
      %v461 = vlaneseq
      %v462 = vshrl.u32 %v461, 7
      %v463 = vsub.s32 0, %v462
      %v464 = vrot.slane %v390, %v463
      %v466 = vmul.f32 %v455, %v464
      %v467 = vmul.f32 %v456, %v464
      %v468 = vmul.f32 %v457, %v464
      %v469 = vmul.f32 %v458, %v464
      %v470 = vmul.f32 %v459, %v464
      %v472 = vlaneseq
      %v473 = vshrl.u32 %v472, 7
      %v474 = vsub.s32 0, %v473
      %v475 = vrot.slane %v391, %v474
      %v477 = vadd.f32 %v466, %v475
      %v478 = vadd.f32 %v467, %v475
      %v479 = vadd.f32 %v468, %v475
      %v480 = vadd.f32 %v469, %v475
      %v481 = vadd.f32 %v470, %v475
      %v482 = vld [vmem:[%s4] sm:$0xff]
      %v483 = vld [vmem:[%s4 + $0x8] sm:$0xff]
      %v484 = vld [vmem:[%s4 + $0x10] sm:$0xff]
      %v485 = vld [vmem:[%s4 + $0x18] sm:$0xff]
      %v486 = vpack.c.bf16 %v478, %v477
      %v487 = vpack.c.bf16 %v480, %v479
      %v488 = vpack.c.bf16 %v481, %v481
      %v489 = vpack.c.bf16 %v483, %v482
      %v490 = vpack.c.bf16 %v485, %v484
      %v491 = vld [vmem:[%s5] sm:$0x1]
      %v493 = vlaneseq
      %v494 = vshrl.u32 %v493, 7
      %v495 = vsub.s32 0, %v494
      %v496 = vrot.slane %v491, %v495
      %v499 = vsel %vm392, %v486, 0
      %v502 = vsel %vm392, %v487, 0
      %v505 = vsel %vm392, %v488, 0
      %507 = vmatprep.subr.bf16.mxu0 0
      %508 = vmatpush1.bf16.msra.mxu0 %v489
      %509 = vmatprep.subr.bf16.mxu0 0
      %510 = vmatpush1.bf16.msra.mxu0 %v490
      %511 = vmatprep.subr.bf16.mxu0 0
      %512 = vmatpush1.bf16.msra.mxu0 0
      %513 = vmatprep.subr.bf16.mxu0 0
      %514 = vmatpush1.bf16.msra.mxu0 0
      %515 = vmatprep.subr.bf16.mxu0 0
      %516 = vmatpush1.bf16.msra.mxu0 0
      %517 = vmatprep.subr.bf16.mxu0 0
      %518 = vmatpush1.bf16.msra.mxu0 0
      %519 = vmatprep.subr.bf16.mxu0 0
      %520 = vmatpush1.bf16.msra.mxu0 0
      %521 = vmatprep.subr.bf16.mxu0 0
      %522 = vmatpush1.bf16.msra.mxu0 0
      %523 = vmatprep.subr.bf16.mxu0 0
      %524 = vmatpush1.bf16.msra.mxu0 0
      %525 = vmatprep.subr.bf16.mxu0 0
      %526 = vmatpush1.bf16.msra.mxu0 0
      %527 = vmatprep.subr.bf16.mxu0 0
      %528 = vmatpush1.bf16.msra.mxu0 0
      %529 = vmatprep.subr.bf16.mxu0 0
      %530 = vmatpush1.bf16.msra.mxu0 0
      %531 = vmatprep.subr.bf16.mxu0 0
      %532 = vmatpush1.bf16.msra.mxu0 0
      %533 = vmatprep.subr.bf16.mxu0 0
      %534 = vmatpush1.bf16.msra.mxu0 0
      %535 = vmatprep.subr.bf16.mxu0 0
      %536 = vmatpush1.bf16.msra.mxu0 0
      %537 = vmatprep.subr.bf16.mxu0 0
      %538 = vmatpush1.bf16.msra.mxu0 0
      %539 = vmatprep.mubr.bf16.mxu0 0
      %540 = vmatmul.mubr.bf16.gmra.mrb[0].mxu0 %v499
      %v541 = vpop.f32.mrb[0].mxu0
      %v542 = vadd.f32 %v496, %v541
      %v543 = vpop.f32.mrb[0].mxu0
      %v544 = vpop.f32.mrb[0].mxu0
      %v545 = vadd.f32 %v496, %v544
      %v546 = vpop.f32.mrb[0].mxu0
      %547 = vmatprep.mubr.bf16.mxu0 0
      %548 = vmatmul.mubr.bf16.gmra.mrb[0].mxu0 %v502
      %v549 = vpop.f32.mrb[0].mxu0
      %v550 = vadd.f32 %v496, %v549
      %v551 = vpop.f32.mrb[0].mxu0
      %v552 = vpop.f32.mrb[0].mxu0
      %v553 = vadd.f32 %v496, %v552
      %v554 = vpop.f32.mrb[0].mxu0
      %555 = vmatprep.mubr.bf16.mxu0 0
      %556 = vmatmul.mubr.bf16.gmra.mrb[0].mxu0 %v505
      %v557 = vpop.f32.mrb[0].mxu0
      %v558 = vadd.f32 %v496, %v557
      %v559 = vpop.f32.mrb[0].mxu0
      %v560 = vpop.f32.mrb[0].mxu0
      %v561 = vpop.f32.mrb[0].mxu0
      %562 = vdwg.mxu0
      %563 = vst.msk [vmem:[%s251] sm:$0xff] %vm392, %v542
      %564 = vst.msk [vmem:[%s251 + $0x8] sm:$0xff] %vm392, %v545
      %565 = vst.msk [vmem:[%s251 + $0x10] sm:$0xff] %vm392, %v550
      %566 = vst.msk [vmem:[%s251 + $0x18] sm:$0xff] %vm392, %v553
      %567 = vst.msk [vmem:[%s251 + $0x20] sm:$0x7f] %vm405, %v558
      %p568 = scmp.lt.s32.totalorder %s17, 1
      %s569 = scalar_select %p568, %s17, 1
      %s570 = smul.addr %s569, 5
      %s571 = smul.addr %s570, 8
      %s572 = scalar_lea.vmem %s6, %s571
      // Predicated region
      $region45: #{wav2vec2_ctc_logits.7} parent=43 // pred_check
        %p573 = pneg %p166
      $region46: #{wav2vec2_ctc_logits.7} parent=43 // pred_check_branch
        %575 = sbr.rel (%p573) target = $region48
      $region47: #{wav2vec2_ctc_logits.7} parent=43 // pred_region
        _
      $region48: #{wav2vec2_ctc_logits.7} parent=43 // pred_fallthru
        _
    $region44: #{wav2vec2_ctc_logits.7} parent=5 // pred_fallthru
      _
    %p576 = scmp.le.s32.totalorder 2, %s12
    // Predicated region
    $region49: #{wav2vec2_ctc_logits.7} parent=5 // pred_check
      %p577 = pneg %p576
    $region50: #{wav2vec2_ctc_logits.7} parent=5 // pred_check_branch
      %579 = sbr.rel (%p577) target = $region52
    $region51: #{wav2vec2_ctc_logits.7} parent=5 // pred_region
      %s580 = ssub.s32 %s12, 2
      // Predicated region
      $region53: #{wav2vec2_ctc_logits.7} parent=51 // pred_check
        %p581 = pneg %p172
      $region54: #{wav2vec2_ctc_logits.7} parent=51 // pred_check_branch
        %583 = sbr.rel (%p581) target = $region56
      $region55: #{wav2vec2_ctc_logits.7} parent=51 // pred_region
        %p584 = scmp.lt.s32.totalorder %s18, 1
        %s585 = scalar_select %p584, %s18, 1
        %s586 = smul.addr %s585, 5
        %s587 = smul.addr %s586, 8
        %s588 = scalar_lea.vmem %s6, %s587
      $region56: #{wav2vec2_ctc_logits.7} parent=51 // pred_fallthru
        _
    $region52: #{wav2vec2_ctc_logits.7} parent=5 // pred_fallthru
      _
  $region6: #{wav2vec2_ctc_logits.7} parent=0 // loop_footer
    %s16 = sadd.s32 1, %s12
  $region7: #{wav2vec2_ctc_logits.7} parent=0 // loop_footer_branch
    %11 = sbr.rel target = $region3
  $region8: #{wav2vec2_ctc_logits.7} parent=0 // loop_exit
    _

// kernel: wav2vec2_ctc_logits.8
$region0: #{wav2vec2_ctc_logits.8}
  #allocation0 [shape = 'u32[]', space=smem, size = 0x4, offset = 0x4, fixed_abs, tag = 'smem constant byte address 0x4 - core index']
  #allocation1 [shape = 'u32[144,128]{1,0:T(1,128)}', space=vmem, size = 0x12000, scoped, tag = 'internal scratch']
  %s0 = inlined_call_operand.vmem [shape: f32[2,39,32], index: 0, kind: input, shape index: {}]
  %s1 = inlined_call_operand.vmem [shape: f32[2,39,96], index: 1, kind: input, shape index: {}]
  %s2 = inlined_call_operand.vmem [shape: f32[96,32], index: 2, kind: input, shape index: {}]
  %s3 = inlined_call_operand.vmem [shape: f32[1,32], index: 3, kind: input, shape index: {}]
  %s4 = inlined_call_operand.vmem [shape: f32[1,32], index: 4, kind: input, shape index: {}]
  %s5 = inlined_call_operand.vmem [shape: f32[1,32], index: 5, kind: input, shape index: {}]
  %s6 = inlined_call_operand.vmem [shape: f32[2,39,32], index: 6, kind: output, shape index: {}]
  %s7 = sld [smem:[#allocation0]]
  $region57: #{wav2vec2_ctc_logits.8} parent=0
    _
  %s9 = ssub.s32 1, %s7
  %s10 = scalar_select 0, %s9, %s7
  loop: start=0, step=1, limit=4
  $region2: #{wav2vec2_ctc_logits.8} parent=0 // loop_pre_header
    _
  $region3: #{wav2vec2_ctc_logits.8} parent=0 // loop_header
    %s12 = sphi 0, %s16
    %p13 = scmp.ge.s32.totalorder %s12, 4
    %s22 = sphi 0, %s24
    %s25 = sphi 0, %s22
    %s26 = sphi 0, %s25
    %s42 = sphi 0, %s26
    %s48 = sphi 0, %s50
    %s51 = sphi 0, %s48
    %s52 = sphi 0, %s51
    %s68 = sphi 0, %s52
    %s72 = sphi 0, %s72
    %s74 = sphi 0, %s72
    %s75 = sphi 0, %s74
    %s89 = sphi 0, %s75
    %s93 = sphi 0, %s93
    %s95 = sphi 0, %s93
    %s96 = sphi 0, %s95
    %s110 = sphi 0, %s96
    %s114 = sphi 0, %s114
    %s116 = sphi 0, %s114
    %s117 = sphi 0, %s116
    %s131 = sphi 0, %s117
    %s135 = sphi 0, %s135
    %s137 = sphi 0, %s135
    %s138 = sphi 0, %s137
    %s152 = sphi 0, %s138
    %s158 = sphi 0, %s160
    %s161 = sphi 0, %s158
    %s162 = sphi 0, %s161
    %s178 = sphi 0, %s162
  $region4: #{wav2vec2_ctc_logits.8} parent=0 // loop_header_branch
    %15 = sbr.rel (%p13) target = $region8
  $region5: #{wav2vec2_ctc_logits.8} parent=0 // loop_body
    %s17 = ssub.s32 %s12, 1
    %s18 = ssub.s32 %s12, 2
    %s19 = sadd.s32 %s12, 1
    %s20 = ssub.s32 %s12, %s19
    %p21 = scmp.eq.s32.totalorder %s20, 0
    %s23 = sadd.s32 %s22, 1
    %s24 = scalar_select %p21, %s22, %s23
    %p27 = pneg %p21
    %p28 = scmp.eq.s32.totalorder %s12, 1
    %p29 = por %p27, %p28
    %p30 = scmp.ne.s32.totalorder %s22, %s25
    %p31 = scmp.eq.s32.totalorder %s12, 0
    %p32 = por %p30, %p31
    %p33 = scmp.ne.s32.totalorder %s22, %s25
    %p34 = scmp.eq.s32.totalorder %s17, 1
    %p35 = por %p33, %p34
    %p36 = scmp.ne.s32.totalorder %s25, %s26
    %p37 = scmp.eq.s32.totalorder %s17, 0
    %p38 = por %p36, %p37
    %p39 = scmp.ne.s32.totalorder %s25, %s26
    %p40 = scmp.eq.s32.totalorder %s18, 1
    %p41 = por %p39, %p40
    %p43 = scmp.ne.s32.totalorder %s26, %s42
    %p44 = scmp.eq.s32.totalorder %s18, 0
    %p45 = por %p43, %p44
    %s46 = ssub.s32 %s12, %s19
    %p47 = scmp.eq.s32.totalorder %s46, 0
    %s49 = sadd.s32 %s48, 1
    %s50 = scalar_select %p47, %s48, %s49
    %p53 = pneg %p47
    %p54 = scmp.eq.s32.totalorder %s12, 1
    %p55 = por %p53, %p54
    %p56 = scmp.ne.s32.totalorder %s48, %s51
    %p57 = scmp.eq.s32.totalorder %s12, 0
    %p58 = por %p56, %p57
    %p59 = scmp.ne.s32.totalorder %s48, %s51
    %p60 = scmp.eq.s32.totalorder %s17, 1
    %p61 = por %p59, %p60
    %p62 = scmp.ne.s32.totalorder %s51, %s52
    %p63 = scmp.eq.s32.totalorder %s17, 0
    %p64 = por %p62, %p63
    %p65 = scmp.ne.s32.totalorder %s51, %s52
    %p66 = scmp.eq.s32.totalorder %s18, 1
    %p67 = por %p65, %p66
    %p69 = scmp.ne.s32.totalorder %s52, %s68
    %p70 = scmp.eq.s32.totalorder %s18, 0
    %p71 = por %p69, %p70
    %s73 = sadd.s32 %s72, 1
    %p76 = scmp.eq.s32.totalorder %s12, 1
    %p77 = scmp.ne.s32.totalorder %s72, %s74
    %p78 = scmp.eq.s32.totalorder %s12, 0
    %p79 = por %p77, %p78
    %p80 = scmp.ne.s32.totalorder %s72, %s74
    %p81 = scmp.eq.s32.totalorder %s17, 1
    %p82 = por %p80, %p81
    %p83 = scmp.ne.s32.totalorder %s74, %s75
    %p84 = scmp.eq.s32.totalorder %s17, 0
    %p85 = por %p83, %p84
    %p86 = scmp.ne.s32.totalorder %s74, %s75
    %p87 = scmp.eq.s32.totalorder %s18, 1
    %p88 = por %p86, %p87
    %p90 = scmp.ne.s32.totalorder %s75, %s89
    %p91 = scmp.eq.s32.totalorder %s18, 0
    %p92 = por %p90, %p91
    %s94 = sadd.s32 %s93, 1
    %p97 = scmp.eq.s32.totalorder %s12, 1
    %p98 = scmp.ne.s32.totalorder %s93, %s95
    %p99 = scmp.eq.s32.totalorder %s12, 0
    %p100 = por %p98, %p99
    %p101 = scmp.ne.s32.totalorder %s93, %s95
    %p102 = scmp.eq.s32.totalorder %s17, 1
    %p103 = por %p101, %p102
    %p104 = scmp.ne.s32.totalorder %s95, %s96
    %p105 = scmp.eq.s32.totalorder %s17, 0
    %p106 = por %p104, %p105
    %p107 = scmp.ne.s32.totalorder %s95, %s96
    %p108 = scmp.eq.s32.totalorder %s18, 1
    %p109 = por %p107, %p108
    %p111 = scmp.ne.s32.totalorder %s96, %s110
    %p112 = scmp.eq.s32.totalorder %s18, 0
    %p113 = por %p111, %p112
    %s115 = sadd.s32 %s114, 1
    %p118 = scmp.eq.s32.totalorder %s12, 1
    %p119 = scmp.ne.s32.totalorder %s114, %s116
    %p120 = scmp.eq.s32.totalorder %s12, 0
    %p121 = por %p119, %p120
    %p122 = scmp.ne.s32.totalorder %s114, %s116
    %p123 = scmp.eq.s32.totalorder %s17, 1
    %p124 = por %p122, %p123
    %p125 = scmp.ne.s32.totalorder %s116, %s117
    %p126 = scmp.eq.s32.totalorder %s17, 0
    %p127 = por %p125, %p126
    %p128 = scmp.ne.s32.totalorder %s116, %s117
    %p129 = scmp.eq.s32.totalorder %s18, 1
    %p130 = por %p128, %p129
    %p132 = scmp.ne.s32.totalorder %s117, %s131
    %p133 = scmp.eq.s32.totalorder %s18, 0
    %p134 = por %p132, %p133
    %s136 = sadd.s32 %s135, 1
    %p139 = scmp.eq.s32.totalorder %s12, 1
    %p140 = scmp.ne.s32.totalorder %s135, %s137
    %p141 = scmp.eq.s32.totalorder %s12, 0
    %p142 = por %p140, %p141
    %p143 = scmp.ne.s32.totalorder %s135, %s137
    %p144 = scmp.eq.s32.totalorder %s17, 1
    %p145 = por %p143, %p144
    %p146 = scmp.ne.s32.totalorder %s137, %s138
    %p147 = scmp.eq.s32.totalorder %s17, 0
    %p148 = por %p146, %p147
    %p149 = scmp.ne.s32.totalorder %s137, %s138
    %p150 = scmp.eq.s32.totalorder %s18, 1
    %p151 = por %p149, %p150
    %p153 = scmp.ne.s32.totalorder %s138, %s152
    %p154 = scmp.eq.s32.totalorder %s18, 0
    %p155 = por %p153, %p154
    %s156 = ssub.s32 %s12, %s19
    %p157 = scmp.eq.s32.totalorder %s156, 0
    %s159 = sadd.s32 %s158, 1
    %s160 = scalar_select %p157, %s158, %s159
    %p163 = pneg %p157
    %p164 = scmp.eq.s32.totalorder %s12, 1
    %p165 = por %p163, %p164
    %p166 = scmp.ne.s32.totalorder %s158, %s161
    %p167 = scmp.eq.s32.totalorder %s12, 0
    %p168 = por %p166, %p167
    %p169 = scmp.ne.s32.totalorder %s158, %s161
    %p170 = scmp.eq.s32.totalorder %s17, 1
    %p171 = por %p169, %p170
    %p172 = scmp.ne.s32.totalorder %s161, %s162
    %p173 = scmp.eq.s32.totalorder %s17, 0
    %p174 = por %p172, %p173
    %p175 = scmp.ne.s32.totalorder %s161, %s162
    %p176 = scmp.eq.s32.totalorder %s18, 1
    %p177 = por %p175, %p176
    %p179 = scmp.ne.s32.totalorder %s162, %s178
    %p180 = scmp.eq.s32.totalorder %s18, 0
    %p181 = por %p179, %p180
    %p182 = scmp.le.s32.totalorder 1, %s12
    %p183 = scmp.lt.s32.totalorder %s12, 3
    %p184 = pnand %p182, %p183
    %p185 = pneg %p184
    // Predicated region
    $region9: #{wav2vec2_ctc_logits.8} parent=5 // pred_check
      _
    $region10: #{wav2vec2_ctc_logits.8} parent=5 // pred_check_branch
      %187 = sbr.rel (%p184) target = $region12
    $region11: #{wav2vec2_ctc_logits.8} parent=5 // pred_region
      %s188 = ssub.s32 %s12, 1
      // Predicated region
      $region13: #{wav2vec2_ctc_logits.8} parent=11 // pred_check
        %p189 = pneg %p85
      $region14: #{wav2vec2_ctc_logits.8} parent=11 // pred_check_branch
        %191 = sbr.rel (%p189) target = $region16
      $region15: #{wav2vec2_ctc_logits.8} parent=11 // pred_region
        _
      $region16: #{wav2vec2_ctc_logits.8} parent=11 // pred_fallthru
        _
      // Predicated region
      $region17: #{wav2vec2_ctc_logits.8} parent=11 // pred_check
        %p192 = pneg %p106
      $region18: #{wav2vec2_ctc_logits.8} parent=11 // pred_check_branch
        %194 = sbr.rel (%p192) target = $region20
      $region19: #{wav2vec2_ctc_logits.8} parent=11 // pred_region
        _
      $region20: #{wav2vec2_ctc_logits.8} parent=11 // pred_fallthru
        _
      // Predicated region
      $region21: #{wav2vec2_ctc_logits.8} parent=11 // pred_check
        %p195 = pneg %p127
      $region22: #{wav2vec2_ctc_logits.8} parent=11 // pred_check_branch
        %197 = sbr.rel (%p195) target = $region24
      $region23: #{wav2vec2_ctc_logits.8} parent=11 // pred_region
        _
      $region24: #{wav2vec2_ctc_logits.8} parent=11 // pred_fallthru
        _
      // Predicated region
      $region25: #{wav2vec2_ctc_logits.8} parent=11 // pred_check
        %p198 = pneg %p148
      $region26: #{wav2vec2_ctc_logits.8} parent=11 // pred_check_branch
        %200 = sbr.rel (%p198) target = $region28
      $region27: #{wav2vec2_ctc_logits.8} parent=11 // pred_region
        _
      $region28: #{wav2vec2_ctc_logits.8} parent=11 // pred_fallthru
        _
    $region12: #{wav2vec2_ctc_logits.8} parent=5 // pred_fallthru
      _
    %p201 = scmp.lt.s32.totalorder %s12, 2
    // Predicated region
    $region29: #{wav2vec2_ctc_logits.8} parent=5 // pred_check
      %p202 = pneg %p201
    $region30: #{wav2vec2_ctc_logits.8} parent=5 // pred_check_branch
      %204 = sbr.rel (%p202) target = $region32
    $region31: #{wav2vec2_ctc_logits.8} parent=5 // pred_region
      // Predicated region
      $region33: #{wav2vec2_ctc_logits.8} parent=31 // pred_check
        %p205 = pneg %p32
      $region34: #{wav2vec2_ctc_logits.8} parent=31 // pred_check_branch
        %207 = sbr.rel (%p205) target = $region36
      $region35: #{wav2vec2_ctc_logits.8} parent=31 // pred_region
        %p208 = scmp.lt.s32.totalorder %s12, 1
        %s209 = scalar_select %p208, %s12, 1
        %s210 = smul.addr %s209, 5
        %s211 = smul.addr %s210, 8
        %s212 = scalar_lea.vmem %s0, %s211
      $region36: #{wav2vec2_ctc_logits.8} parent=31 // pred_fallthru
        _
      // Predicated region
      $region37: #{wav2vec2_ctc_logits.8} parent=31 // pred_check
        %p213 = pneg %p58
      $region38: #{wav2vec2_ctc_logits.8} parent=31 // pred_check_branch
        %215 = sbr.rel (%p213) target = $region40
      $region39: #{wav2vec2_ctc_logits.8} parent=31 // pred_region
        %p216 = scmp.lt.s32.totalorder %s12, 1
        %s217 = scalar_select %p216, %s12, 1
        %s218 = smul.addr %s217, 5
        %s219 = smul.addr %s218, 8
        %s220 = scalar_lea.vmem %s1, %s219
      $region40: #{wav2vec2_ctc_logits.8} parent=31 // pred_fallthru
        _
    $region32: #{wav2vec2_ctc_logits.8} parent=5 // pred_fallthru
      _
    %p221 = scmp.le.s32.totalorder 1, %s12
    %p222 = scmp.lt.s32.totalorder %s12, 3
    %p223 = pnand %p221, %p222
    %p224 = pneg %p223
    // Predicated region
    $region41: #{wav2vec2_ctc_logits.8} parent=5 // pred_check
      _
    $region42: #{wav2vec2_ctc_logits.8} parent=5 // pred_check_branch
      %226 = sbr.rel (%p223) target = $region44
    $region43: #{wav2vec2_ctc_logits.8} parent=5 // pred_region
      %s227 = ssub.s32 %s12, 1
      %p228 = scmp.lt.s32.totalorder %s17, 1
      %s229 = scalar_select %p228, %s17, 1
      %s230 = smul.addr %s229, 5
      %s231 = smul.addr %s230, 8
      %s232 = scalar_lea.vmem %s0, %s231
      %p233 = pneg %p38
      %p234 = pneg %p35
      %p235 = scmp.lt.s32.totalorder %s17, 1
      %s236 = scalar_select %p235, %s17, 1
      %s237 = smul.addr %s236, 5
      %s238 = smul.addr %s237, 8
      %s239 = scalar_lea.vmem %s1, %s238
      %p240 = pneg %p64
      %p241 = pneg %p61
      %p242 = pneg %p85
      %p243 = pneg %p82
      %p244 = pneg %p106
      %p245 = pneg %p103
      %p246 = pneg %p127
      %p247 = pneg %p124
      %p248 = pneg %p148
      %p249 = pneg %p145
      %p250 = pneg %p174
      %p251 = pneg %p171
      %p252 = scmp.lt.s32.totalorder %s17, 1
      %s253 = scalar_select %p252, %s17, 1
      %s254 = smul.addr %s253, 5
      %s255 = smul.addr %s254, 8
      %s256 = scalar_lea.vmem %s6, %s255
      %p257 = scmp.lt.s32.totalorder %s17, 1
      %s258 = scalar_select %p257, %s17, 1
      %s259 = smul.addr %s258, 5
      %s260 = smul.addr %s259, 8
      %s261 = scalar_lea.vmem %s0, %s260
      %p262 = scmp.lt.s32.totalorder %s17, 1
      %s263 = scalar_select %p262, %s17, 1
      %s264 = smul.addr %s263, 5
      %s265 = smul.addr %s264, 8
      %s266 = scalar_lea.vmem %s1, %s265
      %p267 = scmp.lt.s32.totalorder %s17, 1
      %s268 = scalar_select %p267, %s17, 1
      %s269 = smul.addr %s268, 5
      %s270 = smul.addr %s269, 8
      %s271 = scalar_lea.vmem %s6, %s270
      %v273 = vld [vmem:[%s261] sm:$0xff]
      %v274 = vld [vmem:[%s261 + $0x8] sm:$0xff]
      %v275 = vld [vmem:[%s261 + $0x10] sm:$0xff]
      %v276 = vld [vmem:[%s261 + $0x18] sm:$0xff]
      %v277 = vld [vmem:[%s261 + $0x20] sm:$0x7f]
      %v278 = vld [vmem:[%s266] sm:$0xff]
      %v279 = vld [vmem:[%s266 + $0x8] sm:$0xff]
      %v280 = vld [vmem:[%s266 + $0x10] sm:$0xff]
      %v281 = vld [vmem:[%s266 + $0x18] sm:$0xff]
      %v282 = vld [vmem:[%s266 + $0x20] sm:$0x7f]
      %v283 = vld [vmem:[%s2] sm:$0xff]
      %v284 = vld [vmem:[%s2 + $0x8] sm:$0xff]
      %v285 = vld [vmem:[%s2 + $0x10] sm:$0xff]
      %v286 = vld [vmem:[%s2 + $0x18] sm:$0xff]
      %v287 = vld [vmem:[%s2 + $0x20] sm:$0xff]
      %v288 = vld [vmem:[%s2 + $0x28] sm:$0xff]
      %v289 = vld [vmem:[%s2 + $0x30] sm:$0xff]
      %v290 = vld [vmem:[%s2 + $0x38] sm:$0xff]
      %v291 = vld [vmem:[%s2 + $0x40] sm:$0xff]
      %v292 = vld [vmem:[%s2 + $0x48] sm:$0xff]
      %v293 = vld [vmem:[%s2 + $0x50] sm:$0xff]
      %v294 = vld [vmem:[%s2 + $0x58] sm:$0xff]
      %v295 = vpack.c.bf16 %v279, %v278
      %v296 = vpack.c.bf16 %v281, %v280
      %v297 = vpack.c.bf16 %v282, %v282
      %v298 = vpack.c.bf16 %v284, %v283
      %v299 = vpack.c.bf16 %v286, %v285
      %v300 = vpack.c.bf16 %v288, %v287
      %v301 = vpack.c.bf16 %v290, %v289
      %v302 = vpack.c.bf16 %v292, %v291
      %v303 = vpack.c.bf16 %v294, %v293
      %v304 = vld [vmem:[%s3] sm:$0x1]
      %v306 = vlaneseq
      %v307 = vshrl.u32 %v306, 7
      %v308 = vsub.s32 0, %v307
      %v309 = vrot.slane %v304, %v308
      %vm311 = vcmask 785408
      %v313 = vsel %vm311, %v295, 0
      %v316 = vsel %vm311, %v296, 0
      %v319 = vsel %vm311, %v297, 0
      %321 = vmatprep.subr.bf16.mxu0 0
      %322 = vmatpush1.bf16.msra.mxu0 %v298
      %323 = vmatprep.subr.bf16.mxu0 0
      %324 = vmatpush1.bf16.msra.mxu0 %v299
      %325 = vmatprep.subr.bf16.mxu0 0
      %326 = vmatpush1.bf16.msra.mxu0 %v300
      %327 = vmatprep.subr.bf16.mxu0 0
      %328 = vmatpush1.bf16.msra.mxu0 %v301
      %329 = vmatprep.subr.bf16.mxu0 0
      %330 = vmatpush1.bf16.msra.mxu0 %v302
      %331 = vmatprep.subr.bf16.mxu0 0
      %332 = vmatpush1.bf16.msra.mxu0 %v303
      %333 = vmatprep.subr.bf16.mxu0 0
      %334 = vmatpush1.bf16.msra.mxu0 0
      %335 = vmatprep.subr.bf16.mxu0 0
      %336 = vmatpush1.bf16.msra.mxu0 0
      %337 = vmatprep.subr.bf16.mxu0 0
      %338 = vmatpush1.bf16.msra.mxu0 0
      %339 = vmatprep.subr.bf16.mxu0 0
      %340 = vmatpush1.bf16.msra.mxu0 0
      %341 = vmatprep.subr.bf16.mxu0 0
      %342 = vmatpush1.bf16.msra.mxu0 0
      %343 = vmatprep.subr.bf16.mxu0 0
      %344 = vmatpush1.bf16.msra.mxu0 0
      %345 = vmatprep.subr.bf16.mxu0 0
      %346 = vmatpush1.bf16.msra.mxu0 0
      %347 = vmatprep.subr.bf16.mxu0 0
      %348 = vmatpush1.bf16.msra.mxu0 0
      %349 = vmatprep.subr.bf16.mxu0 0
      %350 = vmatpush1.bf16.msra.mxu0 0
      %351 = vmatprep.subr.bf16.mxu0 0
      %352 = vmatpush1.bf16.msra.mxu0 0
      %353 = vmatprep.mubr.bf16.mxu0 0
      %354 = vmatmul.mubr.bf16.gmra.mrb[0].mxu0 %v313
      %v355 = vpop.f32.mrb[0].mxu0
      %v356 = vadd.f32 %v309, %v355
      %v357 = vpop.f32.mrb[0].mxu0
      %v358 = vpop.f32.mrb[0].mxu0
      %v359 = vadd.f32 %v309, %v358
      %v360 = vpop.f32.mrb[0].mxu0
      %361 = vmatprep.mubr.bf16.mxu0 0
      %362 = vmatmul.mubr.bf16.gmra.mrb[0].mxu0 %v316
      %v363 = vpop.f32.mrb[0].mxu0
      %v364 = vadd.f32 %v309, %v363
      %v365 = vpop.f32.mrb[0].mxu0
      %v366 = vpop.f32.mrb[0].mxu0
      %v367 = vadd.f32 %v309, %v366
      %v368 = vpop.f32.mrb[0].mxu0
      %369 = vmatprep.mubr.bf16.mxu0 0
      %370 = vmatmul.mubr.bf16.gmra.mrb[0].mxu0 %v319
      %v371 = vpop.f32.mrb[0].mxu0
      %v372 = vadd.f32 %v309, %v371
      %v373 = vpop.f32.mrb[0].mxu0
      %v374 = vpop.f32.mrb[0].mxu0
      %v375 = vpop.f32.mrb[0].mxu0
      %376 = vdwg.mxu0
      %v377 = vmul.f32 %v356, %v356
      %v378 = vmul.f32 %v359, %v359
      %v379 = vmul.f32 %v364, %v364
      %v380 = vmul.f32 %v367, %v367
      %v381 = vmul.f32 %v372, %v372
      %v382 = vmul.f32 %v356, %v377
      %v383 = vmul.f32 %v359, %v378
      %v384 = vmul.f32 %v364, %v379
      %v385 = vmul.f32 %v367, %v380
      %v386 = vmul.f32 %v372, %v381
      %v387 = vmul.f32 %v382, 0.044715
      %v388 = vmul.f32 %v383, 0.044715
      %v389 = vmul.f32 %v384, 0.044715
      %v390 = vmul.f32 %v385, 0.044715
      %v391 = vmul.f32 %v386, 0.044715
      %v392 = vadd.f32 %v356, %v387
      %v393 = vadd.f32 %v359, %v388
      %v394 = vadd.f32 %v364, %v389
      %v395 = vadd.f32 %v367, %v390
      %v396 = vadd.f32 %v372, %v391
      %v397 = vmul.f32 %v392, 0.7978846
      %v398 = vmul.f32 %v393, 0.7978846
      %v399 = vmul.f32 %v394, 0.7978846
      %v400 = vmul.f32 %v395, 0.7978846
      %v401 = vmul.f32 %v396, 0.7978846
      %v402 = vtanh.pop %v397
      %v403 = vtanh.pop %v398
      %v404 = vtanh.pop %v399
      %v405 = vtanh.pop %v400
      %v406 = vtanh.pop %v401
      %v407 = vadd.f32 %v402, 1.0
      %v408 = vadd.f32 %v403, 1.0
      %v409 = vadd.f32 %v404, 1.0
      %v410 = vadd.f32 %v405, 1.0
      %v411 = vadd.f32 %v406, 1.0
      %v412 = vmul.f32 %v407, 0.5
      %v413 = vmul.f32 %v408, 0.5
      %v414 = vmul.f32 %v409, 0.5
      %v415 = vmul.f32 %v410, 0.5
      %v416 = vmul.f32 %v411, 0.5
      %v417 = vmul.f32 %v356, %v412
      %v418 = vmul.f32 %v359, %v413
      %v419 = vmul.f32 %v364, %v414
      %v420 = vmul.f32 %v367, %v415
      %v421 = vmul.f32 %v372, %v416
      %v422 = vadd.f32 %v273, %v417
      %v423 = vadd.f32 %v274, %v418
      %v424 = vadd.f32 %v275, %v419
      %v425 = vadd.f32 %v276, %v420
      %v426 = vadd.f32 %v277, %v421
      %v427 = vld [vmem:[%s4] sm:$0x1]
      %v428 = vld [vmem:[%s5] sm:$0x1]
      %vm429 = vcmask 261120
      %v430 = vsel %vm429, %v422, 0.0
      %431 = vadd.xlane.f32.xlu0 %v430
      %v432 = vpop.xlane.xlu0 %431
      %v433 = vsel %vm429, %v423, 0.0
      %434 = vadd.xlane.f32.xlu0 %v433
      %v435 = vpop.xlane.xlu0 %434
      %v436 = vsel %vm429, %v424, 0.0
      %437 = vadd.xlane.f32.xlu0 %v436
      %v438 = vpop.xlane.xlu0 %437
      %v439 = vsel %vm429, %v425, 0.0
      %440 = vadd.xlane.f32.xlu0 %v439
      %v441 = vpop.xlane.xlu0 %440
      %vm442 = vcmask 260096
      %v443 = vsel %vm442, %v426, 0.0
      %444 = vadd.xlane.f32.xlu0 %v443
      %v445 = vpop.xlane.xlu0 %444
      %v446 = vrcp.pop 32.0
      %v447 = vmul.f32 %v432, %v446
      %v448 = vmul.f32 %v435, %v446
      %v449 = vmul.f32 %v438, %v446
      %v450 = vmul.f32 %v441, %v446
      %v451 = vmul.f32 %v445, %v446
      %v452 = vsub.f32 %v422, %v447
      %v453 = vsub.f32 %v423, %v448
      %v454 = vsub.f32 %v424, %v449
      %v455 = vsub.f32 %v425, %v450
      %v456 = vsub.f32 %v426, %v451
      %v457 = vmul.f32 %v452, %v452
      %v458 = vmul.f32 %v453, %v453
      %v459 = vmul.f32 %v454, %v454
      %v460 = vmul.f32 %v455, %v455
      %v461 = vmul.f32 %v456, %v456
      %v462 = vsel %vm429, %v457, 0.0
      %463 = vadd.xlane.f32.xlu0 %v462
      %v464 = vpop.xlane.xlu0 %463
      %v465 = vsel %vm429, %v458, 0.0
      %466 = vadd.xlane.f32.xlu0 %v465
      %v467 = vpop.xlane.xlu0 %466
      %v468 = vsel %vm429, %v459, 0.0
      %469 = vadd.xlane.f32.xlu0 %v468
      %v470 = vpop.xlane.xlu0 %469
      %v471 = vsel %vm429, %v460, 0.0
      %472 = vadd.xlane.f32.xlu0 %v471
      %v473 = vpop.xlane.xlu0 %472
      %v474 = vsel %vm442, %v461, 0.0
      %475 = vadd.xlane.f32.xlu0 %v474
      %v476 = vpop.xlane.xlu0 %475
      %v477 = vmul.f32 %v464, %v446
      %v478 = vmul.f32 %v467, %v446
      %v479 = vmul.f32 %v470, %v446
      %v480 = vmul.f32 %v473, %v446
      %v481 = vmul.f32 %v476, %v446
      %v482 = vadd.f32 %v477, 1e-05
      %v483 = vadd.f32 %v478, 1e-05
      %v484 = vadd.f32 %v479, 1e-05
      %v485 = vadd.f32 %v480, 1e-05
      %v486 = vadd.f32 %v481, 1e-05
      %v487 = vrsqrt.pop %v482
      %v488 = vrsqrt.pop %v483
      %v489 = vrsqrt.pop %v484
      %v490 = vrsqrt.pop %v485
      %v491 = vrsqrt.pop %v486
      %v492 = vmul.f32 %v452, %v487
      %v493 = vmul.f32 %v453, %v488
      %v494 = vmul.f32 %v454, %v489
      %v495 = vmul.f32 %v455, %v490
      %v496 = vmul.f32 %v456, %v491
      %v498 = vlaneseq
      %v499 = vshrl.u32 %v498, 7
      %v500 = vsub.s32 0, %v499
      %v501 = vrot.slane %v427, %v500
      %v503 = vmul.f32 %v492, %v501
      %v504 = vmul.f32 %v493, %v501
      %v505 = vmul.f32 %v494, %v501
      %v506 = vmul.f32 %v495, %v501
      %v507 = vmul.f32 %v496, %v501
      %v509 = vlaneseq
      %v510 = vshrl.u32 %v509, 7
      %v511 = vsub.s32 0, %v510
      %v512 = vrot.slane %v428, %v511
      %v514 = vadd.f32 %v503, %v512
      %v515 = vadd.f32 %v504, %v512
      %v516 = vadd.f32 %v505, %v512
      %v517 = vadd.f32 %v506, %v512
      %v518 = vadd.f32 %v507, %v512
      %519 = vst.msk [vmem:[%s271] sm:$0xff] %vm429, %v514
      %520 = vst.msk [vmem:[%s271 + $0x8] sm:$0xff] %vm429, %v515
      %521 = vst.msk [vmem:[%s271 + $0x10] sm:$0xff] %vm429, %v516
      %522 = vst.msk [vmem:[%s271 + $0x18] sm:$0xff] %vm429, %v517
      %523 = vst.msk [vmem:[%s271 + $0x20] sm:$0x7f] %vm442, %v518
      %p524 = scmp.lt.s32.totalorder %s17, 1
      %s525 = scalar_select %p524, %s17, 1
      %s526 = smul.addr %s525, 5
      %s527 = smul.addr %s526, 8
      %s528 = scalar_lea.vmem %s6, %s527
      // Predicated region
      $region45: #{wav2vec2_ctc_logits.8} parent=43 // pred_check
        %p529 = pneg %p171
      $region46: #{wav2vec2_ctc_logits.8} parent=43 // pred_check_branch
        %531 = sbr.rel (%p529) target = $region48
      $region47: #{wav2vec2_ctc_logits.8} parent=43 // pred_region
        _
      $region48: #{wav2vec2_ctc_logits.8} parent=43 // pred_fallthru
        _
    $region44: #{wav2vec2_ctc_logits.8} parent=5 // pred_fallthru
      _
    %p532 = scmp.le.s32.totalorder 2, %s12
    // Predicated region
    $region49: #{wav2vec2_ctc_logits.8} parent=5 // pred_check
      %p533 = pneg %p532
    $region50: #{wav2vec2_ctc_logits.8} parent=5 // pred_check_branch
      %535 = sbr.rel (%p533) target = $region52
    $region51: #{wav2vec2_ctc_logits.8} parent=5 // pred_region
      %s536 = ssub.s32 %s12, 2
      // Predicated region
      $region53: #{wav2vec2_ctc_logits.8} parent=51 // pred_check
        %p537 = pneg %p177
      $region54: #{wav2vec2_ctc_logits.8} parent=51 // pred_check_branch
        %539 = sbr.rel (%p537) target = $region56
      $region55: #{wav2vec2_ctc_logits.8} parent=51 // pred_region
        %p540 = scmp.lt.s32.totalorder %s18, 1
        %s541 = scalar_select %p540, %s18, 1
        %s542 = smul.addr %s541, 5
        %s543 = smul.addr %s542, 8
        %s544 = scalar_lea.vmem %s6, %s543
      $region56: #{wav2vec2_ctc_logits.8} parent=51 // pred_fallthru
        _
    $region52: #{wav2vec2_ctc_logits.8} parent=5 // pred_fallthru
      _
  $region6: #{wav2vec2_ctc_logits.8} parent=0 // loop_footer
    %s16 = sadd.s32 1, %s12
  $region7: #{wav2vec2_ctc_logits.8} parent=0 // loop_footer_branch
    %11 = sbr.rel target = $region3
  $region8: #{wav2vec2_ctc_logits.8} parent=0 // loop_exit
    _

// kernel: wav2vec2_ctc_logits.11
$region0: #{wav2vec2_ctc_logits.11}
  #allocation0 [shape = 'u32[]', space=smem, size = 0x4, offset = 0x4, fixed_abs, tag = 'smem constant byte address 0x4 - core index']
  #allocation1 [shape = 'u32[144,128]{1,0:T(1,128)}', space=vmem, size = 0x12000, scoped, tag = 'internal scratch']
  %s0 = inlined_call_operand.vmem [shape: f32[2,39,32], index: 0, kind: input, shape index: {}]
  %s1 = inlined_call_operand.vmem [shape: f32[32,32], index: 1, kind: input, shape index: {}]
  %s2 = inlined_call_operand.vmem [shape: f32[1,32], index: 2, kind: input, shape index: {}]
  %s3 = inlined_call_operand.vmem [shape: f32[2,39,32], index: 3, kind: output, shape index: {}]
  %s4 = sld [smem:[#allocation0]]
  $region45: #{wav2vec2_ctc_logits.11} parent=0
    _
  %s6 = ssub.s32 1, %s4
  %s7 = scalar_select 0, %s6, %s4
  loop: start=0, step=1, limit=4
  $region2: #{wav2vec2_ctc_logits.11} parent=0 // loop_pre_header
    _
  $region3: #{wav2vec2_ctc_logits.11} parent=0 // loop_header
    %s9 = sphi 0, %s13
    %p10 = scmp.ge.s32.totalorder %s9, 4
    %s19 = sphi 0, %s21
    %s22 = sphi 0, %s19
    %s23 = sphi 0, %s22
    %s39 = sphi 0, %s23
    %s43 = sphi 0, %s43
    %s45 = sphi 0, %s43
    %s46 = sphi 0, %s45
    %s60 = sphi 0, %s46
    %s64 = sphi 0, %s64
    %s66 = sphi 0, %s64
    %s67 = sphi 0, %s66
    %s81 = sphi 0, %s67
    %s87 = sphi 0, %s89
    %s90 = sphi 0, %s87
    %s91 = sphi 0, %s90
    %s107 = sphi 0, %s91
  $region4: #{wav2vec2_ctc_logits.11} parent=0 // loop_header_branch
    %12 = sbr.rel (%p10) target = $region8
  $region5: #{wav2vec2_ctc_logits.11} parent=0 // loop_body
    %s14 = ssub.s32 %s9, 1
    %s15 = ssub.s32 %s9, 2
    %s16 = sadd.s32 %s9, 1
    %s17 = ssub.s32 %s9, %s16
    %p18 = scmp.eq.s32.totalorder %s17, 0
    %s20 = sadd.s32 %s19, 1
    %s21 = scalar_select %p18, %s19, %s20
    %p24 = pneg %p18
    %p25 = scmp.eq.s32.totalorder %s9, 1
    %p26 = por %p24, %p25
    %p27 = scmp.ne.s32.totalorder %s19, %s22
    %p28 = scmp.eq.s32.totalorder %s9, 0
    %p29 = por %p27, %p28
    %p30 = scmp.ne.s32.totalorder %s19, %s22
    %p31 = scmp.eq.s32.totalorder %s14, 1
    %p32 = por %p30, %p31
    %p33 = scmp.ne.s32.totalorder %s22, %s23
    %p34 = scmp.eq.s32.totalorder %s14, 0
    %p35 = por %p33, %p34
    %p36 = scmp.ne.s32.totalorder %s22, %s23
    %p37 = scmp.eq.s32.totalorder %s15, 1
    %p38 = por %p36, %p37
    %p40 = scmp.ne.s32.totalorder %s23, %s39
    %p41 = scmp.eq.s32.totalorder %s15, 0
    %p42 = por %p40, %p41
    %s44 = sadd.s32 %s43, 1
    %p47 = scmp.eq.s32.totalorder %s9, 1
    %p48 = scmp.ne.s32.totalorder %s43, %s45
    %p49 = scmp.eq.s32.totalorder %s9, 0
    %p50 = por %p48, %p49
    %p51 = scmp.ne.s32.totalorder %s43, %s45
    %p52 = scmp.eq.s32.totalorder %s14, 1
    %p53 = por %p51, %p52
    %p54 = scmp.ne.s32.totalorder %s45, %s46
    %p55 = scmp.eq.s32.totalorder %s14, 0
    %p56 = por %p54, %p55
    %p57 = scmp.ne.s32.totalorder %s45, %s46
    %p58 = scmp.eq.s32.totalorder %s15, 1
    %p59 = por %p57, %p58
    %p61 = scmp.ne.s32.totalorder %s46, %s60
    %p62 = scmp.eq.s32.totalorder %s15, 0
    %p63 = por %p61, %p62
    %s65 = sadd.s32 %s64, 1
    %p68 = scmp.eq.s32.totalorder %s9, 1
    %p69 = scmp.ne.s32.totalorder %s64, %s66
    %p70 = scmp.eq.s32.totalorder %s9, 0
    %p71 = por %p69, %p70
    %p72 = scmp.ne.s32.totalorder %s64, %s66
    %p73 = scmp.eq.s32.totalorder %s14, 1
    %p74 = por %p72, %p73
    %p75 = scmp.ne.s32.totalorder %s66, %s67
    %p76 = scmp.eq.s32.totalorder %s14, 0
    %p77 = por %p75, %p76
    %p78 = scmp.ne.s32.totalorder %s66, %s67
    %p79 = scmp.eq.s32.totalorder %s15, 1
    %p80 = por %p78, %p79
    %p82 = scmp.ne.s32.totalorder %s67, %s81
    %p83 = scmp.eq.s32.totalorder %s15, 0
    %p84 = por %p82, %p83
    %s85 = ssub.s32 %s9, %s16
    %p86 = scmp.eq.s32.totalorder %s85, 0
    %s88 = sadd.s32 %s87, 1
    %s89 = scalar_select %p86, %s87, %s88
    %p92 = pneg %p86
    %p93 = scmp.eq.s32.totalorder %s9, 1
    %p94 = por %p92, %p93
    %p95 = scmp.ne.s32.totalorder %s87, %s90
    %p96 = scmp.eq.s32.totalorder %s9, 0
    %p97 = por %p95, %p96
    %p98 = scmp.ne.s32.totalorder %s87, %s90
    %p99 = scmp.eq.s32.totalorder %s14, 1
    %p100 = por %p98, %p99
    %p101 = scmp.ne.s32.totalorder %s90, %s91
    %p102 = scmp.eq.s32.totalorder %s14, 0
    %p103 = por %p101, %p102
    %p104 = scmp.ne.s32.totalorder %s90, %s91
    %p105 = scmp.eq.s32.totalorder %s15, 1
    %p106 = por %p104, %p105
    %p108 = scmp.ne.s32.totalorder %s91, %s107
    %p109 = scmp.eq.s32.totalorder %s15, 0
    %p110 = por %p108, %p109
    %p111 = scmp.le.s32.totalorder 1, %s9
    %p112 = scmp.lt.s32.totalorder %s9, 3
    %p113 = pnand %p111, %p112
    %p114 = pneg %p113
    // Predicated region
    $region9: #{wav2vec2_ctc_logits.11} parent=5 // pred_check
      _
    $region10: #{wav2vec2_ctc_logits.11} parent=5 // pred_check_branch
      %116 = sbr.rel (%p113) target = $region12
    $region11: #{wav2vec2_ctc_logits.11} parent=5 // pred_region
      %s117 = ssub.s32 %s9, 1
      // Predicated region
      $region13: #{wav2vec2_ctc_logits.11} parent=11 // pred_check
        %p118 = pneg %p56
      $region14: #{wav2vec2_ctc_logits.11} parent=11 // pred_check_branch
        %120 = sbr.rel (%p118) target = $region16
      $region15: #{wav2vec2_ctc_logits.11} parent=11 // pred_region
        _
      $region16: #{wav2vec2_ctc_logits.11} parent=11 // pred_fallthru
        _
      // Predicated region
      $region17: #{wav2vec2_ctc_logits.11} parent=11 // pred_check
        %p121 = pneg %p77
      $region18: #{wav2vec2_ctc_logits.11} parent=11 // pred_check_branch
        %123 = sbr.rel (%p121) target = $region20
      $region19: #{wav2vec2_ctc_logits.11} parent=11 // pred_region
        _
      $region20: #{wav2vec2_ctc_logits.11} parent=11 // pred_fallthru
        _
    $region12: #{wav2vec2_ctc_logits.11} parent=5 // pred_fallthru
      _
    %p124 = scmp.lt.s32.totalorder %s9, 2
    // Predicated region
    $region21: #{wav2vec2_ctc_logits.11} parent=5 // pred_check
      %p125 = pneg %p124
    $region22: #{wav2vec2_ctc_logits.11} parent=5 // pred_check_branch
      %127 = sbr.rel (%p125) target = $region24
    $region23: #{wav2vec2_ctc_logits.11} parent=5 // pred_region
      // Predicated region
      $region25: #{wav2vec2_ctc_logits.11} parent=23 // pred_check
        %p128 = pneg %p29
      $region26: #{wav2vec2_ctc_logits.11} parent=23 // pred_check_branch
        %130 = sbr.rel (%p128) target = $region28
      $region27: #{wav2vec2_ctc_logits.11} parent=23 // pred_region
        %p131 = scmp.lt.s32.totalorder %s9, 1
        %s132 = scalar_select %p131, %s9, 1
        %s133 = smul.addr %s132, 5
        %s134 = smul.addr %s133, 8
        %s135 = scalar_lea.vmem %s0, %s134
      $region28: #{wav2vec2_ctc_logits.11} parent=23 // pred_fallthru
        _
    $region24: #{wav2vec2_ctc_logits.11} parent=5 // pred_fallthru
      _
    %p136 = scmp.le.s32.totalorder 1, %s9
    %p137 = scmp.lt.s32.totalorder %s9, 3
    %p138 = pnand %p136, %p137
    %p139 = pneg %p138
    // Predicated region
    $region29: #{wav2vec2_ctc_logits.11} parent=5 // pred_check
      _
    $region30: #{wav2vec2_ctc_logits.11} parent=5 // pred_check_branch
      %141 = sbr.rel (%p138) target = $region32
    $region31: #{wav2vec2_ctc_logits.11} parent=5 // pred_region
      %s142 = ssub.s32 %s9, 1
      %p143 = scmp.lt.s32.totalorder %s14, 1
      %s144 = scalar_select %p143, %s14, 1
      %s145 = smul.addr %s144, 5
      %s146 = smul.addr %s145, 8
      %s147 = scalar_lea.vmem %s0, %s146
      %p148 = pneg %p35
      %p149 = pneg %p32
      %p150 = pneg %p56
      %p151 = pneg %p53
      %p152 = pneg %p77
      %p153 = pneg %p74
      %p154 = pneg %p103
      %p155 = pneg %p100
      %p156 = scmp.lt.s32.totalorder %s14, 1
      %s157 = scalar_select %p156, %s14, 1
      %s158 = smul.addr %s157, 5
      %s159 = smul.addr %s158, 8
      %s160 = scalar_lea.vmem %s3, %s159
      %p161 = scmp.lt.s32.totalorder %s14, 1
      %s162 = scalar_select %p161, %s14, 1
      %s163 = smul.addr %s162, 5
      %s164 = smul.addr %s163, 8
      %s165 = scalar_lea.vmem %s0, %s164
      %p166 = scmp.lt.s32.totalorder %s14, 1
      %s167 = scalar_select %p166, %s14, 1
      %s168 = smul.addr %s167, 5
      %s169 = smul.addr %s168, 8
      %s170 = scalar_lea.vmem %s3, %s169
      %v172 = vld [vmem:[%s165] sm:$0xff]
      %v173 = vld [vmem:[%s165 + $0x8] sm:$0xff]
      %v174 = vld [vmem:[%s165 + $0x10] sm:$0xff]
      %v175 = vld [vmem:[%s165 + $0x18] sm:$0xff]
      %v176 = vld [vmem:[%s165 + $0x20] sm:$0x7f]
      %v177 = vld [vmem:[%s1] sm:$0xff]
      %v178 = vld [vmem:[%s1 + $0x8] sm:$0xff]
      %v179 = vld [vmem:[%s1 + $0x10] sm:$0xff]
      %v180 = vld [vmem:[%s1 + $0x18] sm:$0xff]
      %v181 = vpack.c.bf16 %v173, %v172
      %v182 = vpack.c.bf16 %v175, %v174
      %v183 = vpack.c.bf16 %v176, %v176
      %v184 = vpack.c.bf16 %v178, %v177
      %v185 = vpack.c.bf16 %v180, %v179
      %v186 = vld [vmem:[%s2] sm:$0x1]
      %v188 = vlaneseq
      %v189 = vshrl.u32 %v188, 7
      %v190 = vsub.s32 0, %v189
      %v191 = vrot.slane %v186, %v190
      %vm193 = vcmask 261120
      %v195 = vsel %vm193, %v181, 0
      %v198 = vsel %vm193, %v182, 0
      %v201 = vsel %vm193, %v183, 0
      %203 = vmatprep.subr.bf16.mxu0 0
      %204 = vmatpush1.bf16.msra.mxu0 %v184
      %205 = vmatprep.subr.bf16.mxu0 0
      %206 = vmatpush1.bf16.msra.mxu0 %v185
      %207 = vmatprep.subr.bf16.mxu0 0
      %208 = vmatpush1.bf16.msra.mxu0 0
      %209 = vmatprep.subr.bf16.mxu0 0
      %210 = vmatpush1.bf16.msra.mxu0 0
      %211 = vmatprep.subr.bf16.mxu0 0
      %212 = vmatpush1.bf16.msra.mxu0 0
      %213 = vmatprep.subr.bf16.mxu0 0
      %214 = vmatpush1.bf16.msra.mxu0 0
      %215 = vmatprep.subr.bf16.mxu0 0
      %216 = vmatpush1.bf16.msra.mxu0 0
      %217 = vmatprep.subr.bf16.mxu0 0
      %218 = vmatpush1.bf16.msra.mxu0 0
      %219 = vmatprep.subr.bf16.mxu0 0
      %220 = vmatpush1.bf16.msra.mxu0 0
      %221 = vmatprep.subr.bf16.mxu0 0
      %222 = vmatpush1.bf16.msra.mxu0 0
      %223 = vmatprep.subr.bf16.mxu0 0
      %224 = vmatpush1.bf16.msra.mxu0 0
      %225 = vmatprep.subr.bf16.mxu0 0
      %226 = vmatpush1.bf16.msra.mxu0 0
      %227 = vmatprep.subr.bf16.mxu0 0
      %228 = vmatpush1.bf16.msra.mxu0 0
      %229 = vmatprep.subr.bf16.mxu0 0
      %230 = vmatpush1.bf16.msra.mxu0 0
      %231 = vmatprep.subr.bf16.mxu0 0
      %232 = vmatpush1.bf16.msra.mxu0 0
      %233 = vmatprep.subr.bf16.mxu0 0
      %234 = vmatpush1.bf16.msra.mxu0 0
      %235 = vmatprep.mubr.bf16.mxu0 0
      %236 = vmatmul.mubr.bf16.gmra.mrb[0].mxu0 %v195
      %v237 = vpop.f32.mrb[0].mxu0
      %v238 = vadd.f32 %v191, %v237
      %v239 = vpop.f32.mrb[0].mxu0
      %v240 = vpop.f32.mrb[0].mxu0
      %v241 = vadd.f32 %v191, %v240
      %v242 = vpop.f32.mrb[0].mxu0
      %243 = vmatprep.mubr.bf16.mxu0 0
      %244 = vmatmul.mubr.bf16.gmra.mrb[0].mxu0 %v198
      %v245 = vpop.f32.mrb[0].mxu0
      %v246 = vadd.f32 %v191, %v245
      %v247 = vpop.f32.mrb[0].mxu0
      %v248 = vpop.f32.mrb[0].mxu0
      %v249 = vadd.f32 %v191, %v248
      %v250 = vpop.f32.mrb[0].mxu0
      %251 = vmatprep.mubr.bf16.mxu0 0
      %252 = vmatmul.mubr.bf16.gmra.mrb[0].mxu0 %v201
      %v253 = vpop.f32.mrb[0].mxu0
      %v254 = vadd.f32 %v191, %v253
      %v255 = vpop.f32.mrb[0].mxu0
      %v256 = vpop.f32.mrb[0].mxu0
      %v257 = vpop.f32.mrb[0].mxu0
      %258 = vdwg.mxu0
      %259 = vst.msk [vmem:[%s170] sm:$0xff] %vm193, %v238
      %260 = vst.msk [vmem:[%s170 + $0x8] sm:$0xff] %vm193, %v241
      %261 = vst.msk [vmem:[%s170 + $0x10] sm:$0xff] %vm193, %v246
      %262 = vst.msk [vmem:[%s170 + $0x18] sm:$0xff] %vm193, %v249
      %vm263 = vcmask 260096
      %264 = vst.msk [vmem:[%s170 + $0x20] sm:$0x7f] %vm263, %v254
      %p265 = scmp.lt.s32.totalorder %s14, 1
      %s266 = scalar_select %p265, %s14, 1
      %s267 = smul.addr %s266, 5
      %s268 = smul.addr %s267, 8
      %s269 = scalar_lea.vmem %s3, %s268
      // Predicated region
      $region33: #{wav2vec2_ctc_logits.11} parent=31 // pred_check
        %p270 = pneg %p100
      $region34: #{wav2vec2_ctc_logits.11} parent=31 // pred_check_branch
        %272 = sbr.rel (%p270) target = $region36
      $region35: #{wav2vec2_ctc_logits.11} parent=31 // pred_region
        _
      $region36: #{wav2vec2_ctc_logits.11} parent=31 // pred_fallthru
        _
    $region32: #{wav2vec2_ctc_logits.11} parent=5 // pred_fallthru
      _
    %p273 = scmp.le.s32.totalorder 2, %s9
    // Predicated region
    $region37: #{wav2vec2_ctc_logits.11} parent=5 // pred_check
      %p274 = pneg %p273
    $region38: #{wav2vec2_ctc_logits.11} parent=5 // pred_check_branch
      %276 = sbr.rel (%p274) target = $region40
    $region39: #{wav2vec2_ctc_logits.11} parent=5 // pred_region
      %s277 = ssub.s32 %s9, 2
      // Predicated region
      $region41: #{wav2vec2_ctc_logits.11} parent=39 // pred_check
        %p278 = pneg %p106
      $region42: #{wav2vec2_ctc_logits.11} parent=39 // pred_check_branch
        %280 = sbr.rel (%p278) target = $region44
      $region43: #{wav2vec2_ctc_logits.11} parent=39 // pred_region
        %p281 = scmp.lt.s32.totalorder %s15, 1
        %s282 = scalar_select %p281, %s15, 1
        %s283 = smul.addr %s282, 5
        %s284 = smul.addr %s283, 8
        %s285 = scalar_lea.vmem %s3, %s284
      $region44: #{wav2vec2_ctc_logits.11} parent=39 // pred_fallthru
        _
    $region40: #{wav2vec2_ctc_logits.11} parent=5 // pred_fallthru
      _
  $region6: #{wav2vec2_ctc_logits.11} parent=0 // loop_footer
    %s13 = sadd.s32 1, %s9
  $region7: #{wav2vec2_ctc_logits.11} parent=0 // loop_footer_branch
    %8 = sbr.rel target = $region3
  $region8: #{wav2vec2_ctc_logits.11} parent=0 // loop_exit
    _

// kernel: wav2vec2_ctc_logits.9
$region0: #{wav2vec2_ctc_logits.9}
  #allocation0 [shape = 'u32[]', space=smem, size = 0x4, offset = 0x4, fixed_abs, tag = 'smem constant byte address 0x4 - core index']
  #allocation1 [shape = 'u32[144,128]{1,0:T(1,128)}', space=vmem, size = 0x12000, scoped, tag = 'internal scratch']
  %s0 = inlined_call_operand.vmem [shape: f32[2,39,32], index: 0, kind: input, shape index: {}]
  %s1 = inlined_call_operand.vmem [shape: f32[32,96], index: 1, kind: input, shape index: {}]
  %s2 = inlined_call_operand.vmem [shape: f32[1,96], index: 2, kind: input, shape index: {}]
  %s3 = inlined_call_operand.vmem [shape: f32[32,32], index: 3, kind: input, shape index: {}]
  %s4 = inlined_call_operand.vmem [shape: f32[1,32], index: 4, kind: input, shape index: {}]
  %s5 = inlined_call_operand.vmem [shape: f32[1,32], index: 5, kind: input, shape index: {}]
  %s6 = inlined_call_operand.vmem [shape: f32[1,32], index: 6, kind: input, shape index: {}]
  %s7 = inlined_call_operand.vmem [shape: f32[32,64], index: 7, kind: input, shape index: {}]
  %s8 = inlined_call_operand.vmem [shape: f32[1,64], index: 8, kind: input, shape index: {}]
  %s9 = inlined_call_operand.vmem [shape: f32[64,32], index: 9, kind: input, shape index: {}]
  %s10 = inlined_call_operand.vmem [shape: f32[1,32], index: 10, kind: input, shape index: {}]
  %s11 = inlined_call_operand.vmem [shape: f32[1,32], index: 11, kind: input, shape index: {}]
  %s12 = inlined_call_operand.vmem [shape: f32[1,32], index: 12, kind: input, shape index: {}]
  %s13 = inlined_call_operand.vmem [shape: f32[2,39,32], index: 13, kind: output, shape index: {}]
  %s14 = sld [smem:[#allocation0]]
  $region85: #{wav2vec2_ctc_logits.9} parent=0
    _
  %s16 = ssub.s32 1, %s14
  %s17 = scalar_select 0, %s16, %s14
  loop: start=0, step=1, limit=4
  $region2: #{wav2vec2_ctc_logits.9} parent=0 // loop_pre_header
    _
  $region3: #{wav2vec2_ctc_logits.9} parent=0 // loop_header
    %s19 = sphi 0, %s23
    %p20 = scmp.ge.s32.totalorder %s19, 4
    %s29 = sphi 0, %s31
    %s32 = sphi 0, %s29
    %s33 = sphi 0, %s32
    %s49 = sphi 0, %s33
    %s53 = sphi 0, %s53
    %s55 = sphi 0, %s53
    %s56 = sphi 0, %s55
    %s70 = sphi 0, %s56
    %s74 = sphi 0, %s74
    %s76 = sphi 0, %s74
    %s77 = sphi 0, %s76
    %s91 = sphi 0, %s77
    %s95 = sphi 0, %s95
    %s97 = sphi 0, %s95
    %s98 = sphi 0, %s97
    %s112 = sphi 0, %s98
    %s116 = sphi 0, %s116
    %s118 = sphi 0, %s116
    %s119 = sphi 0, %s118
    %s133 = sphi 0, %s119
    %s137 = sphi 0, %s137
    %s139 = sphi 0, %s137
    %s140 = sphi 0, %s139
    %s154 = sphi 0, %s140
    %s158 = sphi 0, %s158
    %s160 = sphi 0, %s158
    %s161 = sphi 0, %s160
    %s175 = sphi 0, %s161
    %s179 = sphi 0, %s179
    %s181 = sphi 0, %s179
    %s182 = sphi 0, %s181
    %s196 = sphi 0, %s182
    %s200 = sphi 0, %s200
    %s202 = sphi 0, %s200
    %s203 = sphi 0, %s202
    %s217 = sphi 0, %s203
    %s221 = sphi 0, %s221
    %s223 = sphi 0, %s221
    %s224 = sphi 0, %s223
    %s238 = sphi 0, %s224
    %s242 = sphi 0, %s242
    %s244 = sphi 0, %s242
    %s245 = sphi 0, %s244
    %s259 = sphi 0, %s245
    %s263 = sphi 0, %s263
    %s265 = sphi 0, %s263
    %s266 = sphi 0, %s265
    %s280 = sphi 0, %s266
    %s284 = sphi 0, %s284
    %s286 = sphi 0, %s284
    %s287 = sphi 0, %s286
    %s301 = sphi 0, %s287
    %s307 = sphi 0, %s309
    %s310 = sphi 0, %s307
    %s311 = sphi 0, %s310
    %s327 = sphi 0, %s311
  $region4: #{wav2vec2_ctc_logits.9} parent=0 // loop_header_branch
    %22 = sbr.rel (%p20) target = $region8
  $region5: #{wav2vec2_ctc_logits.9} parent=0 // loop_body
    %s24 = ssub.s32 %s19, 1
    %s25 = ssub.s32 %s19, 2
    %s26 = sadd.s32 %s19, 1
    %s27 = ssub.s32 %s19, %s26
    %p28 = scmp.eq.s32.totalorder %s27, 0
    %s30 = sadd.s32 %s29, 1
    %s31 = scalar_select %p28, %s29, %s30
    %p34 = pneg %p28
    %p35 = scmp.eq.s32.totalorder %s19, 1
    %p36 = por %p34, %p35
    %p37 = scmp.ne.s32.totalorder %s29, %s32
    %p38 = scmp.eq.s32.totalorder %s19, 0
    %p39 = por %p37, %p38
    %p40 = scmp.ne.s32.totalorder %s29, %s32
    %p41 = scmp.eq.s32.totalorder %s24, 1
    %p42 = por %p40, %p41
    %p43 = scmp.ne.s32.totalorder %s32, %s33
    %p44 = scmp.eq.s32.totalorder %s24, 0
    %p45 = por %p43, %p44
    %p46 = scmp.ne.s32.totalorder %s32, %s33
    %p47 = scmp.eq.s32.totalorder %s25, 1
    %p48 = por %p46, %p47
    %p50 = scmp.ne.s32.totalorder %s33, %s49
    %p51 = scmp.eq.s32.totalorder %s25, 0
    %p52 = por %p50, %p51
    %s54 = sadd.s32 %s53, 1
    %p57 = scmp.eq.s32.totalorder %s19, 1
    %p58 = scmp.ne.s32.totalorder %s53, %s55
    %p59 = scmp.eq.s32.totalorder %s19, 0
    %p60 = por %p58, %p59
    %p61 = scmp.ne.s32.totalorder %s53, %s55
    %p62 = scmp.eq.s32.totalorder %s24, 1
    %p63 = por %p61, %p62
    %p64 = scmp.ne.s32.totalorder %s55, %s56
    %p65 = scmp.eq.s32.totalorder %s24, 0
    %p66 = por %p64, %p65
    %p67 = scmp.ne.s32.totalorder %s55, %s56
    %p68 = scmp.eq.s32.totalorder %s25, 1
    %p69 = por %p67, %p68
    %p71 = scmp.ne.s32.totalorder %s56, %s70
    %p72 = scmp.eq.s32.totalorder %s25, 0
    %p73 = por %p71, %p72
    %s75 = sadd.s32 %s74, 1
    %p78 = scmp.eq.s32.totalorder %s19, 1
    %p79 = scmp.ne.s32.totalorder %s74, %s76
    %p80 = scmp.eq.s32.totalorder %s19, 0
    %p81 = por %p79, %p80
    %p82 = scmp.ne.s32.totalorder %s74, %s76
    %p83 = scmp.eq.s32.totalorder %s24, 1
    %p84 = por %p82, %p83
    %p85 = scmp.ne.s32.totalorder %s76, %s77
    %p86 = scmp.eq.s32.totalorder %s24, 0
    %p87 = por %p85, %p86
    %p88 = scmp.ne.s32.totalorder %s76, %s77
    %p89 = scmp.eq.s32.totalorder %s25, 1
    %p90 = por %p88, %p89
    %p92 = scmp.ne.s32.totalorder %s77, %s91
    %p93 = scmp.eq.s32.totalorder %s25, 0
    %p94 = por %p92, %p93
    %s96 = sadd.s32 %s95, 1
    %p99 = scmp.eq.s32.totalorder %s19, 1
    %p100 = scmp.ne.s32.totalorder %s95, %s97
    %p101 = scmp.eq.s32.totalorder %s19, 0
    %p102 = por %p100, %p101
    %p103 = scmp.ne.s32.totalorder %s95, %s97
    %p104 = scmp.eq.s32.totalorder %s24, 1
    %p105 = por %p103, %p104
    %p106 = scmp.ne.s32.totalorder %s97, %s98
    %p107 = scmp.eq.s32.totalorder %s24, 0
    %p108 = por %p106, %p107
    %p109 = scmp.ne.s32.totalorder %s97, %s98
    %p110 = scmp.eq.s32.totalorder %s25, 1
    %p111 = por %p109, %p110
    %p113 = scmp.ne.s32.totalorder %s98, %s112
    %p114 = scmp.eq.s32.totalorder %s25, 0
    %p115 = por %p113, %p114
    %s117 = sadd.s32 %s116, 1
    %p120 = scmp.eq.s32.totalorder %s19, 1
    %p121 = scmp.ne.s32.totalorder %s116, %s118
    %p122 = scmp.eq.s32.totalorder %s19, 0
    %p123 = por %p121, %p122
    %p124 = scmp.ne.s32.totalorder %s116, %s118
    %p125 = scmp.eq.s32.totalorder %s24, 1
    %p126 = por %p124, %p125
    %p127 = scmp.ne.s32.totalorder %s118, %s119
    %p128 = scmp.eq.s32.totalorder %s24, 0
    %p129 = por %p127, %p128
    %p130 = scmp.ne.s32.totalorder %s118, %s119
    %p131 = scmp.eq.s32.totalorder %s25, 1
    %p132 = por %p130, %p131
    %p134 = scmp.ne.s32.totalorder %s119, %s133
    %p135 = scmp.eq.s32.totalorder %s25, 0
    %p136 = por %p134, %p135
    %s138 = sadd.s32 %s137, 1
    %p141 = scmp.eq.s32.totalorder %s19, 1
    %p142 = scmp.ne.s32.totalorder %s137, %s139
    %p143 = scmp.eq.s32.totalorder %s19, 0
    %p144 = por %p142, %p143
    %p145 = scmp.ne.s32.totalorder %s137, %s139
    %p146 = scmp.eq.s32.totalorder %s24, 1
    %p147 = por %p145, %p146
    %p148 = scmp.ne.s32.totalorder %s139, %s140
    %p149 = scmp.eq.s32.totalorder %s24, 0
    %p150 = por %p148, %p149
    %p151 = scmp.ne.s32.totalorder %s139, %s140
    %p152 = scmp.eq.s32.totalorder %s25, 1
    %p153 = por %p151, %p152
    %p155 = scmp.ne.s32.totalorder %s140, %s154
    %p156 = scmp.eq.s32.totalorder %s25, 0
    %p157 = por %p155, %p156
    %s159 = sadd.s32 %s158, 1
    %p162 = scmp.eq.s32.totalorder %s19, 1
    %p163 = scmp.ne.s32.totalorder %s158, %s160
    %p164 = scmp.eq.s32.totalorder %s19, 0
    %p165 = por %p163, %p164
    %p166 = scmp.ne.s32.totalorder %s158, %s160
    %p167 = scmp.eq.s32.totalorder %s24, 1
    %p168 = por %p166, %p167
    %p169 = scmp.ne.s32.totalorder %s160, %s161
    %p170 = scmp.eq.s32.totalorder %s24, 0
    %p171 = por %p169, %p170
    %p172 = scmp.ne.s32.totalorder %s160, %s161
    %p173 = scmp.eq.s32.totalorder %s25, 1
    %p174 = por %p172, %p173
    %p176 = scmp.ne.s32.totalorder %s161, %s175
    %p177 = scmp.eq.s32.totalorder %s25, 0
    %p178 = por %p176, %p177
    %s180 = sadd.s32 %s179, 1
    %p183 = scmp.eq.s32.totalorder %s19, 1
    %p184 = scmp.ne.s32.totalorder %s179, %s181
    %p185 = scmp.eq.s32.totalorder %s19, 0
    %p186 = por %p184, %p185
    %p187 = scmp.ne.s32.totalorder %s179, %s181
    %p188 = scmp.eq.s32.totalorder %s24, 1
    %p189 = por %p187, %p188
    %p190 = scmp.ne.s32.totalorder %s181, %s182
    %p191 = scmp.eq.s32.totalorder %s24, 0
    %p192 = por %p190, %p191
    %p193 = scmp.ne.s32.totalorder %s181, %s182
    %p194 = scmp.eq.s32.totalorder %s25, 1
    %p195 = por %p193, %p194
    %p197 = scmp.ne.s32.totalorder %s182, %s196
    %p198 = scmp.eq.s32.totalorder %s25, 0
    %p199 = por %p197, %p198
    %s201 = sadd.s32 %s200, 1
    %p204 = scmp.eq.s32.totalorder %s19, 1
    %p205 = scmp.ne.s32.totalorder %s200, %s202
    %p206 = scmp.eq.s32.totalorder %s19, 0
    %p207 = por %p205, %p206
    %p208 = scmp.ne.s32.totalorder %s200, %s202
    %p209 = scmp.eq.s32.totalorder %s24, 1
    %p210 = por %p208, %p209
    %p211 = scmp.ne.s32.totalorder %s202, %s203
    %p212 = scmp.eq.s32.totalorder %s24, 0
    %p213 = por %p211, %p212
    %p214 = scmp.ne.s32.totalorder %s202, %s203
    %p215 = scmp.eq.s32.totalorder %s25, 1
    %p216 = por %p214, %p215
    %p218 = scmp.ne.s32.totalorder %s203, %s217
    %p219 = scmp.eq.s32.totalorder %s25, 0
    %p220 = por %p218, %p219
    %s222 = sadd.s32 %s221, 1
    %p225 = scmp.eq.s32.totalorder %s19, 1
    %p226 = scmp.ne.s32.totalorder %s221, %s223
    %p227 = scmp.eq.s32.totalorder %s19, 0
    %p228 = por %p226, %p227
    %p229 = scmp.ne.s32.totalorder %s221, %s223
    %p230 = scmp.eq.s32.totalorder %s24, 1
    %p231 = por %p229, %p230
    %p232 = scmp.ne.s32.totalorder %s223, %s224
    %p233 = scmp.eq.s32.totalorder %s24, 0
    %p234 = por %p232, %p233
    %p235 = scmp.ne.s32.totalorder %s223, %s224
    %p236 = scmp.eq.s32.totalorder %s25, 1
    %p237 = por %p235, %p236
    %p239 = scmp.ne.s32.totalorder %s224, %s238
    %p240 = scmp.eq.s32.totalorder %s25, 0
    %p241 = por %p239, %p240
    %s243 = sadd.s32 %s242, 1
    %p246 = scmp.eq.s32.totalorder %s19, 1
    %p247 = scmp.ne.s32.totalorder %s242, %s244
    %p248 = scmp.eq.s32.totalorder %s19, 0
    %p249 = por %p247, %p248
    %p250 = scmp.ne.s32.totalorder %s242, %s244
    %p251 = scmp.eq.s32.totalorder %s24, 1
    %p252 = por %p250, %p251
    %p253 = scmp.ne.s32.totalorder %s244, %s245
    %p254 = scmp.eq.s32.totalorder %s24, 0
    %p255 = por %p253, %p254
    %p256 = scmp.ne.s32.totalorder %s244, %s245
    %p257 = scmp.eq.s32.totalorder %s25, 1
    %p258 = por %p256, %p257
    %p260 = scmp.ne.s32.totalorder %s245, %s259
    %p261 = scmp.eq.s32.totalorder %s25, 0
    %p262 = por %p260, %p261
    %s264 = sadd.s32 %s263, 1
    %p267 = scmp.eq.s32.totalorder %s19, 1
    %p268 = scmp.ne.s32.totalorder %s263, %s265
    %p269 = scmp.eq.s32.totalorder %s19, 0
    %p270 = por %p268, %p269
    %p271 = scmp.ne.s32.totalorder %s263, %s265
    %p272 = scmp.eq.s32.totalorder %s24, 1
    %p273 = por %p271, %p272
    %p274 = scmp.ne.s32.totalorder %s265, %s266
    %p275 = scmp.eq.s32.totalorder %s24, 0
    %p276 = por %p274, %p275
    %p277 = scmp.ne.s32.totalorder %s265, %s266
    %p278 = scmp.eq.s32.totalorder %s25, 1
    %p279 = por %p277, %p278
    %p281 = scmp.ne.s32.totalorder %s266, %s280
    %p282 = scmp.eq.s32.totalorder %s25, 0
    %p283 = por %p281, %p282
    %s285 = sadd.s32 %s284, 1
    %p288 = scmp.eq.s32.totalorder %s19, 1
    %p289 = scmp.ne.s32.totalorder %s284, %s286
    %p290 = scmp.eq.s32.totalorder %s19, 0
    %p291 = por %p289, %p290
    %p292 = scmp.ne.s32.totalorder %s284, %s286
    %p293 = scmp.eq.s32.totalorder %s24, 1
    %p294 = por %p292, %p293
    %p295 = scmp.ne.s32.totalorder %s286, %s287
    %p296 = scmp.eq.s32.totalorder %s24, 0
    %p297 = por %p295, %p296
    %p298 = scmp.ne.s32.totalorder %s286, %s287
    %p299 = scmp.eq.s32.totalorder %s25, 1
    %p300 = por %p298, %p299
    %p302 = scmp.ne.s32.totalorder %s287, %s301
    %p303 = scmp.eq.s32.totalorder %s25, 0
    %p304 = por %p302, %p303
    %s305 = ssub.s32 %s19, %s26
    %p306 = scmp.eq.s32.totalorder %s305, 0
    %s308 = sadd.s32 %s307, 1
    %s309 = scalar_select %p306, %s307, %s308
    %p312 = pneg %p306
    %p313 = scmp.eq.s32.totalorder %s19, 1
    %p314 = por %p312, %p313
    %p315 = scmp.ne.s32.totalorder %s307, %s310
    %p316 = scmp.eq.s32.totalorder %s19, 0
    %p317 = por %p315, %p316
    %p318 = scmp.ne.s32.totalorder %s307, %s310
    %p319 = scmp.eq.s32.totalorder %s24, 1
    %p320 = por %p318, %p319
    %p321 = scmp.ne.s32.totalorder %s310, %s311
    %p322 = scmp.eq.s32.totalorder %s24, 0
    %p323 = por %p321, %p322
    %p324 = scmp.ne.s32.totalorder %s310, %s311
    %p325 = scmp.eq.s32.totalorder %s25, 1
    %p326 = por %p324, %p325
    %p328 = scmp.ne.s32.totalorder %s311, %s327
    %p329 = scmp.eq.s32.totalorder %s25, 0
    %p330 = por %p328, %p329
    %p331 = scmp.le.s32.totalorder 1, %s19
    %p332 = scmp.lt.s32.totalorder %s19, 3
    %p333 = pnand %p331, %p332
    %p334 = pneg %p333
    // Predicated region
    $region9: #{wav2vec2_ctc_logits.9} parent=5 // pred_check
      _
    $region10: #{wav2vec2_ctc_logits.9} parent=5 // pred_check_branch
      %336 = sbr.rel (%p333) target = $region12
    $region11: #{wav2vec2_ctc_logits.9} parent=5 // pred_region
      %s337 = ssub.s32 %s19, 1
      // Predicated region
      $region13: #{wav2vec2_ctc_logits.9} parent=11 // pred_check
        %p338 = pneg %p66
      $region14: #{wav2vec2_ctc_logits.9} parent=11 // pred_check_branch
        %340 = sbr.rel (%p338) target = $region16
      $region15: #{wav2vec2_ctc_logits.9} parent=11 // pred_region
        _
      $region16: #{wav2vec2_ctc_logits.9} parent=11 // pred_fallthru
        _
      // Predicated region
      $region17: #{wav2vec2_ctc_logits.9} parent=11 // pred_check
        %p341 = pneg %p87
      $region18: #{wav2vec2_ctc_logits.9} parent=11 // pred_check_branch
        %343 = sbr.rel (%p341) target = $region20
      $region19: #{wav2vec2_ctc_logits.9} parent=11 // pred_region
        _
      $region20: #{wav2vec2_ctc_logits.9} parent=11 // pred_fallthru
        _
      // Predicated region
      $region21: #{wav2vec2_ctc_logits.9} parent=11 // pred_check
        %p344 = pneg %p108
      $region22: #{wav2vec2_ctc_logits.9} parent=11 // pred_check_branch
        %346 = sbr.rel (%p344) target = $region24
      $region23: #{wav2vec2_ctc_logits.9} parent=11 // pred_region
        _
      $region24: #{wav2vec2_ctc_logits.9} parent=11 // pred_fallthru
        _
      // Predicated region
      $region25: #{wav2vec2_ctc_logits.9} parent=11 // pred_check
        %p347 = pneg %p129
      $region26: #{wav2vec2_ctc_logits.9} parent=11 // pred_check_branch
        %349 = sbr.rel (%p347) target = $region28
      $region27: #{wav2vec2_ctc_logits.9} parent=11 // pred_region
        _
      $region28: #{wav2vec2_ctc_logits.9} parent=11 // pred_fallthru
        _
      // Predicated region
      $region29: #{wav2vec2_ctc_logits.9} parent=11 // pred_check
        %p350 = pneg %p150
      $region30: #{wav2vec2_ctc_logits.9} parent=11 // pred_check_branch
        %352 = sbr.rel (%p350) target = $region32
      $region31: #{wav2vec2_ctc_logits.9} parent=11 // pred_region
        _
      $region32: #{wav2vec2_ctc_logits.9} parent=11 // pred_fallthru
        _
      // Predicated region
      $region33: #{wav2vec2_ctc_logits.9} parent=11 // pred_check
        %p353 = pneg %p171
      $region34: #{wav2vec2_ctc_logits.9} parent=11 // pred_check_branch
        %355 = sbr.rel (%p353) target = $region36
      $region35: #{wav2vec2_ctc_logits.9} parent=11 // pred_region
        _
      $region36: #{wav2vec2_ctc_logits.9} parent=11 // pred_fallthru
        _
      // Predicated region
      $region37: #{wav2vec2_ctc_logits.9} parent=11 // pred_check
        %p356 = pneg %p192
      $region38: #{wav2vec2_ctc_logits.9} parent=11 // pred_check_branch
        %358 = sbr.rel (%p356) target = $region40
      $region39: #{wav2vec2_ctc_logits.9} parent=11 // pred_region
        _
      $region40: #{wav2vec2_ctc_logits.9} parent=11 // pred_fallthru
        _
      // Predicated region
      $region41: #{wav2vec2_ctc_logits.9} parent=11 // pred_check
        %p359 = pneg %p213
      $region42: #{wav2vec2_ctc_logits.9} parent=11 // pred_check_branch
        %361 = sbr.rel (%p359) target = $region44
      $region43: #{wav2vec2_ctc_logits.9} parent=11 // pred_region
        _
      $region44: #{wav2vec2_ctc_logits.9} parent=11 // pred_fallthru
        _
      // Predicated region
      $region45: #{wav2vec2_ctc_logits.9} parent=11 // pred_check
        %p362 = pneg %p234
      $region46: #{wav2vec2_ctc_logits.9} parent=11 // pred_check_branch
        %364 = sbr.rel (%p362) target = $region48
      $region47: #{wav2vec2_ctc_logits.9} parent=11 // pred_region
        _
      $region48: #{wav2vec2_ctc_logits.9} parent=11 // pred_fallthru
        _
      // Predicated region
      $region49: #{wav2vec2_ctc_logits.9} parent=11 // pred_check
        %p365 = pneg %p255
      $region50: #{wav2vec2_ctc_logits.9} parent=11 // pred_check_branch
        %367 = sbr.rel (%p365) target = $region52
      $region51: #{wav2vec2_ctc_logits.9} parent=11 // pred_region
        _
      $region52: #{wav2vec2_ctc_logits.9} parent=11 // pred_fallthru
        _
      // Predicated region
      $region53: #{wav2vec2_ctc_logits.9} parent=11 // pred_check
        %p368 = pneg %p276
      $region54: #{wav2vec2_ctc_logits.9} parent=11 // pred_check_branch
        %370 = sbr.rel (%p368) target = $region56
      $region55: #{wav2vec2_ctc_logits.9} parent=11 // pred_region
        _
      $region56: #{wav2vec2_ctc_logits.9} parent=11 // pred_fallthru
        _
      // Predicated region
      $region57: #{wav2vec2_ctc_logits.9} parent=11 // pred_check
        %p371 = pneg %p297
      $region58: #{wav2vec2_ctc_logits.9} parent=11 // pred_check_branch
        %373 = sbr.rel (%p371) target = $region60
      $region59: #{wav2vec2_ctc_logits.9} parent=11 // pred_region
        _
      $region60: #{wav2vec2_ctc_logits.9} parent=11 // pred_fallthru
        _
    $region12: #{wav2vec2_ctc_logits.9} parent=5 // pred_fallthru
      _
    %p374 = scmp.lt.s32.totalorder %s19, 2
    // Predicated region
    $region61: #{wav2vec2_ctc_logits.9} parent=5 // pred_check
      %p375 = pneg %p374
    $region62: #{wav2vec2_ctc_logits.9} parent=5 // pred_check_branch
      %377 = sbr.rel (%p375) target = $region64
    $region63: #{wav2vec2_ctc_logits.9} parent=5 // pred_region
      // Predicated region
      $region65: #{wav2vec2_ctc_logits.9} parent=63 // pred_check
        %p378 = pneg %p39
      $region66: #{wav2vec2_ctc_logits.9} parent=63 // pred_check_branch
        %380 = sbr.rel (%p378) target = $region68
      $region67: #{wav2vec2_ctc_logits.9} parent=63 // pred_region
        %p381 = scmp.lt.s32.totalorder %s19, 1
        %s382 = scalar_select %p381, %s19, 1
        %s383 = smul.addr %s382, 5
        %s384 = smul.addr %s383, 8
        %s385 = scalar_lea.vmem %s0, %s384
      $region68: #{wav2vec2_ctc_logits.9} parent=63 // pred_fallthru
        _
    $region64: #{wav2vec2_ctc_logits.9} parent=5 // pred_fallthru
      _
    %p386 = scmp.le.s32.totalorder 1, %s19
    %p387 = scmp.lt.s32.totalorder %s19, 3
    %p388 = pnand %p386, %p387
    %p389 = pneg %p388
    // Predicated region
    $region69: #{wav2vec2_ctc_logits.9} parent=5 // pred_check
      _
    $region70: #{wav2vec2_ctc_logits.9} parent=5 // pred_check_branch
      %391 = sbr.rel (%p388) target = $region72
    $region71: #{wav2vec2_ctc_logits.9} parent=5 // pred_region
      %s392 = ssub.s32 %s19, 1
      %p393 = scmp.lt.s32.totalorder %s24, 1
      %s394 = scalar_select %p393, %s24, 1
      %s395 = smul.addr %s394, 5
      %s396 = smul.addr %s395, 8
      %s397 = scalar_lea.vmem %s0, %s396
      %p398 = pneg %p45
      %p399 = pneg %p42
      %p400 = pneg %p66
      %p401 = pneg %p63
      %p402 = pneg %p87
      %p403 = pneg %p84
      %p404 = pneg %p108
      %p405 = pneg %p105
      %p406 = pneg %p129
      %p407 = pneg %p126
      %p408 = pneg %p150
      %p409 = pneg %p147
      %p410 = pneg %p171
      %p411 = pneg %p168
      %p412 = pneg %p192
      %p413 = pneg %p189
      %p414 = pneg %p213
      %p415 = pneg %p210
      %p416 = pneg %p234
      %p417 = pneg %p231
      %p418 = pneg %p255
      %p419 = pneg %p252
      %p420 = pneg %p276
      %p421 = pneg %p273
      %p422 = pneg %p297
      %p423 = pneg %p294
      %p424 = pneg %p323
      %p425 = pneg %p320
      %p426 = scmp.lt.s32.totalorder %s24, 1
      %s427 = scalar_select %p426, %s24, 1
      %s428 = smul.addr %s427, 5
      %s429 = smul.addr %s428, 8
      %s430 = scalar_lea.vmem %s13, %s429
      %p431 = scmp.lt.s32.totalorder %s24, 1
      %s432 = scalar_select %p431, %s24, 1
      %s433 = smul.addr %s432, 5
      %s434 = smul.addr %s433, 8
      %s435 = scalar_lea.vmem %s0, %s434
      %p436 = scmp.lt.s32.totalorder %s24, 1
      %s437 = scalar_select %p436, %s24, 1
      %s438 = smul.addr %s437, 5
      %s439 = smul.addr %s438, 8
      %s440 = scalar_lea.vmem %s13, %s439
      %v442 = vld [vmem:[%s435] sm:$0xff]
      %v443 = vld [vmem:[%s435 + $0x8] sm:$0xff]
      %v444 = vld [vmem:[%s435 + $0x10] sm:$0xff]
      %v445 = vld [vmem:[%s435 + $0x18] sm:$0xff]
      %v446 = vld [vmem:[%s435 + $0x20] sm:$0x7f]
      %v447 = vld [vmem:[%s1] sm:$0xff]
      %v448 = vld [vmem:[%s1 + $0x8] sm:$0xff]
      %v449 = vld [vmem:[%s1 + $0x10] sm:$0xff]
      %v450 = vld [vmem:[%s1 + $0x18] sm:$0xff]
      %v451 = vpack.c.bf16 %v443, %v442
      %v452 = vpack.c.bf16 %v445, %v444
      %v453 = vpack.c.bf16 %v446, %v446
      %v454 = vpack.c.bf16 %v448, %v447
      %v455 = vpack.c.bf16 %v450, %v449
      %v456 = vld [vmem:[%s2] sm:$0x1]
      %v458 = vlaneseq
      %v459 = vshrl.u32 %v458, 7
      %v460 = vsub.s32 0, %v459
      %v461 = vrot.slane %v456, %v460
      %vm463 = vcmask 261120
      %v465 = vsel %vm463, %v451, 0
      %v468 = vsel %vm463, %v452, 0
      %v471 = vsel %vm463, %v453, 0
      %473 = vmatprep.subr.bf16.mxu0 0
      %474 = vmatpush1.bf16.msra.mxu0 %v454
      %475 = vmatprep.subr.bf16.mxu0 0
      %476 = vmatpush1.bf16.msra.mxu0 %v455
      %477 = vmatprep.subr.bf16.mxu0 0
      %478 = vmatpush1.bf16.msra.mxu0 0
      %479 = vmatprep.subr.bf16.mxu0 0
      %480 = vmatpush1.bf16.msra.mxu0 0
      %481 = vmatprep.subr.bf16.mxu0 0
      %482 = vmatpush1.bf16.msra.mxu0 0
      %483 = vmatprep.subr.bf16.mxu0 0
      %484 = vmatpush1.bf16.msra.mxu0 0
      %485 = vmatprep.subr.bf16.mxu0 0
      %486 = vmatpush1.bf16.msra.mxu0 0
      %487 = vmatprep.subr.bf16.mxu0 0
      %488 = vmatpush1.bf16.msra.mxu0 0
      %489 = vmatprep.subr.bf16.mxu0 0
      %490 = vmatpush1.bf16.msra.mxu0 0
      %491 = vmatprep.subr.bf16.mxu0 0
      %492 = vmatpush1.bf16.msra.mxu0 0
      %493 = vmatprep.subr.bf16.mxu0 0
      %494 = vmatpush1.bf16.msra.mxu0 0
      %495 = vmatprep.subr.bf16.mxu0 0
      %496 = vmatpush1.bf16.msra.mxu0 0
      %497 = vmatprep.subr.bf16.mxu0 0
      %498 = vmatpush1.bf16.msra.mxu0 0
      %499 = vmatprep.subr.bf16.mxu0 0
      %500 = vmatpush1.bf16.msra.mxu0 0
      %501 = vmatprep.subr.bf16.mxu0 0
      %502 = vmatpush1.bf16.msra.mxu0 0
      %503 = vmatprep.subr.bf16.mxu0 0
      %504 = vmatpush1.bf16.msra.mxu0 0
      %505 = vmatprep.mubr.bf16.mxu0 0
      %506 = vmatmul.mubr.bf16.gmra.mrb[0].mxu0 %v465
      %v507 = vpop.f32.mrb[0].mxu0
      %v508 = vadd.f32 %v461, %v507
      %v509 = vpop.f32.mrb[0].mxu0
      %v510 = vpop.f32.mrb[0].mxu0
      %v511 = vadd.f32 %v461, %v510
      %v512 = vpop.f32.mrb[0].mxu0
      %513 = vmatprep.mubr.bf16.mxu0 0
      %514 = vmatmul.mubr.bf16.gmra.mrb[0].mxu0 %v468
      %v515 = vpop.f32.mrb[0].mxu0
      %v516 = vadd.f32 %v461, %v515
      %v517 = vpop.f32.mrb[0].mxu0
      %v518 = vpop.f32.mrb[0].mxu0
      %v519 = vadd.f32 %v461, %v518
      %v520 = vpop.f32.mrb[0].mxu0
      %521 = vmatprep.mubr.bf16.mxu0 0
      %522 = vmatmul.mubr.bf16.gmra.mrb[0].mxu0 %v471
      %v523 = vpop.f32.mrb[0].mxu0
      %v524 = vadd.f32 %v461, %v523
      %v525 = vpop.f32.mrb[0].mxu0
      %v526 = vpop.f32.mrb[0].mxu0
      %v527 = vpop.f32.mrb[0].mxu0
      %528 = vdwg.mxu0
      %v529 = vpack.c.bf16 %v511, %v508
      %v530 = vpack.c.bf16 %v519, %v516
      %v531 = vpack.c.bf16 %v524, %v524
      %535 = vrot.lane.b32.xlu0 %v529, 96
      %v536 = vpop.permute.xlu0 %535
      %537 = vrot.lane.b32.xlu0 %v530, 96
      %v538 = vpop.permute.xlu0 %537
      %539 = vrot.lane.b32.xlu0 %v531, 96
      %v540 = vpop.permute.xlu0 %539
      %vm541 = vcmask 64512
      %v543 = vsel %vm541, %v529, 0
      %v546 = vsel %vm541, %v530, 0
      %v549 = vsel %vm541, %v531, 0
      %v552 = vsel %vm541, %v536, 0
      %v555 = vsel %vm541, %v538, 0
      %v558 = vsel %vm541, %v540, 0
      %560 = vmatprep.subr.bf16.mxu0 0
      %561 = vmatpush1.bf16.xpose.msra.mxu0 %v552
      %562 = vmatprep.subr.bf16.mxu0 0
      %563 = vmatpush1.bf16.xpose.msra.mxu0 %v555
      %564 = vmatprep.subr.bf16.mxu0 0
      %565 = vmatpush1.bf16.xpose.msra.mxu0 %v558
      %566 = vmatprep.subr.bf16.mxu0 0
      %567 = vmatpush1.bf16.xpose.msra.mxu0 0
      %568 = vmatprep.subr.bf16.mxu0 0
      %569 = vmatpush1.bf16.xpose.msra.mxu0 0
      %570 = vmatprep.subr.bf16.mxu0 0
      %571 = vmatpush1.bf16.xpose.msra.mxu0 0
      %572 = vmatprep.subr.bf16.mxu0 0
      %573 = vmatpush1.bf16.xpose.msra.mxu0 0
      %574 = vmatprep.subr.bf16.mxu0 0
      %575 = vmatpush1.bf16.xpose.msra.mxu0 0
      %576 = vmatprep.subr.bf16.mxu0 0
      %577 = vmatpush1.bf16.xpose.msra.mxu0 0
      %578 = vmatprep.subr.bf16.mxu0 0
      %579 = vmatpush1.bf16.xpose.msra.mxu0 0
      %580 = vmatprep.subr.bf16.mxu0 0
      %581 = vmatpush1.bf16.xpose.msra.mxu0 0
      %582 = vmatprep.subr.bf16.mxu0 0
      %583 = vmatpush1.bf16.xpose.msra.mxu0 0
      %584 = vmatprep.subr.bf16.mxu0 0
      %585 = vmatpush1.bf16.xpose.msra.mxu0 0
      %586 = vmatprep.subr.bf16.mxu0 0
      %587 = vmatpush1.bf16.xpose.msra.mxu0 0
      %588 = vmatprep.subr.bf16.mxu0 0
      %589 = vmatpush1.bf16.xpose.msra.mxu0 0
      %590 = vmatprep.subr.bf16.mxu0 0
      %591 = vmatpush1.bf16.xpose.msra.mxu0 0
      %592 = vmatprep.mubr.bf16.mxu0 0
      %593 = vmatmul.mubr.bf16.gmra.mrb[0].mxu0 %v543
      %v594 = vpop.f32.mrb[0].mxu0
      %v595 = vadd.f32 0.0, %v594
      %v596 = vpop.f32.mrb[0].mxu0
      %v597 = vpop.f32.mrb[0].mxu0
      %v598 = vadd.f32 0.0, %v597
      %v599 = vpop.f32.mrb[0].mxu0
      %600 = vmatprep.mubr.bf16.mxu0 0
      %601 = vmatmul.mubr.bf16.gmra.mrb[0].mxu0 %v546
      %v602 = vpop.f32.mrb[0].mxu0
      %v603 = vadd.f32 0.0, %v602
      %v604 = vpop.f32.mrb[0].mxu0
      %v605 = vpop.f32.mrb[0].mxu0
      %v606 = vadd.f32 0.0, %v605
      %v607 = vpop.f32.mrb[0].mxu0
      %608 = vmatprep.mubr.bf16.mxu0 0
      %609 = vmatmul.mubr.bf16.gmra.mrb[0].mxu0 %v549
      %v610 = vpop.f32.mrb[0].mxu0
      %v611 = vadd.f32 0.0, %v610
      %v612 = vpop.f32.mrb[0].mxu0
      %v613 = vpop.f32.mrb[0].mxu0
      %v614 = vpop.f32.mrb[0].mxu0
      %615 = vdwg.mxu0
      %v616 = vmul.f32 %v595, 0.35355338
      %v617 = vmul.f32 %v598, 0.35355338
      %v618 = vmul.f32 %v603, 0.35355338
      %v619 = vmul.f32 %v606, 0.35355338
      %v620 = vmul.f32 %v611, 0.35355338
      %vm621 = vcmask 318464
      %v622 = vsel %vm621, %v616, -inf
      %623 = vmax.xlane.f32.xlu0 %v622
      %v624 = vpop.xlane.xlu0 %623
      %v625 = vsel %vm621, %v617, -inf
      %626 = vmax.xlane.f32.xlu0 %v625
      %v627 = vpop.xlane.xlu0 %626
      %v628 = vsel %vm621, %v618, -inf
      %629 = vmax.xlane.f32.xlu0 %v628
      %v630 = vpop.xlane.xlu0 %629
      %v631 = vsel %vm621, %v619, -inf
      %632 = vmax.xlane.f32.xlu0 %v631
      %v633 = vpop.xlane.xlu0 %632
      %vm634 = vcmask 317440
      %v635 = vsel %vm634, %v620, -inf
      %636 = vmax.xlane.f32.xlu0 %v635
      %v637 = vpop.xlane.xlu0 %636
      %v638 = vsub.f32 %v616, %v624
      %v639 = vsub.f32 %v617, %v627
      %v640 = vsub.f32 %v618, %v630
      %v641 = vsub.f32 %v619, %v633
      %v642 = vsub.f32 %v620, %v637
      %v643 = vmul.f32 %v638, 1.442695
      %v644 = vpow.pop %v643
      %v645 = vmul.f32 %v639, 1.442695
      %v646 = vpow.pop %v645
      %v647 = vmul.f32 %v640, 1.442695
      %v648 = vpow.pop %v647
      %v649 = vmul.f32 %v641, 1.442695
      %v650 = vpow.pop %v649
      %v651 = vmul.f32 %v642, 1.442695
      %v652 = vpow.pop %v651
      %v653 = vsel %vm621, %v644, 0.0
      %654 = vadd.xlane.f32.xlu0 %v653
      %v655 = vpop.xlane.xlu0 %654
      %v656 = vsel %vm621, %v646, 0.0
      %657 = vadd.xlane.f32.xlu0 %v656
      %v658 = vpop.xlane.xlu0 %657
      %v659 = vsel %vm621, %v648, 0.0
      %660 = vadd.xlane.f32.xlu0 %v659
      %v661 = vpop.xlane.xlu0 %660
      %v662 = vsel %vm621, %v650, 0.0
      %663 = vadd.xlane.f32.xlu0 %v662
      %v664 = vpop.xlane.xlu0 %663
      %v665 = vsel %vm634, %v652, 0.0
      %666 = vadd.xlane.f32.xlu0 %v665
      %v667 = vpop.xlane.xlu0 %666
      %v668 = vrcp.pop %v655
      %v669 = vrcp.pop %v658
      %v670 = vrcp.pop %v661
      %v671 = vrcp.pop %v664
      %v672 = vrcp.pop %v667
      %v673 = vmul.f32 %v644, %v668
      %v674 = vmul.f32 %v646, %v669
      %v675 = vmul.f32 %v648, %v670
      %v676 = vmul.f32 %v650, %v671
      %v677 = vmul.f32 %v652, %v672
      %v678 = vpack.c.bf16 %v674, %v673
      %v679 = vpack.c.bf16 %v676, %v675
      %v680 = vpack.c.bf16 %v677, %v677
      %681 = vrot.lane.b32.xlu0 %v529, 64
      %v682 = vpop.permute.xlu0 %681
      %683 = vrot.lane.b32.xlu0 %v530, 64
      %v684 = vpop.permute.xlu0 %683
      %685 = vrot.lane.b32.xlu0 %v531, 64
      %v686 = vpop.permute.xlu0 %685
      %v690 = vsel %vm621, %v678, 0
      %v693 = vsel %vm621, %v679, 0
      %v696 = vsel %vm621, %v680, 0
      %vm698 = vcmask 1042432
      %vm699 = vcmask 1043456
      %v700 = vsel %vm698, 4294967295, 65535
      %v701 = vsel %vm699, %v700, 0
      %v703 = vand.u32 %v686, %v701
      %705 = vmatprep.subr.bf16.mxu0 0
      %706 = vmatpush1.bf16.msra.mxu0 %v682
      %707 = vmatprep.subr.bf16.mxu0 0
      %708 = vmatpush1.bf16.msra.mxu0 %v684
      %709 = vmatprep.subr.bf16.mxu0 0
      %710 = vmatpush1.bf16.msra.mxu0 %v703
      %711 = vmatprep.subr.bf16.mxu0 0
      %712 = vmatpush1.bf16.msra.mxu0 0
      %713 = vmatprep.subr.bf16.mxu0 0
      %714 = vmatpush1.bf16.msra.mxu0 0
      %715 = vmatprep.subr.bf16.mxu0 0
      %716 = vmatpush1.bf16.msra.mxu0 0
      %717 = vmatprep.subr.bf16.mxu0 0
      %718 = vmatpush1.bf16.msra.mxu0 0
      %719 = vmatprep.subr.bf16.mxu0 0
      %720 = vmatpush1.bf16.msra.mxu0 0
      %721 = vmatprep.subr.bf16.mxu0 0
      %722 = vmatpush1.bf16.msra.mxu0 0
      %723 = vmatprep.subr.bf16.mxu0 0
      %724 = vmatpush1.bf16.msra.mxu0 0
      %725 = vmatprep.subr.bf16.mxu0 0
      %726 = vmatpush1.bf16.msra.mxu0 0
      %727 = vmatprep.subr.bf16.mxu0 0
      %728 = vmatpush1.bf16.msra.mxu0 0
      %729 = vmatprep.subr.bf16.mxu0 0
      %730 = vmatpush1.bf16.msra.mxu0 0
      %731 = vmatprep.subr.bf16.mxu0 0
      %732 = vmatpush1.bf16.msra.mxu0 0
      %733 = vmatprep.subr.bf16.mxu0 0
      %734 = vmatpush1.bf16.msra.mxu0 0
      %735 = vmatprep.subr.bf16.mxu0 0
      %736 = vmatpush1.bf16.msra.mxu0 0
      %737 = vmatprep.mubr.bf16.mxu0 0
      %738 = vmatmul.mubr.bf16.gmra.mrb[0].mxu0 %v690
      %v739 = vpop.f32.mrb[0].mxu0
      %v740 = vadd.f32 0.0, %v739
      %v741 = vpop.f32.mrb[0].mxu0
      %v742 = vpop.f32.mrb[0].mxu0
      %v743 = vadd.f32 0.0, %v742
      %v744 = vpop.f32.mrb[0].mxu0
      %745 = vmatprep.mubr.bf16.mxu0 0
      %746 = vmatmul.mubr.bf16.gmra.mrb[0].mxu0 %v693
      %v747 = vpop.f32.mrb[0].mxu0
      %v748 = vadd.f32 0.0, %v747
      %v749 = vpop.f32.mrb[0].mxu0
      %v750 = vpop.f32.mrb[0].mxu0
      %v751 = vadd.f32 0.0, %v750
      %v752 = vpop.f32.mrb[0].mxu0
      %753 = vmatprep.mubr.bf16.mxu0 0
      %754 = vmatmul.mubr.bf16.gmra.mrb[0].mxu0 %v696
      %v755 = vpop.f32.mrb[0].mxu0
      %v756 = vadd.f32 0.0, %v755
      %v757 = vpop.f32.mrb[0].mxu0
      %v758 = vpop.f32.mrb[0].mxu0
      %v759 = vpop.f32.mrb[0].mxu0
      %760 = vdwg.mxu0
      %v761 = vld [vmem:[%s3] sm:$0xff]
      %v762 = vpack.c.bf16 %v743, %v740
      %v763 = vpack.c.bf16 %v751, %v748
      %v764 = vpack.c.bf16 %v756, %v756
      %v765 = vpack.c.bf16 %v761, %v761
      %766 = vrot.lane.b32.xlu0 %v529, 120
      %v767 = vpop.permute.xlu0 %766
      %768 = vrot.lane.b32.xlu0 %v530, 120
      %v769 = vpop.permute.xlu0 %768
      %770 = vrot.lane.b32.xlu0 %v531, 120
      %v771 = vpop.permute.xlu0 %770
      %772 = vrot.lane.b32.xlu0 %v529, 88
      %v773 = vpop.permute.xlu0 %772
      %774 = vrot.lane.b32.xlu0 %v530, 88
      %v775 = vpop.permute.xlu0 %774
      %776 = vrot.lane.b32.xlu0 %v531, 88
      %v777 = vpop.permute.xlu0 %776
      %v779 = vsel %vm541, %v767, 0
      %v782 = vsel %vm541, %v769, 0
      %v785 = vsel %vm541, %v771, 0
      %v788 = vsel %vm541, %v773, 0
      %v791 = vsel %vm541, %v775, 0
      %v794 = vsel %vm541, %v777, 0
      %796 = vmatprep.subr.bf16.mxu0 0
      %797 = vmatpush1.bf16.xpose.msra.mxu0 %v788
      %798 = vmatprep.subr.bf16.mxu0 0
      %799 = vmatpush1.bf16.xpose.msra.mxu0 %v791
      %800 = vmatprep.subr.bf16.mxu0 0
      %801 = vmatpush1.bf16.xpose.msra.mxu0 %v794
      %802 = vmatprep.subr.bf16.mxu0 0
      %803 = vmatpush1.bf16.xpose.msra.mxu0 0
      %804 = vmatprep.subr.bf16.mxu0 0
      %805 = vmatpush1.bf16.xpose.msra.mxu0 0
      %806 = vmatprep.subr.bf16.mxu0 0
      %807 = vmatpush1.bf16.xpose.msra.mxu0 0
      %808 = vmatprep.subr.bf16.mxu0 0
      %809 = vmatpush1.bf16.xpose.msra.mxu0 0
      %810 = vmatprep.subr.bf16.mxu0 0
      %811 = vmatpush1.bf16.xpose.msra.mxu0 0
      %812 = vmatprep.subr.bf16.mxu0 0
      %813 = vmatpush1.bf16.xpose.msra.mxu0 0
      %814 = vmatprep.subr.bf16.mxu0 0
      %815 = vmatpush1.bf16.xpose.msra.mxu0 0
      %816 = vmatprep.subr.bf16.mxu0 0
      %817 = vmatpush1.bf16.xpose.msra.mxu0 0
      %818 = vmatprep.subr.bf16.mxu0 0
      %819 = vmatpush1.bf16.xpose.msra.mxu0 0
      %820 = vmatprep.subr.bf16.mxu0 0
      %821 = vmatpush1.bf16.xpose.msra.mxu0 0
      %822 = vmatprep.subr.bf16.mxu0 0
      %823 = vmatpush1.bf16.xpose.msra.mxu0 0
      %824 = vmatprep.subr.bf16.mxu0 0
      %825 = vmatpush1.bf16.xpose.msra.mxu0 0
      %826 = vmatprep.subr.bf16.mxu0 0
      %827 = vmatpush1.bf16.xpose.msra.mxu0 0
      %828 = vmatprep.mubr.bf16.mxu0 0
      %829 = vmatmul.mubr.bf16.gmra.mrb[0].mxu0 %v779
      %v830 = vpop.f32.mrb[0].mxu0
      %v831 = vadd.f32 0.0, %v830
      %v832 = vpop.f32.mrb[0].mxu0
      %v833 = vpop.f32.mrb[0].mxu0
      %v834 = vadd.f32 0.0, %v833
      %v835 = vpop.f32.mrb[0].mxu0
      %836 = vmatprep.mubr.bf16.mxu0 0
      %837 = vmatmul.mubr.bf16.gmra.mrb[0].mxu0 %v782
      %v838 = vpop.f32.mrb[0].mxu0
      %v839 = vadd.f32 0.0, %v838
      %v840 = vpop.f32.mrb[0].mxu0
      %v841 = vpop.f32.mrb[0].mxu0
      %v842 = vadd.f32 0.0, %v841
      %v843 = vpop.f32.mrb[0].mxu0
      %844 = vmatprep.mubr.bf16.mxu0 0
      %845 = vmatmul.mubr.bf16.gmra.mrb[0].mxu0 %v785
      %v846 = vpop.f32.mrb[0].mxu0
      %v847 = vadd.f32 0.0, %v846
      %v848 = vpop.f32.mrb[0].mxu0
      %v849 = vpop.f32.mrb[0].mxu0
      %v850 = vpop.f32.mrb[0].mxu0
      %851 = vdwg.mxu0
      %v852 = vmul.f32 %v831, 0.35355338
      %v853 = vmul.f32 %v834, 0.35355338
      %v854 = vmul.f32 %v839, 0.35355338
      %v855 = vmul.f32 %v842, 0.35355338
      %v856 = vmul.f32 %v847, 0.35355338
      %v857 = vsel %vm621, %v852, -inf
      %858 = vmax.xlane.f32.xlu0 %v857
      %v859 = vpop.xlane.xlu0 %858
      %v860 = vsel %vm621, %v853, -inf
      %861 = vmax.xlane.f32.xlu0 %v860
      %v862 = vpop.xlane.xlu0 %861
      %v863 = vsel %vm621, %v854, -inf
      %864 = vmax.xlane.f32.xlu0 %v863
      %v865 = vpop.xlane.xlu0 %864
      %v866 = vsel %vm621, %v855, -inf
      %867 = vmax.xlane.f32.xlu0 %v866
      %v868 = vpop.xlane.xlu0 %867
      %v869 = vsel %vm634, %v856, -inf
      %870 = vmax.xlane.f32.xlu0 %v869
      %v871 = vpop.xlane.xlu0 %870
      %v872 = vsub.f32 %v852, %v859
      %v873 = vsub.f32 %v853, %v862
      %v874 = vsub.f32 %v854, %v865
      %v875 = vsub.f32 %v855, %v868
      %v876 = vsub.f32 %v856, %v871
      %v877 = vmul.f32 %v872, 1.442695
      %v878 = vpow.pop %v877
      %v879 = vmul.f32 %v873, 1.442695
      %v880 = vpow.pop %v879
      %v881 = vmul.f32 %v874, 1.442695
      %v882 = vpow.pop %v881
      %v883 = vmul.f32 %v875, 1.442695
      %v884 = vpow.pop %v883
      %v885 = vmul.f32 %v876, 1.442695
      %v886 = vpow.pop %v885
      %v887 = vsel %vm621, %v878, 0.0
      %888 = vadd.xlane.f32.xlu0 %v887
      %v889 = vpop.xlane.xlu0 %888
      %v890 = vsel %vm621, %v880, 0.0
      %891 = vadd.xlane.f32.xlu0 %v890
      %v892 = vpop.xlane.xlu0 %891
      %v893 = vsel %vm621, %v882, 0.0
      %894 = vadd.xlane.f32.xlu0 %v893
      %v895 = vpop.xlane.xlu0 %894
      %v896 = vsel %vm621, %v884, 0.0
      %897 = vadd.xlane.f32.xlu0 %v896
      %v898 = vpop.xlane.xlu0 %897
      %v899 = vsel %vm634, %v886, 0.0
      %900 = vadd.xlane.f32.xlu0 %v899
      %v901 = vpop.xlane.xlu0 %900
      %v902 = vrcp.pop %v889
      %v903 = vrcp.pop %v892
      %v904 = vrcp.pop %v895
      %v905 = vrcp.pop %v898
      %v906 = vrcp.pop %v901
      %v907 = vmul.f32 %v878, %v902
      %v908 = vmul.f32 %v880, %v903
      %v909 = vmul.f32 %v882, %v904
      %v910 = vmul.f32 %v884, %v905
      %v911 = vmul.f32 %v886, %v906
      %v912 = vpack.c.bf16 %v908, %v907
      %v913 = vpack.c.bf16 %v910, %v909
      %v914 = vpack.c.bf16 %v911, %v911
      %915 = vrot.lane.b32.xlu0 %v529, 56
      %v916 = vpop.permute.xlu0 %915
      %917 = vrot.lane.b32.xlu0 %v530, 56
      %v918 = vpop.permute.xlu0 %917
      %919 = vrot.lane.b32.xlu0 %v531, 56
      %v920 = vpop.permute.xlu0 %919
      %v924 = vsel %vm621, %v912, 0
      %v927 = vsel %vm621, %v913, 0
      %v930 = vsel %vm621, %v914, 0
      %v933 = vand.u32 %v920, %v701
      %935 = vmatprep.subr.bf16.mxu0 0
      %936 = vmatpush1.bf16.msra.mxu0 %v916
      %937 = vmatprep.subr.bf16.mxu0 0
      %938 = vmatpush1.bf16.msra.mxu0 %v918
      %939 = vmatprep.subr.bf16.mxu0 0
      %940 = vmatpush1.bf16.msra.mxu0 %v933
      %941 = vmatprep.subr.bf16.mxu0 0
      %942 = vmatpush1.bf16.msra.mxu0 0
      %943 = vmatprep.subr.bf16.mxu0 0
      %944 = vmatpush1.bf16.msra.mxu0 0
      %945 = vmatprep.subr.bf16.mxu0 0
      %946 = vmatpush1.bf16.msra.mxu0 0
      %947 = vmatprep.subr.bf16.mxu0 0
      %948 = vmatpush1.bf16.msra.mxu0 0
      %949 = vmatprep.subr.bf16.mxu0 0
      %950 = vmatpush1.bf16.msra.mxu0 0
      %951 = vmatprep.subr.bf16.mxu0 0
      %952 = vmatpush1.bf16.msra.mxu0 0
      %953 = vmatprep.subr.bf16.mxu0 0
      %954 = vmatpush1.bf16.msra.mxu0 0
      %955 = vmatprep.subr.bf16.mxu0 0
      %956 = vmatpush1.bf16.msra.mxu0 0
      %957 = vmatprep.subr.bf16.mxu0 0
      %958 = vmatpush1.bf16.msra.mxu0 0
      %959 = vmatprep.subr.bf16.mxu0 0
      %960 = vmatpush1.bf16.msra.mxu0 0
      %961 = vmatprep.subr.bf16.mxu0 0
      %962 = vmatpush1.bf16.msra.mxu0 0
      %963 = vmatprep.subr.bf16.mxu0 0
      %964 = vmatpush1.bf16.msra.mxu0 0
      %965 = vmatprep.subr.bf16.mxu0 0
      %966 = vmatpush1.bf16.msra.mxu0 0
      %967 = vmatprep.mubr.bf16.mxu0 0
      %968 = vmatmul.mubr.bf16.gmra.mrb[0].mxu0 %v924
      %v969 = vpop.f32.mrb[0].mxu0
      %v970 = vadd.f32 0.0, %v969
      %v971 = vpop.f32.mrb[0].mxu0
      %v972 = vpop.f32.mrb[0].mxu0
      %v973 = vadd.f32 0.0, %v972
      %v974 = vpop.f32.mrb[0].mxu0
      %975 = vmatprep.mubr.bf16.mxu0 0
      %976 = vmatmul.mubr.bf16.gmra.mrb[0].mxu0 %v927
      %v977 = vpop.f32.mrb[0].mxu0
      %v978 = vadd.f32 0.0, %v977
      %v979 = vpop.f32.mrb[0].mxu0
      %v980 = vpop.f32.mrb[0].mxu0
      %v981 = vadd.f32 0.0, %v980
      %v982 = vpop.f32.mrb[0].mxu0
      %983 = vmatprep.mubr.bf16.mxu0 0
      %984 = vmatmul.mubr.bf16.gmra.mrb[0].mxu0 %v930
      %v985 = vpop.f32.mrb[0].mxu0
      %v986 = vadd.f32 0.0, %v985
      %v987 = vpop.f32.mrb[0].mxu0
      %v988 = vpop.f32.mrb[0].mxu0
      %v989 = vpop.f32.mrb[0].mxu0
      %990 = vdwg.mxu0
      %v991 = vld [vmem:[%s3 + $0x8] sm:$0xff]
      %v992 = vpack.c.bf16 %v973, %v970
      %v993 = vpack.c.bf16 %v981, %v978
      %v994 = vpack.c.bf16 %v986, %v986
      %v995 = vpack.c.bf16 %v991, %v991
      %v997 = vsel %vm541, %v992, 0
      %v1000 = vsel %vm541, %v993, 0
      %v1003 = vsel %vm541, %v994, 0
      %v1006 = vsel %vm699, %v995, 0
      %1008 = vmatprep.subr.bf16.mxu0 0
      %1009 = vmatpush1.bf16.msra.mxu0 %v1006
      %1010 = vmatprep.subr.bf16.mxu0 0
      %1011 = vmatpush1.bf16.msra.mxu0 0
      %1012 = vmatprep.subr.bf16.mxu0 0
      %1013 = vmatpush1.bf16.msra.mxu0 0
      %1014 = vmatprep.subr.bf16.mxu0 0
      %1015 = vmatpush1.bf16.msra.mxu0 0
      %1016 = vmatprep.subr.bf16.mxu0 0
      %1017 = vmatpush1.bf16.msra.mxu0 0
      %1018 = vmatprep.subr.bf16.mxu0 0
      %1019 = vmatpush1.bf16.msra.mxu0 0
      %1020 = vmatprep.subr.bf16.mxu0 0
      %1021 = vmatpush1.bf16.msra.mxu0 0
      %1022 = vmatprep.subr.bf16.mxu0 0
      %1023 = vmatpush1.bf16.msra.mxu0 0
      %1024 = vmatprep.subr.bf16.mxu0 0
      %1025 = vmatpush1.bf16.msra.mxu0 0
      %1026 = vmatprep.subr.bf16.mxu0 0
      %1027 = vmatpush1.bf16.msra.mxu0 0
      %1028 = vmatprep.subr.bf16.mxu0 0
      %1029 = vmatpush1.bf16.msra.mxu0 0
      %1030 = vmatprep.subr.bf16.mxu0 0
      %1031 = vmatpush1.bf16.msra.mxu0 0
      %1032 = vmatprep.subr.bf16.mxu0 0
      %1033 = vmatpush1.bf16.msra.mxu0 0
      %1034 = vmatprep.subr.bf16.mxu0 0
      %1035 = vmatpush1.bf16.msra.mxu0 0
      %1036 = vmatprep.subr.bf16.mxu0 0
      %1037 = vmatpush1.bf16.msra.mxu0 0
      %1038 = vmatprep.subr.bf16.mxu0 0
      %1039 = vmatpush1.bf16.msra.mxu0 0
      %1040 = vmatprep.mubr.bf16.mxu0 0
      %1041 = vmatmul.mubr.bf16.gmra.mrb[0].mxu0 %v997
      %v1042 = vpop.f32.mrb[0].mxu0
      %v1043 = vadd.f32 0.0, %v1042
      %v1044 = vpop.f32.mrb[0].mxu0
      %v1045 = vpop.f32.mrb[0].mxu0
      %v1046 = vadd.f32 0.0, %v1045
      %v1047 = vpop.f32.mrb[0].mxu0
      %1048 = vmatprep.mubr.bf16.mxu0 0
      %1049 = vmatmul.mubr.bf16.gmra.mrb[0].mxu0 %v1000
      %v1050 = vpop.f32.mrb[0].mxu0
      %v1051 = vadd.f32 0.0, %v1050
      %v1052 = vpop.f32.mrb[0].mxu0
      %v1053 = vpop.f32.mrb[0].mxu0
      %v1054 = vadd.f32 0.0, %v1053
      %v1055 = vpop.f32.mrb[0].mxu0
      %1056 = vmatprep.mubr.bf16.mxu0 0
      %1057 = vmatmul.mubr.bf16.gmra.mrb[0].mxu0 %v1003
      %v1058 = vpop.f32.mrb[0].mxu0
      %v1059 = vadd.f32 0.0, %v1058
      %v1060 = vpop.f32.mrb[0].mxu0
      %v1061 = vpop.f32.mrb[0].mxu0
      %v1062 = vpop.f32.mrb[0].mxu0
      %1063 = vdwg.mxu0
      %v1065 = vsel %vm541, %v762, 0
      %v1068 = vsel %vm541, %v763, 0
      %v1071 = vsel %vm541, %v764, 0
      %v1074 = vsel %vm699, %v765, 0
      %1076 = vmatprep.subr.bf16.mxu0 0
      %1077 = vmatpush1.bf16.msra.mxu0 %v1074
      %1078 = vmatprep.subr.bf16.mxu0 0
      %1079 = vmatpush1.bf16.msra.mxu0 0
      %1080 = vmatprep.subr.bf16.mxu0 0
      %1081 = vmatpush1.bf16.msra.mxu0 0
      %1082 = vmatprep.subr.bf16.mxu0 0
      %1083 = vmatpush1.bf16.msra.mxu0 0
      %1084 = vmatprep.subr.bf16.mxu0 0
      %1085 = vmatpush1.bf16.msra.mxu0 0
      %1086 = vmatprep.subr.bf16.mxu0 0
      %1087 = vmatpush1.bf16.msra.mxu0 0
      %1088 = vmatprep.subr.bf16.mxu0 0
      %1089 = vmatpush1.bf16.msra.mxu0 0
      %1090 = vmatprep.subr.bf16.mxu0 0
      %1091 = vmatpush1.bf16.msra.mxu0 0
      %1092 = vmatprep.subr.bf16.mxu0 0
      %1093 = vmatpush1.bf16.msra.mxu0 0
      %1094 = vmatprep.subr.bf16.mxu0 0
      %1095 = vmatpush1.bf16.msra.mxu0 0
      %1096 = vmatprep.subr.bf16.mxu0 0
      %1097 = vmatpush1.bf16.msra.mxu0 0
      %1098 = vmatprep.subr.bf16.mxu0 0
      %1099 = vmatpush1.bf16.msra.mxu0 0
      %1100 = vmatprep.subr.bf16.mxu0 0
      %1101 = vmatpush1.bf16.msra.mxu0 0
      %1102 = vmatprep.subr.bf16.mxu0 0
      %1103 = vmatpush1.bf16.msra.mxu0 0
      %1104 = vmatprep.subr.bf16.mxu0 0
      %1105 = vmatpush1.bf16.msra.mxu0 0
      %1106 = vmatprep.subr.bf16.mxu0 0
      %1107 = vmatpush1.bf16.msra.mxu0 0
      %1108 = vmatprep.mubr.bf16.mxu0 0
      %1109 = vmatmul.mubr.bf16.gmra.mrb[0].mxu0 %v1065
      %v1110 = vpop.f32.mrb[0].mxu0
      %v1111 = vadd.f32 %v1043, %v1110
      %v1112 = vpop.f32.mrb[0].mxu0
      %v1113 = vpop.f32.mrb[0].mxu0
      %v1114 = vadd.f32 %v1046, %v1113
      %v1115 = vpop.f32.mrb[0].mxu0
      %1116 = vmatprep.mubr.bf16.mxu0 0
      %1117 = vmatmul.mubr.bf16.gmra.mrb[0].mxu0 %v1068
      %v1118 = vpop.f32.mrb[0].mxu0
      %v1119 = vadd.f32 %v1051, %v1118
      %v1120 = vpop.f32.mrb[0].mxu0
      %v1121 = vpop.f32.mrb[0].mxu0
      %v1122 = vadd.f32 %v1054, %v1121
      %v1123 = vpop.f32.mrb[0].mxu0
      %1124 = vmatprep.mubr.bf16.mxu0 0
      %1125 = vmatmul.mubr.bf16.gmra.mrb[0].mxu0 %v1071
      %v1126 = vpop.f32.mrb[0].mxu0
      %v1127 = vadd.f32 %v1059, %v1126
      %v1128 = vpop.f32.mrb[0].mxu0
      %v1129 = vpop.f32.mrb[0].mxu0
      %v1130 = vpop.f32.mrb[0].mxu0
      %1131 = vdwg.mxu0
      %1132 = vrot.lane.b32.xlu0 %v529, 112
      %v1133 = vpop.permute.xlu0 %1132
      %1134 = vrot.lane.b32.xlu0 %v530, 112
      %v1135 = vpop.permute.xlu0 %1134
      %1136 = vrot.lane.b32.xlu0 %v531, 112
      %v1137 = vpop.permute.xlu0 %1136
      %1138 = vrot.lane.b32.xlu0 %v529, 80
      %v1139 = vpop.permute.xlu0 %1138
      %1140 = vrot.lane.b32.xlu0 %v530, 80
      %v1141 = vpop.permute.xlu0 %1140
      %1142 = vrot.lane.b32.xlu0 %v531, 80
      %v1143 = vpop.permute.xlu0 %1142
      %v1145 = vsel %vm541, %v1133, 0
      %v1148 = vsel %vm541, %v1135, 0
      %v1151 = vsel %vm541, %v1137, 0
      %v1154 = vsel %vm541, %v1139, 0
      %v1157 = vsel %vm541, %v1141, 0
      %v1160 = vsel %vm541, %v1143, 0
      %1162 = vmatprep.subr.bf16.mxu0 0
      %1163 = vmatpush1.bf16.xpose.msra.mxu0 %v1154
      %1164 = vmatprep.subr.bf16.mxu0 0
      %1165 = vmatpush1.bf16.xpose.msra.mxu0 %v1157
      %1166 = vmatprep.subr.bf16.mxu0 0
      %1167 = vmatpush1.bf16.xpose.msra.mxu0 %v1160
      %1168 = vmatprep.subr.bf16.mxu0 0
      %1169 = vmatpush1.bf16.xpose.msra.mxu0 0
      %1170 = vmatprep.subr.bf16.mxu0 0
      %1171 = vmatpush1.bf16.xpose.msra.mxu0 0
      %1172 = vmatprep.subr.bf16.mxu0 0
      %1173 = vmatpush1.bf16.xpose.msra.mxu0 0
      %1174 = vmatprep.subr.bf16.mxu0 0
      %1175 = vmatpush1.bf16.xpose.msra.mxu0 0
      %1176 = vmatprep.subr.bf16.mxu0 0
      %1177 = vmatpush1.bf16.xpose.msra.mxu0 0
      %1178 = vmatprep.subr.bf16.mxu0 0
      %1179 = vmatpush1.bf16.xpose.msra.mxu0 0
      %1180 = vmatprep.subr.bf16.mxu0 0
      %1181 = vmatpush1.bf16.xpose.msra.mxu0 0
      %1182 = vmatprep.subr.bf16.mxu0 0
      %1183 = vmatpush1.bf16.xpose.msra.mxu0 0
      %1184 = vmatprep.subr.bf16.mxu0 0
      %1185 = vmatpush1.bf16.xpose.msra.mxu0 0
      %1186 = vmatprep.subr.bf16.mxu0 0
      %1187 = vmatpush1.bf16.xpose.msra.mxu0 0
      %1188 = vmatprep.subr.bf16.mxu0 0
      %1189 = vmatpush1.bf16.xpose.msra.mxu0 0
      %1190 = vmatprep.subr.bf16.mxu0 0
      %1191 = vmatpush1.bf16.xpose.msra.mxu0 0
      %1192 = vmatprep.subr.bf16.mxu0 0
      %1193 = vmatpush1.bf16.xpose.msra.mxu0 0
      %1194 = vmatprep.mubr.bf16.mxu0 0
      %1195 = vmatmul.mubr.bf16.gmra.mrb[0].mxu0 %v1145
      %v1196 = vpop.f32.mrb[0].mxu0
      %v1197 = vadd.f32 0.0, %v1196
      %v1198 = vpop.f32.mrb[0].mxu0
      %v1199 = vpop.f32.mrb[0].mxu0
      %v1200 = vadd.f32 0.0, %v1199
      %v1201 = vpop.f32.mrb[0].mxu0
      %1202 = vmatprep.mubr.bf16.mxu0 0
      %1203 = vmatmul.mubr.bf16.gmra.mrb[0].mxu0 %v1148
      %v1204 = vpop.f32.mrb[0].mxu0
      %v1205 = vadd.f32 0.0, %v1204
      %v1206 = vpop.f32.mrb[0].mxu0
      %v1207 = vpop.f32.mrb[0].mxu0
      %v1208 = vadd.f32 0.0, %v1207
      %v1209 = vpop.f32.mrb[0].mxu0
      %1210 = vmatprep.mubr.bf16.mxu0 0
      %1211 = vmatmul.mubr.bf16.gmra.mrb[0].mxu0 %v1151
      %v1212 = vpop.f32.mrb[0].mxu0
      %v1213 = vadd.f32 0.0, %v1212
      %v1214 = vpop.f32.mrb[0].mxu0
      %v1215 = vpop.f32.mrb[0].mxu0
      %v1216 = vpop.f32.mrb[0].mxu0
      %1217 = vdwg.mxu0
      %v1218 = vmul.f32 %v1197, 0.35355338
      %v1219 = vmul.f32 %v1200, 0.35355338
      %v1220 = vmul.f32 %v1205, 0.35355338
      %v1221 = vmul.f32 %v1208, 0.35355338
      %v1222 = vmul.f32 %v1213, 0.35355338
      %v1223 = vsel %vm621, %v1218, -inf
      %1224 = vmax.xlane.f32.xlu0 %v1223
      %v1225 = vpop.xlane.xlu0 %1224
      %v1226 = vsel %vm621, %v1219, -inf
      %1227 = vmax.xlane.f32.xlu0 %v1226
      %v1228 = vpop.xlane.xlu0 %1227
      %v1229 = vsel %vm621, %v1220, -inf
      %1230 = vmax.xlane.f32.xlu0 %v1229
      %v1231 = vpop.xlane.xlu0 %1230
      %v1232 = vsel %vm621, %v1221, -inf
      %1233 = vmax.xlane.f32.xlu0 %v1232
      %v1234 = vpop.xlane.xlu0 %1233
      %v1235 = vsel %vm634, %v1222, -inf
      %1236 = vmax.xlane.f32.xlu0 %v1235
      %v1237 = vpop.xlane.xlu0 %1236
      %v1238 = vsub.f32 %v1218, %v1225
      %v1239 = vsub.f32 %v1219, %v1228
      %v1240 = vsub.f32 %v1220, %v1231
      %v1241 = vsub.f32 %v1221, %v1234
      %v1242 = vsub.f32 %v1222, %v1237
      %v1243 = vmul.f32 %v1238, 1.442695
      %v1244 = vpow.pop %v1243
      %v1245 = vmul.f32 %v1239, 1.442695
      %v1246 = vpow.pop %v1245
      %v1247 = vmul.f32 %v1240, 1.442695
      %v1248 = vpow.pop %v1247
      %v1249 = vmul.f32 %v1241, 1.442695
      %v1250 = vpow.pop %v1249
      %v1251 = vmul.f32 %v1242, 1.442695
      %v1252 = vpow.pop %v1251
      %v1253 = vsel %vm621, %v1244, 0.0
      %1254 = vadd.xlane.f32.xlu0 %v1253
      %v1255 = vpop.xlane.xlu0 %1254
      %v1256 = vsel %vm621, %v1246, 0.0
      %1257 = vadd.xlane.f32.xlu0 %v1256
      %v1258 = vpop.xlane.xlu0 %1257
      %v1259 = vsel %vm621, %v1248, 0.0
      %1260 = vadd.xlane.f32.xlu0 %v1259
      %v1261 = vpop.xlane.xlu0 %1260
      %v1262 = vsel %vm621, %v1250, 0.0
      %1263 = vadd.xlane.f32.xlu0 %v1262
      %v1264 = vpop.xlane.xlu0 %1263
      %v1265 = vsel %vm634, %v1252, 0.0
      %1266 = vadd.xlane.f32.xlu0 %v1265
      %v1267 = vpop.xlane.xlu0 %1266
      %v1268 = vrcp.pop %v1255
      %v1269 = vrcp.pop %v1258
      %v1270 = vrcp.pop %v1261
      %v1271 = vrcp.pop %v1264
      %v1272 = vrcp.pop %v1267
      %v1273 = vmul.f32 %v1244, %v1268
      %v1274 = vmul.f32 %v1246, %v1269
      %v1275 = vmul.f32 %v1248, %v1270
      %v1276 = vmul.f32 %v1250, %v1271
      %v1277 = vmul.f32 %v1252, %v1272
      %v1278 = vpack.c.bf16 %v1274, %v1273
      %v1279 = vpack.c.bf16 %v1276, %v1275
      %v1280 = vpack.c.bf16 %v1277, %v1277
      %1281 = vrot.lane.b32.xlu0 %v529, 48
      %v1282 = vpop.permute.xlu0 %1281
      %1283 = vrot.lane.b32.xlu0 %v530, 48
      %v1284 = vpop.permute.xlu0 %1283
      %1285 = vrot.lane.b32.xlu0 %v531, 48
      %v1286 = vpop.permute.xlu0 %1285
      %v1290 = vsel %vm621, %v1278, 0
      %v1293 = vsel %vm621, %v1279, 0
      %v1296 = vsel %vm621, %v1280, 0
      %v1299 = vand.u32 %v1286, %v701
      %1301 = vmatprep.subr.bf16.mxu0 0
      %1302 = vmatpush1.bf16.msra.mxu0 %v1282
      %1303 = vmatprep.subr.bf16.mxu0 0
      %1304 = vmatpush1.bf16.msra.mxu0 %v1284
      %1305 = vmatprep.subr.bf16.mxu0 0
      %1306 = vmatpush1.bf16.msra.mxu0 %v1299
      %1307 = vmatprep.subr.bf16.mxu0 0
      %1308 = vmatpush1.bf16.msra.mxu0 0
      %1309 = vmatprep.subr.bf16.mxu0 0
      %1310 = vmatpush1.bf16.msra.mxu0 0
      %1311 = vmatprep.subr.bf16.mxu0 0
      %1312 = vmatpush1.bf16.msra.mxu0 0
      %1313 = vmatprep.subr.bf16.mxu0 0
      %1314 = vmatpush1.bf16.msra.mxu0 0
      %1315 = vmatprep.subr.bf16.mxu0 0
      %1316 = vmatpush1.bf16.msra.mxu0 0
      %1317 = vmatprep.subr.bf16.mxu0 0
      %1318 = vmatpush1.bf16.msra.mxu0 0
      %1319 = vmatprep.subr.bf16.mxu0 0
      %1320 = vmatpush1.bf16.msra.mxu0 0
      %1321 = vmatprep.subr.bf16.mxu0 0
      %1322 = vmatpush1.bf16.msra.mxu0 0
      %1323 = vmatprep.subr.bf16.mxu0 0
      %1324 = vmatpush1.bf16.msra.mxu0 0
      %1325 = vmatprep.subr.bf16.mxu0 0
      %1326 = vmatpush1.bf16.msra.mxu0 0
      %1327 = vmatprep.subr.bf16.mxu0 0
      %1328 = vmatpush1.bf16.msra.mxu0 0
      %1329 = vmatprep.subr.bf16.mxu0 0
      %1330 = vmatpush1.bf16.msra.mxu0 0
      %1331 = vmatprep.subr.bf16.mxu0 0
      %1332 = vmatpush1.bf16.msra.mxu0 0
      %1333 = vmatprep.mubr.bf16.mxu0 0
      %1334 = vmatmul.mubr.bf16.gmra.mrb[0].mxu0 %v1290
      %v1335 = vpop.f32.mrb[0].mxu0
      %v1336 = vadd.f32 0.0, %v1335
      %v1337 = vpop.f32.mrb[0].mxu0
      %v1338 = vpop.f32.mrb[0].mxu0
      %v1339 = vadd.f32 0.0, %v1338
      %v1340 = vpop.f32.mrb[0].mxu0
      %1341 = vmatprep.mubr.bf16.mxu0 0
      %1342 = vmatmul.mubr.bf16.gmra.mrb[0].mxu0 %v1293
      %v1343 = vpop.f32.mrb[0].mxu0
      %v1344 = vadd.f32 0.0, %v1343
      %v1345 = vpop.f32.mrb[0].mxu0
      %v1346 = vpop.f32.mrb[0].mxu0
      %v1347 = vadd.f32 0.0, %v1346
      %v1348 = vpop.f32.mrb[0].mxu0
      %1349 = vmatprep.mubr.bf16.mxu0 0
      %1350 = vmatmul.mubr.bf16.gmra.mrb[0].mxu0 %v1296
      %v1351 = vpop.f32.mrb[0].mxu0
      %v1352 = vadd.f32 0.0, %v1351
      %v1353 = vpop.f32.mrb[0].mxu0
      %v1354 = vpop.f32.mrb[0].mxu0
      %v1355 = vpop.f32.mrb[0].mxu0
      %1356 = vdwg.mxu0
      %v1357 = vld [vmem:[%s3 + $0x10] sm:$0xff]
      %v1358 = vpack.c.bf16 %v1339, %v1336
      %v1359 = vpack.c.bf16 %v1347, %v1344
      %v1360 = vpack.c.bf16 %v1352, %v1352
      %v1361 = vpack.c.bf16 %v1357, %v1357
      %v1363 = vsel %vm541, %v1358, 0
      %v1366 = vsel %vm541, %v1359, 0
      %v1369 = vsel %vm541, %v1360, 0
      %v1372 = vsel %vm699, %v1361, 0
      %1374 = vmatprep.subr.bf16.mxu0 0
      %1375 = vmatpush1.bf16.msra.mxu0 %v1372
      %1376 = vmatprep.subr.bf16.mxu0 0
      %1377 = vmatpush1.bf16.msra.mxu0 0
      %1378 = vmatprep.subr.bf16.mxu0 0
      %1379 = vmatpush1.bf16.msra.mxu0 0
      %1380 = vmatprep.subr.bf16.mxu0 0
      %1381 = vmatpush1.bf16.msra.mxu0 0
      %1382 = vmatprep.subr.bf16.mxu0 0
      %1383 = vmatpush1.bf16.msra.mxu0 0
      %1384 = vmatprep.subr.bf16.mxu0 0
      %1385 = vmatpush1.bf16.msra.mxu0 0
      %1386 = vmatprep.subr.bf16.mxu0 0
      %1387 = vmatpush1.bf16.msra.mxu0 0
      %1388 = vmatprep.subr.bf16.mxu0 0
      %1389 = vmatpush1.bf16.msra.mxu0 0
      %1390 = vmatprep.subr.bf16.mxu0 0
      %1391 = vmatpush1.bf16.msra.mxu0 0
      %1392 = vmatprep.subr.bf16.mxu0 0
      %1393 = vmatpush1.bf16.msra.mxu0 0
      %1394 = vmatprep.subr.bf16.mxu0 0
      %1395 = vmatpush1.bf16.msra.mxu0 0
      %1396 = vmatprep.subr.bf16.mxu0 0
      %1397 = vmatpush1.bf16.msra.mxu0 0
      %1398 = vmatprep.subr.bf16.mxu0 0
      %1399 = vmatpush1.bf16.msra.mxu0 0
      %1400 = vmatprep.subr.bf16.mxu0 0
      %1401 = vmatpush1.bf16.msra.mxu0 0
      %1402 = vmatprep.subr.bf16.mxu0 0
      %1403 = vmatpush1.bf16.msra.mxu0 0
      %1404 = vmatprep.subr.bf16.mxu0 0
      %1405 = vmatpush1.bf16.msra.mxu0 0
      %1406 = vmatprep.mubr.bf16.mxu0 0
      %1407 = vmatmul.mubr.bf16.gmra.mrb[0].mxu0 %v1363
      %v1408 = vpop.f32.mrb[0].mxu0
      %v1409 = vadd.f32 0.0, %v1408
      %v1410 = vpop.f32.mrb[0].mxu0
      %v1411 = vpop.f32.mrb[0].mxu0
      %v1412 = vadd.f32 0.0, %v1411
      %v1413 = vpop.f32.mrb[0].mxu0
      %1414 = vmatprep.mubr.bf16.mxu0 0
      %1415 = vmatmul.mubr.bf16.gmra.mrb[0].mxu0 %v1366
      %v1416 = vpop.f32.mrb[0].mxu0
      %v1417 = vadd.f32 0.0, %v1416
      %v1418 = vpop.f32.mrb[0].mxu0
      %v1419 = vpop.f32.mrb[0].mxu0
      %v1420 = vadd.f32 0.0, %v1419
      %v1421 = vpop.f32.mrb[0].mxu0
      %1422 = vmatprep.mubr.bf16.mxu0 0
      %1423 = vmatmul.mubr.bf16.gmra.mrb[0].mxu0 %v1369
      %v1424 = vpop.f32.mrb[0].mxu0
      %v1425 = vadd.f32 0.0, %v1424
      %v1426 = vpop.f32.mrb[0].mxu0
      %v1427 = vpop.f32.mrb[0].mxu0
      %v1428 = vpop.f32.mrb[0].mxu0
      %1429 = vdwg.mxu0
      %v1430 = vadd.f32 %v1111, %v1409
      %v1431 = vadd.f32 %v1114, %v1412
      %v1432 = vadd.f32 %v1119, %v1417
      %v1433 = vadd.f32 %v1122, %v1420
      %v1434 = vadd.f32 %v1127, %v1425
      %1435 = vrot.lane.b32.xlu0 %v529, 104
      %v1436 = vpop.permute.xlu0 %1435
      %1437 = vrot.lane.b32.xlu0 %v530, 104
      %v1438 = vpop.permute.xlu0 %1437
      %1439 = vrot.lane.b32.xlu0 %v531, 104
      %v1440 = vpop.permute.xlu0 %1439
      %1441 = vrot.lane.b32.xlu0 %v529, 72
      %v1442 = vpop.permute.xlu0 %1441
      %1443 = vrot.lane.b32.xlu0 %v530, 72
      %v1444 = vpop.permute.xlu0 %1443
      %1445 = vrot.lane.b32.xlu0 %v531, 72
      %v1446 = vpop.permute.xlu0 %1445
      %v1448 = vsel %vm541, %v1436, 0
      %v1451 = vsel %vm541, %v1438, 0
      %v1454 = vsel %vm541, %v1440, 0
      %v1457 = vsel %vm541, %v1442, 0
      %v1460 = vsel %vm541, %v1444, 0
      %v1463 = vsel %vm541, %v1446, 0
      %1465 = vmatprep.subr.bf16.mxu0 0
      %1466 = vmatpush1.bf16.xpose.msra.mxu0 %v1457
      %1467 = vmatprep.subr.bf16.mxu0 0
      %1468 = vmatpush1.bf16.xpose.msra.mxu0 %v1460
      %1469 = vmatprep.subr.bf16.mxu0 0
      %1470 = vmatpush1.bf16.xpose.msra.mxu0 %v1463
      %1471 = vmatprep.subr.bf16.mxu0 0
      %1472 = vmatpush1.bf16.xpose.msra.mxu0 0
      %1473 = vmatprep.subr.bf16.mxu0 0
      %1474 = vmatpush1.bf16.xpose.msra.mxu0 0
      %1475 = vmatprep.subr.bf16.mxu0 0
      %1476 = vmatpush1.bf16.xpose.msra.mxu0 0
      %1477 = vmatprep.subr.bf16.mxu0 0
      %1478 = vmatpush1.bf16.xpose.msra.mxu0 0
      %1479 = vmatprep.subr.bf16.mxu0 0
      %1480 = vmatpush1.bf16.xpose.msra.mxu0 0
      %1481 = vmatprep.subr.bf16.mxu0 0
      %1482 = vmatpush1.bf16.xpose.msra.mxu0 0
      %1483 = vmatprep.subr.bf16.mxu0 0
      %1484 = vmatpush1.bf16.xpose.msra.mxu0 0
      %1485 = vmatprep.subr.bf16.mxu0 0
      %1486 = vmatpush1.bf16.xpose.msra.mxu0 0
      %1487 = vmatprep.subr.bf16.mxu0 0
      %1488 = vmatpush1.bf16.xpose.msra.mxu0 0
      %1489 = vmatprep.subr.bf16.mxu0 0
      %1490 = vmatpush1.bf16.xpose.msra.mxu0 0
      %1491 = vmatprep.subr.bf16.mxu0 0
      %1492 = vmatpush1.bf16.xpose.msra.mxu0 0
      %1493 = vmatprep.subr.bf16.mxu0 0
      %1494 = vmatpush1.bf16.xpose.msra.mxu0 0
      %1495 = vmatprep.subr.bf16.mxu0 0
      %1496 = vmatpush1.bf16.xpose.msra.mxu0 0
      %1497 = vmatprep.mubr.bf16.mxu0 0
      %1498 = vmatmul.mubr.bf16.gmra.mrb[0].mxu0 %v1448
      %v1499 = vpop.f32.mrb[0].mxu0
      %v1500 = vadd.f32 0.0, %v1499
      %v1501 = vpop.f32.mrb[0].mxu0
      %v1502 = vpop.f32.mrb[0].mxu0
      %v1503 = vadd.f32 0.0, %v1502
      %v1504 = vpop.f32.mrb[0].mxu0
      %1505 = vmatprep.mubr.bf16.mxu0 0
      %1506 = vmatmul.mubr.bf16.gmra.mrb[0].mxu0 %v1451
      %v1507 = vpop.f32.mrb[0].mxu0
      %v1508 = vadd.f32 0.0, %v1507
      %v1509 = vpop.f32.mrb[0].mxu0
      %v1510 = vpop.f32.mrb[0].mxu0
      %v1511 = vadd.f32 0.0, %v1510
      %v1512 = vpop.f32.mrb[0].mxu0
      %1513 = vmatprep.mubr.bf16.mxu0 0
      %1514 = vmatmul.mubr.bf16.gmra.mrb[0].mxu0 %v1454
      %v1515 = vpop.f32.mrb[0].mxu0
      %v1516 = vadd.f32 0.0, %v1515
      %v1517 = vpop.f32.mrb[0].mxu0
      %v1518 = vpop.f32.mrb[0].mxu0
      %v1519 = vpop.f32.mrb[0].mxu0
      %1520 = vdwg.mxu0
      %v1521 = vmul.f32 %v1500, 0.35355338
      %v1522 = vmul.f32 %v1503, 0.35355338
      %v1523 = vmul.f32 %v1508, 0.35355338
      %v1524 = vmul.f32 %v1511, 0.35355338
      %v1525 = vmul.f32 %v1516, 0.35355338
      %v1526 = vsel %vm621, %v1521, -inf
      %1527 = vmax.xlane.f32.xlu0 %v1526
      %v1528 = vpop.xlane.xlu0 %1527
      %v1529 = vsel %vm621, %v1522, -inf
      %1530 = vmax.xlane.f32.xlu0 %v1529
      %v1531 = vpop.xlane.xlu0 %1530
      %v1532 = vsel %vm621, %v1523, -inf
      %1533 = vmax.xlane.f32.xlu0 %v1532
      %v1534 = vpop.xlane.xlu0 %1533
      %v1535 = vsel %vm621, %v1524, -inf
      %1536 = vmax.xlane.f32.xlu0 %v1535
      %v1537 = vpop.xlane.xlu0 %1536
      %v1538 = vsel %vm634, %v1525, -inf
      %1539 = vmax.xlane.f32.xlu0 %v1538
      %v1540 = vpop.xlane.xlu0 %1539
      %v1541 = vsub.f32 %v1521, %v1528
      %v1542 = vsub.f32 %v1522, %v1531
      %v1543 = vsub.f32 %v1523, %v1534
      %v1544 = vsub.f32 %v1524, %v1537
      %v1545 = vsub.f32 %v1525, %v1540
      %v1546 = vmul.f32 %v1541, 1.442695
      %v1547 = vpow.pop %v1546
      %v1548 = vmul.f32 %v1542, 1.442695
      %v1549 = vpow.pop %v1548
      %v1550 = vmul.f32 %v1543, 1.442695
      %v1551 = vpow.pop %v1550
      %v1552 = vmul.f32 %v1544, 1.442695
      %v1553 = vpow.pop %v1552
      %v1554 = vmul.f32 %v1545, 1.442695
      %v1555 = vpow.pop %v1554
      %v1556 = vsel %vm621, %v1547, 0.0
      %1557 = vadd.xlane.f32.xlu0 %v1556
      %v1558 = vpop.xlane.xlu0 %1557
      %v1559 = vsel %vm621, %v1549, 0.0
      %1560 = vadd.xlane.f32.xlu0 %v1559
      %v1561 = vpop.xlane.xlu0 %1560
      %v1562 = vsel %vm621, %v1551, 0.0
      %1563 = vadd.xlane.f32.xlu0 %v1562
      %v1564 = vpop.xlane.xlu0 %1563
      %v1565 = vsel %vm621, %v1553, 0.0
      %1566 = vadd.xlane.f32.xlu0 %v1565
      %v1567 = vpop.xlane.xlu0 %1566
      %v1568 = vsel %vm634, %v1555, 0.0
      %1569 = vadd.xlane.f32.xlu0 %v1568
      %v1570 = vpop.xlane.xlu0 %1569
      %v1571 = vrcp.pop %v1558
      %v1572 = vrcp.pop %v1561
      %v1573 = vrcp.pop %v1564
      %v1574 = vrcp.pop %v1567
      %v1575 = vrcp.pop %v1570
      %v1576 = vmul.f32 %v1547, %v1571
      %v1577 = vmul.f32 %v1549, %v1572
      %v1578 = vmul.f32 %v1551, %v1573
      %v1579 = vmul.f32 %v1553, %v1574
      %v1580 = vmul.f32 %v1555, %v1575
      %v1581 = vpack.c.bf16 %v1577, %v1576
      %v1582 = vpack.c.bf16 %v1579, %v1578
      %v1583 = vpack.c.bf16 %v1580, %v1580
      %1584 = vrot.lane.b32.xlu0 %v529, 40
      %v1585 = vpop.permute.xlu0 %1584
      %1586 = vrot.lane.b32.xlu0 %v530, 40
      %v1587 = vpop.permute.xlu0 %1586
      %1588 = vrot.lane.b32.xlu0 %v531, 40
      %v1589 = vpop.permute.xlu0 %1588
      %v1593 = vsel %vm621, %v1581, 0
      %v1596 = vsel %vm621, %v1582, 0
      %v1599 = vsel %vm621, %v1583, 0
      %v1602 = vand.u32 %v1589, %v701
      %1604 = vmatprep.subr.bf16.mxu0 0
      %1605 = vmatpush1.bf16.msra.mxu0 %v1585
      %1606 = vmatprep.subr.bf16.mxu0 0
      %1607 = vmatpush1.bf16.msra.mxu0 %v1587
      %1608 = vmatprep.subr.bf16.mxu0 0
      %1609 = vmatpush1.bf16.msra.mxu0 %v1602
      %1610 = vmatprep.subr.bf16.mxu0 0
      %1611 = vmatpush1.bf16.msra.mxu0 0
      %1612 = vmatprep.subr.bf16.mxu0 0
      %1613 = vmatpush1.bf16.msra.mxu0 0
      %1614 = vmatprep.subr.bf16.mxu0 0
      %1615 = vmatpush1.bf16.msra.mxu0 0
      %1616 = vmatprep.subr.bf16.mxu0 0
      %1617 = vmatpush1.bf16.msra.mxu0 0
      %1618 = vmatprep.subr.bf16.mxu0 0
      %1619 = vmatpush1.bf16.msra.mxu0 0
      %1620 = vmatprep.subr.bf16.mxu0 0
      %1621 = vmatpush1.bf16.msra.mxu0 0
      %1622 = vmatprep.subr.bf16.mxu0 0
      %1623 = vmatpush1.bf16.msra.mxu0 0
      %1624 = vmatprep.subr.bf16.mxu0 0
      %1625 = vmatpush1.bf16.msra.mxu0 0
      %1626 = vmatprep.subr.bf16.mxu0 0
      %1627 = vmatpush1.bf16.msra.mxu0 0
      %1628 = vmatprep.subr.bf16.mxu0 0
      %1629 = vmatpush1.bf16.msra.mxu0 0
      %1630 = vmatprep.subr.bf16.mxu0 0
      %1631 = vmatpush1.bf16.msra.mxu0 0
      %1632 = vmatprep.subr.bf16.mxu0 0
      %1633 = vmatpush1.bf16.msra.mxu0 0
      %1634 = vmatprep.subr.bf16.mxu0 0
      %1635 = vmatpush1.bf16.msra.mxu0 0
      %1636 = vmatprep.mubr.bf16.mxu0 0
      %1637 = vmatmul.mubr.bf16.gmra.mrb[0].mxu0 %v1593
      %v1638 = vpop.f32.mrb[0].mxu0
      %v1639 = vadd.f32 0.0, %v1638
      %v1640 = vpop.f32.mrb[0].mxu0
      %v1641 = vpop.f32.mrb[0].mxu0
      %v1642 = vadd.f32 0.0, %v1641
      %v1643 = vpop.f32.mrb[0].mxu0
      %1644 = vmatprep.mubr.bf16.mxu0 0
      %1645 = vmatmul.mubr.bf16.gmra.mrb[0].mxu0 %v1596
      %v1646 = vpop.f32.mrb[0].mxu0
      %v1647 = vadd.f32 0.0, %v1646
      %v1648 = vpop.f32.mrb[0].mxu0
      %v1649 = vpop.f32.mrb[0].mxu0
      %v1650 = vadd.f32 0.0, %v1649
      %v1651 = vpop.f32.mrb[0].mxu0
      %1652 = vmatprep.mubr.bf16.mxu0 0
      %1653 = vmatmul.mubr.bf16.gmra.mrb[0].mxu0 %v1599
      %v1654 = vpop.f32.mrb[0].mxu0
      %v1655 = vadd.f32 0.0, %v1654
      %v1656 = vpop.f32.mrb[0].mxu0
      %v1657 = vpop.f32.mrb[0].mxu0
      %v1658 = vpop.f32.mrb[0].mxu0
      %1659 = vdwg.mxu0
      %v1660 = vld [vmem:[%s3 + $0x18] sm:$0xff]
      %v1661 = vpack.c.bf16 %v1642, %v1639
      %v1662 = vpack.c.bf16 %v1650, %v1647
      %v1663 = vpack.c.bf16 %v1655, %v1655
      %v1664 = vpack.c.bf16 %v1660, %v1660
      %v1666 = vsel %vm541, %v1661, 0
      %v1669 = vsel %vm541, %v1662, 0
      %v1672 = vsel %vm541, %v1663, 0
      %v1675 = vsel %vm699, %v1664, 0
      %1677 = vmatprep.subr.bf16.mxu0 0
      %1678 = vmatpush1.bf16.msra.mxu0 %v1675
      %1679 = vmatprep.subr.bf16.mxu0 0
      %1680 = vmatpush1.bf16.msra.mxu0 0
      %1681 = vmatprep.subr.bf16.mxu0 0
      %1682 = vmatpush1.bf16.msra.mxu0 0
      %1683 = vmatprep.subr.bf16.mxu0 0
      %1684 = vmatpush1.bf16.msra.mxu0 0
      %1685 = vmatprep.subr.bf16.mxu0 0
      %1686 = vmatpush1.bf16.msra.mxu0 0
      %1687 = vmatprep.subr.bf16.mxu0 0
      %1688 = vmatpush1.bf16.msra.mxu0 0
      %1689 = vmatprep.subr.bf16.mxu0 0
      %1690 = vmatpush1.bf16.msra.mxu0 0
      %1691 = vmatprep.subr.bf16.mxu0 0
      %1692 = vmatpush1.bf16.msra.mxu0 0
      %1693 = vmatprep.subr.bf16.mxu0 0
      %1694 = vmatpush1.bf16.msra.mxu0 0
      %1695 = vmatprep.subr.bf16.mxu0 0
      %1696 = vmatpush1.bf16.msra.mxu0 0
      %1697 = vmatprep.subr.bf16.mxu0 0
      %1698 = vmatpush1.bf16.msra.mxu0 0
      %1699 = vmatprep.subr.bf16.mxu0 0
      %1700 = vmatpush1.bf16.msra.mxu0 0
      %1701 = vmatprep.subr.bf16.mxu0 0
      %1702 = vmatpush1.bf16.msra.mxu0 0
      %1703 = vmatprep.subr.bf16.mxu0 0
      %1704 = vmatpush1.bf16.msra.mxu0 0
      %1705 = vmatprep.subr.bf16.mxu0 0
      %1706 = vmatpush1.bf16.msra.mxu0 0
      %1707 = vmatprep.subr.bf16.mxu0 0
      %1708 = vmatpush1.bf16.msra.mxu0 0
      %1709 = vmatprep.mubr.bf16.mxu0 0
      %1710 = vmatmul.mubr.bf16.gmra.mrb[0].mxu0 %v1666
      %v1711 = vpop.f32.mrb[0].mxu0
      %v1712 = vadd.f32 0.0, %v1711
      %v1713 = vpop.f32.mrb[0].mxu0
      %v1714 = vpop.f32.mrb[0].mxu0
      %v1715 = vadd.f32 0.0, %v1714
      %v1716 = vpop.f32.mrb[0].mxu0
      %1717 = vmatprep.mubr.bf16.mxu0 0
      %1718 = vmatmul.mubr.bf16.gmra.mrb[0].mxu0 %v1669
      %v1719 = vpop.f32.mrb[0].mxu0
      %v1720 = vadd.f32 0.0, %v1719
      %v1721 = vpop.f32.mrb[0].mxu0
      %v1722 = vpop.f32.mrb[0].mxu0
      %v1723 = vadd.f32 0.0, %v1722
      %v1724 = vpop.f32.mrb[0].mxu0
      %1725 = vmatprep.mubr.bf16.mxu0 0
      %1726 = vmatmul.mubr.bf16.gmra.mrb[0].mxu0 %v1672
      %v1727 = vpop.f32.mrb[0].mxu0
      %v1728 = vadd.f32 0.0, %v1727
      %v1729 = vpop.f32.mrb[0].mxu0
      %v1730 = vpop.f32.mrb[0].mxu0
      %v1731 = vpop.f32.mrb[0].mxu0
      %1732 = vdwg.mxu0
      %v1733 = vadd.f32 %v1430, %v1712
      %v1734 = vadd.f32 %v1431, %v1715
      %v1735 = vadd.f32 %v1432, %v1720
      %v1736 = vadd.f32 %v1433, %v1723
      %v1737 = vadd.f32 %v1434, %v1728
      %v1738 = vld [vmem:[%s4] sm:$0x1]
      %v1740 = vlaneseq
      %v1741 = vshrl.u32 %v1740, 7
      %v1742 = vsub.s32 0, %v1741
      %v1743 = vrot.slane %v1738, %v1742
      %v1745 = vadd.f32 %v1733, %v1743
      %v1746 = vadd.f32 %v1734, %v1743
      %v1747 = vadd.f32 %v1735, %v1743
      %v1748 = vadd.f32 %v1736, %v1743
      %v1749 = vadd.f32 %v1737, %v1743
      %v1750 = vadd.f32 %v442, %v1745
      %v1751 = vadd.f32 %v443, %v1746
      %v1752 = vadd.f32 %v444, %v1747
      %v1753 = vadd.f32 %v445, %v1748
      %v1754 = vadd.f32 %v446, %v1749
      %v1755 = vld [vmem:[%s5] sm:$0x1]
      %v1756 = vld [vmem:[%s6] sm:$0x1]
      %v1757 = vsel %vm463, %v1750, 0.0
      %1758 = vadd.xlane.f32.xlu0 %v1757
      %v1759 = vpop.xlane.xlu0 %1758
      %v1760 = vsel %vm463, %v1751, 0.0
      %1761 = vadd.xlane.f32.xlu0 %v1760
      %v1762 = vpop.xlane.xlu0 %1761
      %v1763 = vsel %vm463, %v1752, 0.0
      %1764 = vadd.xlane.f32.xlu0 %v1763
      %v1765 = vpop.xlane.xlu0 %1764
      %v1766 = vsel %vm463, %v1753, 0.0
      %1767 = vadd.xlane.f32.xlu0 %v1766
      %v1768 = vpop.xlane.xlu0 %1767
      %vm1769 = vcmask 260096
      %v1770 = vsel %vm1769, %v1754, 0.0
      %1771 = vadd.xlane.f32.xlu0 %v1770
      %v1772 = vpop.xlane.xlu0 %1771
      %v1773 = vrcp.pop 32.0
      %v1774 = vmul.f32 %v1759, %v1773
      %v1775 = vmul.f32 %v1762, %v1773
      %v1776 = vmul.f32 %v1765, %v1773
      %v1777 = vmul.f32 %v1768, %v1773
      %v1778 = vmul.f32 %v1772, %v1773
      %v1779 = vsub.f32 %v1750, %v1774
      %v1780 = vsub.f32 %v1751, %v1775
      %v1781 = vsub.f32 %v1752, %v1776
      %v1782 = vsub.f32 %v1753, %v1777
      %v1783 = vsub.f32 %v1754, %v1778
      %v1784 = vmul.f32 %v1779, %v1779
      %v1785 = vmul.f32 %v1780, %v1780
      %v1786 = vmul.f32 %v1781, %v1781
      %v1787 = vmul.f32 %v1782, %v1782
      %v1788 = vmul.f32 %v1783, %v1783
      %v1789 = vsel %vm463, %v1784, 0.0
      %1790 = vadd.xlane.f32.xlu0 %v1789
      %v1791 = vpop.xlane.xlu0 %1790
      %v1792 = vsel %vm463, %v1785, 0.0
      %1793 = vadd.xlane.f32.xlu0 %v1792
      %v1794 = vpop.xlane.xlu0 %1793
      %v1795 = vsel %vm463, %v1786, 0.0
      %1796 = vadd.xlane.f32.xlu0 %v1795
      %v1797 = vpop.xlane.xlu0 %1796
      %v1798 = vsel %vm463, %v1787, 0.0
      %1799 = vadd.xlane.f32.xlu0 %v1798
      %v1800 = vpop.xlane.xlu0 %1799
      %v1801 = vsel %vm1769, %v1788, 0.0
      %1802 = vadd.xlane.f32.xlu0 %v1801
      %v1803 = vpop.xlane.xlu0 %1802
      %v1804 = vmul.f32 %v1791, %v1773
      %v1805 = vmul.f32 %v1794, %v1773
      %v1806 = vmul.f32 %v1797, %v1773
      %v1807 = vmul.f32 %v1800, %v1773
      %v1808 = vmul.f32 %v1803, %v1773
      %v1809 = vadd.f32 %v1804, 1e-05
      %v1810 = vadd.f32 %v1805, 1e-05
      %v1811 = vadd.f32 %v1806, 1e-05
      %v1812 = vadd.f32 %v1807, 1e-05
      %v1813 = vadd.f32 %v1808, 1e-05
      %v1814 = vrsqrt.pop %v1809
      %v1815 = vrsqrt.pop %v1810
      %v1816 = vrsqrt.pop %v1811
      %v1817 = vrsqrt.pop %v1812
      %v1818 = vrsqrt.pop %v1813
      %v1819 = vmul.f32 %v1779, %v1814
      %v1820 = vmul.f32 %v1780, %v1815
      %v1821 = vmul.f32 %v1781, %v1816
      %v1822 = vmul.f32 %v1782, %v1817
      %v1823 = vmul.f32 %v1783, %v1818
      %v1825 = vlaneseq
      %v1826 = vshrl.u32 %v1825, 7
      %v1827 = vsub.s32 0, %v1826
      %v1828 = vrot.slane %v1755, %v1827
      %v1830 = vmul.f32 %v1819, %v1828
      %v1831 = vmul.f32 %v1820, %v1828
      %v1832 = vmul.f32 %v1821, %v1828
      %v1833 = vmul.f32 %v1822, %v1828
      %v1834 = vmul.f32 %v1823, %v1828
      %v1836 = vlaneseq
      %v1837 = vshrl.u32 %v1836, 7
      %v1838 = vsub.s32 0, %v1837
      %v1839 = vrot.slane %v1756, %v1838
      %v1841 = vadd.f32 %v1830, %v1839
      %v1842 = vadd.f32 %v1831, %v1839
      %v1843 = vadd.f32 %v1832, %v1839
      %v1844 = vadd.f32 %v1833, %v1839
      %v1845 = vadd.f32 %v1834, %v1839
      %v1846 = vld [vmem:[%s7] sm:$0xff]
      %v1847 = vld [vmem:[%s7 + $0x8] sm:$0xff]
      %v1848 = vld [vmem:[%s7 + $0x10] sm:$0xff]
      %v1849 = vld [vmem:[%s7 + $0x18] sm:$0xff]
      %v1850 = vpack.c.bf16 %v1842, %v1841
      %v1851 = vpack.c.bf16 %v1844, %v1843
      %v1852 = vpack.c.bf16 %v1845, %v1845
      %v1853 = vpack.c.bf16 %v1847, %v1846
      %v1854 = vpack.c.bf16 %v1849, %v1848
      %v1855 = vld [vmem:[%s8] sm:$0x1]
      %v1857 = vlaneseq
      %v1858 = vshrl.u32 %v1857, 7
      %v1859 = vsub.s32 0, %v1858
      %v1860 = vrot.slane %v1855, %v1859
      %v1863 = vsel %vm463, %v1850, 0
      %v1866 = vsel %vm463, %v1851, 0
      %v1869 = vsel %vm463, %v1852, 0
      %1871 = vmatprep.subr.bf16.mxu0 0
      %1872 = vmatpush1.bf16.msra.mxu0 %v1853
      %1873 = vmatprep.subr.bf16.mxu0 0
      %1874 = vmatpush1.bf16.msra.mxu0 %v1854
      %1875 = vmatprep.subr.bf16.mxu0 0
      %1876 = vmatpush1.bf16.msra.mxu0 0
      %1877 = vmatprep.subr.bf16.mxu0 0
      %1878 = vmatpush1.bf16.msra.mxu0 0
      %1879 = vmatprep.subr.bf16.mxu0 0
      %1880 = vmatpush1.bf16.msra.mxu0 0
      %1881 = vmatprep.subr.bf16.mxu0 0
      %1882 = vmatpush1.bf16.msra.mxu0 0
      %1883 = vmatprep.subr.bf16.mxu0 0
      %1884 = vmatpush1.bf16.msra.mxu0 0
      %1885 = vmatprep.subr.bf16.mxu0 0
      %1886 = vmatpush1.bf16.msra.mxu0 0
      %1887 = vmatprep.subr.bf16.mxu0 0
      %1888 = vmatpush1.bf16.msra.mxu0 0
      %1889 = vmatprep.subr.bf16.mxu0 0
      %1890 = vmatpush1.bf16.msra.mxu0 0
      %1891 = vmatprep.subr.bf16.mxu0 0
      %1892 = vmatpush1.bf16.msra.mxu0 0
      %1893 = vmatprep.subr.bf16.mxu0 0
      %1894 = vmatpush1.bf16.msra.mxu0 0
      %1895 = vmatprep.subr.bf16.mxu0 0
      %1896 = vmatpush1.bf16.msra.mxu0 0
      %1897 = vmatprep.subr.bf16.mxu0 0
      %1898 = vmatpush1.bf16.msra.mxu0 0
      %1899 = vmatprep.subr.bf16.mxu0 0
      %1900 = vmatpush1.bf16.msra.mxu0 0
      %1901 = vmatprep.subr.bf16.mxu0 0
      %1902 = vmatpush1.bf16.msra.mxu0 0
      %1903 = vmatprep.mubr.bf16.mxu0 0
      %1904 = vmatmul.mubr.bf16.gmra.mrb[0].mxu0 %v1863
      %v1905 = vpop.f32.mrb[0].mxu0
      %v1906 = vadd.f32 %v1860, %v1905
      %v1907 = vpop.f32.mrb[0].mxu0
      %v1908 = vpop.f32.mrb[0].mxu0
      %v1909 = vadd.f32 %v1860, %v1908
      %v1910 = vpop.f32.mrb[0].mxu0
      %1911 = vmatprep.mubr.bf16.mxu0 0
      %1912 = vmatmul.mubr.bf16.gmra.mrb[0].mxu0 %v1866
      %v1913 = vpop.f32.mrb[0].mxu0
      %v1914 = vadd.f32 %v1860, %v1913
      %v1915 = vpop.f32.mrb[0].mxu0
      %v1916 = vpop.f32.mrb[0].mxu0
      %v1917 = vadd.f32 %v1860, %v1916
      %v1918 = vpop.f32.mrb[0].mxu0
      %1919 = vmatprep.mubr.bf16.mxu0 0
      %1920 = vmatmul.mubr.bf16.gmra.mrb[0].mxu0 %v1869
      %v1921 = vpop.f32.mrb[0].mxu0
      %v1922 = vadd.f32 %v1860, %v1921
      %v1923 = vpop.f32.mrb[0].mxu0
      %v1924 = vpop.f32.mrb[0].mxu0
      %v1925 = vpop.f32.mrb[0].mxu0
      %1926 = vdwg.mxu0
      %v1927 = vmul.f32 %v1906, %v1906
      %v1928 = vmul.f32 %v1909, %v1909
      %v1929 = vmul.f32 %v1914, %v1914
      %v1930 = vmul.f32 %v1917, %v1917
      %v1931 = vmul.f32 %v1922, %v1922
      %v1932 = vmul.f32 %v1906, %v1927
      %v1933 = vmul.f32 %v1909, %v1928
      %v1934 = vmul.f32 %v1914, %v1929
      %v1935 = vmul.f32 %v1917, %v1930
      %v1936 = vmul.f32 %v1922, %v1931
      %v1937 = vmul.f32 %v1932, 0.044715
      %v1938 = vmul.f32 %v1933, 0.044715
      %v1939 = vmul.f32 %v1934, 0.044715
      %v1940 = vmul.f32 %v1935, 0.044715
      %v1941 = vmul.f32 %v1936, 0.044715
      %v1942 = vadd.f32 %v1906, %v1937
      %v1943 = vadd.f32 %v1909, %v1938
      %v1944 = vadd.f32 %v1914, %v1939
      %v1945 = vadd.f32 %v1917, %v1940
      %v1946 = vadd.f32 %v1922, %v1941
      %v1947 = vmul.f32 %v1942, 0.7978846
      %v1948 = vmul.f32 %v1943, 0.7978846
      %v1949 = vmul.f32 %v1944, 0.7978846
      %v1950 = vmul.f32 %v1945, 0.7978846
      %v1951 = vmul.f32 %v1946, 0.7978846
      %v1952 = vtanh.pop %v1947
      %v1953 = vtanh.pop %v1948
      %v1954 = vtanh.pop %v1949
      %v1955 = vtanh.pop %v1950
      %v1956 = vtanh.pop %v1951
      %v1957 = vadd.f32 %v1952, 1.0
      %v1958 = vadd.f32 %v1953, 1.0
      %v1959 = vadd.f32 %v1954, 1.0
      %v1960 = vadd.f32 %v1955, 1.0
      %v1961 = vadd.f32 %v1956, 1.0
      %v1962 = vmul.f32 %v1957, 0.5
      %v1963 = vmul.f32 %v1958, 0.5
      %v1964 = vmul.f32 %v1959, 0.5
      %v1965 = vmul.f32 %v1960, 0.5
      %v1966 = vmul.f32 %v1961, 0.5
      %v1967 = vmul.f32 %v1906, %v1962
      %v1968 = vmul.f32 %v1909, %v1963
      %v1969 = vmul.f32 %v1914, %v1964
      %v1970 = vmul.f32 %v1917, %v1965
      %v1971 = vmul.f32 %v1922, %v1966
      %v1972 = vld [vmem:[%s9] sm:$0xff]
      %v1973 = vld [vmem:[%s9 + $0x8] sm:$0xff]
      %v1974 = vld [vmem:[%s9 + $0x10] sm:$0xff]
      %v1975 = vld [vmem:[%s9 + $0x18] sm:$0xff]
      %v1976 = vld [vmem:[%s9 + $0x20] sm:$0xff]
      %v1977 = vld [vmem:[%s9 + $0x28] sm:$0xff]
      %v1978 = vld [vmem:[%s9 + $0x30] sm:$0xff]
      %v1979 = vld [vmem:[%s9 + $0x38] sm:$0xff]
      %v1980 = vpack.c.bf16 %v1968, %v1967
      %v1981 = vpack.c.bf16 %v1970, %v1969
      %v1982 = vpack.c.bf16 %v1971, %v1971
      %v1983 = vpack.c.bf16 %v1973, %v1972
      %v1984 = vpack.c.bf16 %v1975, %v1974
      %v1985 = vpack.c.bf16 %v1977, %v1976
      %v1986 = vpack.c.bf16 %v1979, %v1978
      %v1987 = vld [vmem:[%s10] sm:$0x1]
      %v1989 = vlaneseq
      %v1990 = vshrl.u32 %v1989, 7
      %v1991 = vsub.s32 0, %v1990
      %v1992 = vrot.slane %v1987, %v1991
      %vm1994 = vcmask 523264
      %v1996 = vsel %vm1994, %v1980, 0
      %v1999 = vsel %vm1994, %v1981, 0
      %v2002 = vsel %vm1994, %v1982, 0
      %2004 = vmatprep.subr.bf16.mxu0 0
      %2005 = vmatpush1.bf16.msra.mxu0 %v1983
      %2006 = vmatprep.subr.bf16.mxu0 0
      %2007 = vmatpush1.bf16.msra.mxu0 %v1984
      %2008 = vmatprep.subr.bf16.mxu0 0
      %2009 = vmatpush1.bf16.msra.mxu0 %v1985
      %2010 = vmatprep.subr.bf16.mxu0 0
      %2011 = vmatpush1.bf16.msra.mxu0 %v1986
      %2012 = vmatprep.subr.bf16.mxu0 0
      %2013 = vmatpush1.bf16.msra.mxu0 0
      %2014 = vmatprep.subr.bf16.mxu0 0
      %2015 = vmatpush1.bf16.msra.mxu0 0
      %2016 = vmatprep.subr.bf16.mxu0 0
      %2017 = vmatpush1.bf16.msra.mxu0 0
      %2018 = vmatprep.subr.bf16.mxu0 0
      %2019 = vmatpush1.bf16.msra.mxu0 0
      %2020 = vmatprep.subr.bf16.mxu0 0
      %2021 = vmatpush1.bf16.msra.mxu0 0
      %2022 = vmatprep.subr.bf16.mxu0 0
      %2023 = vmatpush1.bf16.msra.mxu0 0
      %2024 = vmatprep.subr.bf16.mxu0 0
      %2025 = vmatpush1.bf16.msra.mxu0 0
      %2026 = vmatprep.subr.bf16.mxu0 0
      %2027 = vmatpush1.bf16.msra.mxu0 0
      %2028 = vmatprep.subr.bf16.mxu0 0
      %2029 = vmatpush1.bf16.msra.mxu0 0
      %2030 = vmatprep.subr.bf16.mxu0 0
      %2031 = vmatpush1.bf16.msra.mxu0 0
      %2032 = vmatprep.subr.bf16.mxu0 0
      %2033 = vmatpush1.bf16.msra.mxu0 0
      %2034 = vmatprep.subr.bf16.mxu0 0
      %2035 = vmatpush1.bf16.msra.mxu0 0
      %2036 = vmatprep.mubr.bf16.mxu0 0
      %2037 = vmatmul.mubr.bf16.gmra.mrb[0].mxu0 %v1996
      %v2038 = vpop.f32.mrb[0].mxu0
      %v2039 = vadd.f32 %v1992, %v2038
      %v2040 = vpop.f32.mrb[0].mxu0
      %v2041 = vpop.f32.mrb[0].mxu0
      %v2042 = vadd.f32 %v1992, %v2041
      %v2043 = vpop.f32.mrb[0].mxu0
      %2044 = vmatprep.mubr.bf16.mxu0 0
      %2045 = vmatmul.mubr.bf16.gmra.mrb[0].mxu0 %v1999
      %v2046 = vpop.f32.mrb[0].mxu0
      %v2047 = vadd.f32 %v1992, %v2046
      %v2048 = vpop.f32.mrb[0].mxu0
      %v2049 = vpop.f32.mrb[0].mxu0
      %v2050 = vadd.f32 %v1992, %v2049
      %v2051 = vpop.f32.mrb[0].mxu0
      %2052 = vmatprep.mubr.bf16.mxu0 0
      %2053 = vmatmul.mubr.bf16.gmra.mrb[0].mxu0 %v2002
      %v2054 = vpop.f32.mrb[0].mxu0
      %v2055 = vadd.f32 %v1992, %v2054
      %v2056 = vpop.f32.mrb[0].mxu0
      %v2057 = vpop.f32.mrb[0].mxu0
      %v2058 = vpop.f32.mrb[0].mxu0
      %2059 = vdwg.mxu0
      %v2060 = vadd.f32 %v1841, %v2039
      %v2061 = vadd.f32 %v1842, %v2042
      %v2062 = vadd.f32 %v1843, %v2047
      %v2063 = vadd.f32 %v1844, %v2050
      %v2064 = vadd.f32 %v1845, %v2055
      %v2065 = vld [vmem:[%s11] sm:$0x1]
      %v2066 = vld [vmem:[%s12] sm:$0x1]
      %v2067 = vsel %vm463, %v2060, 0.0
      %2068 = vadd.xlane.f32.xlu0 %v2067
      %v2069 = vpop.xlane.xlu0 %2068
      %v2070 = vsel %vm463, %v2061, 0.0
      %2071 = vadd.xlane.f32.xlu0 %v2070
      %v2072 = vpop.xlane.xlu0 %2071
      %v2073 = vsel %vm463, %v2062, 0.0
      %2074 = vadd.xlane.f32.xlu0 %v2073
      %v2075 = vpop.xlane.xlu0 %2074
      %v2076 = vsel %vm463, %v2063, 0.0
      %2077 = vadd.xlane.f32.xlu0 %v2076
      %v2078 = vpop.xlane.xlu0 %2077
      %v2079 = vsel %vm1769, %v2064, 0.0
      %2080 = vadd.xlane.f32.xlu0 %v2079
      %v2081 = vpop.xlane.xlu0 %2080
      %v2082 = vmul.f32 %v2069, %v1773
      %v2083 = vmul.f32 %v2072, %v1773
      %v2084 = vmul.f32 %v2075, %v1773
      %v2085 = vmul.f32 %v2078, %v1773
      %v2086 = vmul.f32 %v2081, %v1773
      %v2087 = vsub.f32 %v2060, %v2082
      %v2088 = vsub.f32 %v2061, %v2083
      %v2089 = vsub.f32 %v2062, %v2084
      %v2090 = vsub.f32 %v2063, %v2085
      %v2091 = vsub.f32 %v2064, %v2086
      %v2092 = vmul.f32 %v2087, %v2087
      %v2093 = vmul.f32 %v2088, %v2088
      %v2094 = vmul.f32 %v2089, %v2089
      %v2095 = vmul.f32 %v2090, %v2090
      %v2096 = vmul.f32 %v2091, %v2091
      %v2097 = vsel %vm463, %v2092, 0.0
      %2098 = vadd.xlane.f32.xlu0 %v2097
      %v2099 = vpop.xlane.xlu0 %2098
      %v2100 = vsel %vm463, %v2093, 0.0
      %2101 = vadd.xlane.f32.xlu0 %v2100
      %v2102 = vpop.xlane.xlu0 %2101
      %v2103 = vsel %vm463, %v2094, 0.0
      %2104 = vadd.xlane.f32.xlu0 %v2103
      %v2105 = vpop.xlane.xlu0 %2104
      %v2106 = vsel %vm463, %v2095, 0.0
      %2107 = vadd.xlane.f32.xlu0 %v2106
      %v2108 = vpop.xlane.xlu0 %2107
      %v2109 = vsel %vm1769, %v2096, 0.0
      %2110 = vadd.xlane.f32.xlu0 %v2109
      %v2111 = vpop.xlane.xlu0 %2110
      %v2112 = vmul.f32 %v2099, %v1773
      %v2113 = vmul.f32 %v2102, %v1773
      %v2114 = vmul.f32 %v2105, %v1773
      %v2115 = vmul.f32 %v2108, %v1773
      %v2116 = vmul.f32 %v2111, %v1773
      %v2117 = vadd.f32 %v2112, 1e-05
      %v2118 = vadd.f32 %v2113, 1e-05
      %v2119 = vadd.f32 %v2114, 1e-05
      %v2120 = vadd.f32 %v2115, 1e-05
      %v2121 = vadd.f32 %v2116, 1e-05
      %v2122 = vrsqrt.pop %v2117
      %v2123 = vrsqrt.pop %v2118
      %v2124 = vrsqrt.pop %v2119
      %v2125 = vrsqrt.pop %v2120
      %v2126 = vrsqrt.pop %v2121
      %v2127 = vmul.f32 %v2087, %v2122
      %v2128 = vmul.f32 %v2088, %v2123
      %v2129 = vmul.f32 %v2089, %v2124
      %v2130 = vmul.f32 %v2090, %v2125
      %v2131 = vmul.f32 %v2091, %v2126
      %v2133 = vlaneseq
      %v2134 = vshrl.u32 %v2133, 7
      %v2135 = vsub.s32 0, %v2134
      %v2136 = vrot.slane %v2065, %v2135
      %v2138 = vmul.f32 %v2127, %v2136
      %v2139 = vmul.f32 %v2128, %v2136
      %v2140 = vmul.f32 %v2129, %v2136
      %v2141 = vmul.f32 %v2130, %v2136
      %v2142 = vmul.f32 %v2131, %v2136
      %v2144 = vlaneseq
      %v2145 = vshrl.u32 %v2144, 7
      %v2146 = vsub.s32 0, %v2145
      %v2147 = vrot.slane %v2066, %v2146
      %v2149 = vadd.f32 %v2138, %v2147
      %v2150 = vadd.f32 %v2139, %v2147
      %v2151 = vadd.f32 %v2140, %v2147
      %v2152 = vadd.f32 %v2141, %v2147
      %v2153 = vadd.f32 %v2142, %v2147
      %2154 = vst.msk [vmem:[%s440] sm:$0xff] %vm463, %v2149
      %2155 = vst.msk [vmem:[%s440 + $0x8] sm:$0xff] %vm463, %v2150
      %2156 = vst.msk [vmem:[%s440 + $0x10] sm:$0xff] %vm463, %v2151
      %2157 = vst.msk [vmem:[%s440 + $0x18] sm:$0xff] %vm463, %v2152
      %2158 = vst.msk [vmem:[%s440 + $0x20] sm:$0x7f] %vm1769, %v2153
      %p2159 = scmp.lt.s32.totalorder %s24, 1
      %s2160 = scalar_select %p2159, %s24, 1
      %s2161 = smul.addr %s2160, 5
      %s2162 = smul.addr %s2161, 8
      %s2163 = scalar_lea.vmem %s13, %s2162
      // Predicated region
      $region73: #{wav2vec2_ctc_logits.9} parent=71 // pred_check
        %p2164 = pneg %p320
      $region74: #{wav2vec2_ctc_logits.9} parent=71 // pred_check_branch
        %2166 = sbr.rel (%p2164) target = $region76
      $region75: #{wav2vec2_ctc_logits.9} parent=71 // pred_region
        _
      $region76: #{wav2vec2_ctc_logits.9} parent=71 // pred_fallthru
        _
    $region72: #{wav2vec2_ctc_logits.9} parent=5 // pred_fallthru
      _
    %p2167 = scmp.le.s32.totalorder 2, %s19
    // Predicated region
    $region77: #{wav2vec2_ctc_logits.9} parent=5 // pred_check
      %p2168 = pneg %p2167
    $region78: #{wav2vec2_ctc_logits.9} parent=5 // pred_check_branch
      %2170 = sbr.rel (%p2168) target = $region80
    $region79: #{wav2vec2_ctc_logits.9} parent=5 // pred_region
      %s2171 = ssub.s32 %s19, 2
      // Predicated region
      $region81: #{wav2vec2_ctc_logits.9} parent=79 // pred_check
        %p2172 = pneg %p326
      $region82: #{wav2vec2_ctc_logits.9} parent=79 // pred_check_branch
        %2174 = sbr.rel (%p2172) target = $region84
      $region83: #{wav2vec2_ctc_logits.9} parent=79 // pred_region
        %p2175 = scmp.lt.s32.totalorder %s25, 1
        %s2176 = scalar_select %p2175, %s25, 1
        %s2177 = smul.addr %s2176, 5
        %s2178 = smul.addr %s2177, 8
        %s2179 = scalar_lea.vmem %s13, %s2178
      $region84: #{wav2vec2_ctc_logits.9} parent=79 // pred_fallthru
        _
    $region80: #{wav2vec2_ctc_logits.9} parent=5 // pred_fallthru
      _
  $region6: #{wav2vec2_ctc_logits.9} parent=0 // loop_footer
    %s23 = sadd.s32 1, %s19
  $region7: #{wav2vec2_ctc_logits.9} parent=0 // loop_footer_branch
    %18 = sbr.rel target = $region3
  $region8: #{wav2vec2_ctc_logits.9} parent=0 // loop_exit
    _

</llo_original>
